<compile_context>
chip_gen: v7x
topology: tpu7x:2x2x1
jax: 0.10.0
libtpu: 0.0.40
codegen_flags: <defaults>
</compile_context>

<pallas_src>
import functools

import jax
import jax.numpy as jnp
from jax.experimental import pallas as pl
from jax.experimental.pallas import tpu as pltpu

# ---------------- small PhoBERT-like config ----------------
VOCAB = 100
HIDDEN = 32
N_LAYERS = 2
N_HEADS = 2
HEAD_DIM = HIDDEN // N_HEADS
INTERMEDIATE = 64
MAX_POS = 64
NUM_CLASSES = 30
SEQ_LEN = 8
FC_PAD = 128            # lane-dense padded logits width (sliced back to 30 in the wrapper)
WCOL = 128              # lane-aligned column block inside the per-layer matrix slab
LN_EPS = 1e-5
PAD_IDX = 1             # RoBERTa padding_idx for position ids
EMB_ROWS = VOCAB + MAX_POS   # packed (word ++ position) embedding slab rows

# Row layout of the packed bias / LayerNorm vector slab (f32 [VEC_ROWS, 128]).
ROW_TYPE = 0            # token_type_embeddings[0]
ROW_EMB_G = 1           # embedding LayerNorm gamma
ROW_EMB_B = 2           # embedding LayerNorm beta
ROW_L0 = 3              # per-layer block of 8 rows starts here:
#   +0 bqkv (96, zero-padded to 128)   +1 bo      +2 ln1_g   +3 ln1_b
#   +4 bi   (64, zero-padded to 128)   +5 bf      +6 ln2_g   +7 ln2_b
ROW_POOL_B = ROW_L0 + 8 * N_LAYERS
ROW_FC_B = ROW_POOL_B + 1
VEC_ROWS = ROW_FC_B + 1


# ---------------- fully fused embedding + encoder + pooler + classifier kernel ----------------
def _fused_phobert_kernel(idx_ref, maskadd_ref, emb_ref, wmat_ref, head_ref, vec_ref,
                          out_ref, *, tb, seq):
    """One grid step == a block of `tb` sequences.  Everything stays resident in VMEM."""
    m = tb * seq

    def ln(x, grow, brow):
        # single-pass LayerNorm: var = E[x^2] - E[x]^2 (two independent reductions)
        mu = jnp.mean(x, axis=-1, keepdims=True)
        ms = jnp.mean(x * x, axis=-1, keepdims=True)
        inv = jax.lax.rsqrt(ms - mu * mu + LN_EPS)
        return (x - mu) * inv * grow + brow

    def gelu(x):
        # NOTE: tanh-approximate GELU (HF RoBERTa uses the erf form; tiny numeric delta).
        c = jnp.float32(0.7978845608028654)  # sqrt(2/pi)
        return 0.5 * x * (1.0 + jnp.tanh(c * (x + 0.044715 * x * x * x)))

    def vh(r):     # H-wide vector row -> [1, HIDDEN]
        return vec_ref[r:r + 1, 0:HIDDEN]

    def v128(r):   # 128-wide (padded) vector row -> [1, 128]
        return vec_ref[r:r + 1, :]

    # ---- embedding gather: multi-hot (word_id, VOCAB + pos_id) @ table on the MXU ----
    idx = idx_ref[...]                                                  # [M, 2] int32
    lane = jax.lax.broadcasted_iota(jnp.int32, (m, EMB_ROWS), 1)
    multihot = ((lane == idx[:, 0:1]).astype(jnp.float32)
                + (lane == idx[:, 1:2]).astype(jnp.float32)).astype(jnp.bfloat16)
    h = jnp.dot(multihot, emb_ref[...], preferred_element_type=jnp.float32)   # [M, H]
    h = h + vh(ROW_TYPE)                                                # token_type_id == 0 row
    h = ln(h, vh(ROW_EMB_G), vh(ROW_EMB_B))

    inv_sqrt_d = jnp.float32(1.0 / (HEAD_DIM ** 0.5))
    dn_last = (((1,), (1,)), ((), ()))   # contract both operands on their last dim (no transpose)

    for li in range(N_LAYERS):           # static unroll (tiny model)
        wl = wmat_ref[li]                # [HIDDEN, 4*WCOL] bf16: [wqkv | wi | wo | wf^T]
        base = ROW_L0 + li * 8

        # ---- fused QKV projection over all tb*seq rows (one [M,H]@[H,128] matmul) ----
        qkv = jnp.dot(h.astype(jnp.bfloat16), wl[:, 0:WCOL],
                      preferred_element_type=jnp.float32) + v128(base + 0)      # [M, 128]

        # ---- attention: per-(head, sequence) score/context, per-head out-proj accumulate ----
        wo = wl[:, 2 * WCOL:2 * WCOL + HIDDEN]                                  # [H, H]
        attn = None
        for hd in range(N_HEADS):
            lo = hd * HEAD_DIM
            ctx_rows = []
            for b in range(tb):
                r0 = b * seq
                q = qkv[r0:r0 + seq, lo:lo + HEAD_DIM]
                k = qkv[r0:r0 + seq, HIDDEN + lo:HIDDEN + lo + HEAD_DIM]
                v = qkv[r0:r0 + seq, 2 * HIDDEN + lo:2 * HIDDEN + lo + HEAD_DIM]
                # scores: contract last dims (q @ k^T without materializing k.T)
                s = jax.lax.dot_general(q, k, dn_last,
                                        preferred_element_type=jnp.float32)
                s = s * inv_sqrt_d + maskadd_ref[b]                             # [S, S]
                s = s - jnp.max(s, axis=-1, keepdims=True)
                p = jnp.exp(s)
                p = p * pl.reciprocal(jnp.sum(p, axis=-1, keepdims=True), approx=True)
                ctx_rows.append(jnp.dot(p, v, preferred_element_type=jnp.float32))
            ctx = jnp.concatenate(ctx_rows, axis=0)                             # [M, HEAD_DIM]
            # per-head output projection accumulated directly (no lane concat of heads)
            part = jnp.dot(ctx.astype(jnp.bfloat16), wo[lo:lo + HEAD_DIM, :],
                           preferred_element_type=jnp.float32)                  # [M, H]
            attn = part if attn is None else attn + part
        attn = attn + vh(base + 1)
        h = ln(attn + h, vh(base + 2), vh(base + 3))

        # ---- feed forward ----
        inter = jnp.dot(h.astype(jnp.bfloat16), wl[:, WCOL:2 * WCOL],
                        preferred_element_type=jnp.float32) + v128(base + 4)    # [M, 128]
        inter = gelu(inter)
        # down-projection against transposed-stored wf (contract last dims, no transpose op)
        ffn = jax.lax.dot_general(inter.astype(jnp.bfloat16), wl[:, 3 * WCOL:4 * WCOL],
                                  dn_last, preferred_element_type=jnp.float32)  # [M, H]
        ffn = ffn + vh(base + 5)
        h = ln(ffn + h, vh(base + 6), vh(base + 7))

    # ---- pooler (tanh of CLS) -> dropout (eval: identity) -> classifier, batched over tb ----
    cls = jnp.concatenate([h[b * seq:b * seq + 1, :] for b in range(tb)], axis=0)  # [tb, H]
    pooled = jnp.tanh(jnp.dot(cls.astype(jnp.bfloat16), head_ref[0:HIDDEN, 0:FC_PAD],
                              preferred_element_type=jnp.float32) + v128(ROW_POOL_B))
    logits = jnp.dot(pooled.astype(jnp.bfloat16), head_ref[:, FC_PAD:2 * FC_PAD],
                     preferred_element_type=jnp.float32) + v128(ROW_FC_B)           # [tb, 128]
    out_ref[...] = logits.astype(out_ref.dtype)


# ---------------- model wrapper (only trivial integer glue outside the kernel) ----------------
def phobert_sentiment_forward(params, input_ids, attention_mask):
    B, S = input_ids.shape
    assert S + PAD_IDX + 1 <= MAX_POS

    # sequence-block size: multiple of 8 (output sublane constraint) or the whole batch
    if B % 16 == 0:
        tb = 16
    elif B % 8 == 0:
        tb = 8
    else:
        tb = B
    m = tb * S

    ids = input_ids.astype(jnp.int32)
    mask = attention_mask.astype(jnp.int32)
    # RoBERTa-style position ids (attention_mask used as the non-pad indicator).
    pos_ids = jnp.cumsum(mask, axis=1) * mask + PAD_IDX
    idx = jnp.stack([ids, VOCAB + pos_ids], axis=-1).reshape(B * S, 2).astype(jnp.int32)
    mask_add = ((1.0 - mask.astype(jnp.float32)) * jnp.float32(-10000.0)).reshape(B, 1, S)

    kernel = functools.partial(_fused_phobert_kernel, tb=tb, seq=S)

    logits_pad = pl.pallas_call(
        kernel,
        out_shape=jax.ShapeDtypeStruct((B, FC_PAD), jnp.float32),
        grid=(B // tb,),
        in_specs=[
            pl.BlockSpec((m, 2), lambda g: (g, 0)),            # token / position ids per block
            pl.BlockSpec((tb, 1, S), lambda g: (g, 0, 0)),     # additive attention mask
            # resident weight slabs (constant index maps -> DMA'd once, 4 descriptors total)
            pl.BlockSpec(params["emb_slab"].shape, lambda g: (0, 0)),
            pl.BlockSpec(params["wmat_slab"].shape, lambda g: (0, 0, 0)),
            pl.BlockSpec(params["head_slab"].shape, lambda g: (0, 0)),
            pl.BlockSpec(params["vec_slab"].shape, lambda g: (0, 0)),
        ],
        out_specs=pl.BlockSpec((tb, FC_PAD), lambda g: (g, 0)),
        # NOTE: on v7x, pltpu.CORE_PARALLEL on this axis would shard sequence blocks across
        # the two TensorCores; "parallel" is kept here for portability across v5e/v6e/v7x.
        compiler_params=pltpu.CompilerParams(dimension_semantics=("parallel",)),
    )(idx, mask_add, params["emb_slab"], params["wmat_slab"],
      params["head_slab"], params["vec_slab"])

    return logits_pad[:, :NUM_CLASSES]                         # [B, 30]


# ---------------- deterministic parameter init (packed slabs) ----------------
def init_params(key):
    keys = jax.random.split(key, 6 + N_LAYERS)

    def nrm(k, shape, std=0.02):
        return (std * jax.random.normal(k, shape)).astype(jnp.float32)

    word_emb = nrm(keys[0], (VOCAB, HIDDEN))
    pos_emb = nrm(keys[1], (MAX_POS, HIDDEN))
    type_emb = nrm(keys[2], (2, HIDDEN))
    pool_w = nrm(keys[3], (HIDDEN, HIDDEN))
    # fc: nn.init.normal_(weight, std=0.02); nn.init.normal_(bias, 0) -> N(0, 1)
    fc_w = nrm(keys[4], (HIDDEN, NUM_CLASSES), std=0.02)
    fc_b = nrm(keys[5], (NUM_CLASSES,), std=1.0)

    # packed (word ++ position) embedding table, bf16 for the MXU multi-hot gather
    emb_slab = jnp.concatenate([word_emb, pos_emb], axis=0).astype(jnp.bfloat16)

    # per-layer 128-lane-aligned matrix slab: [wqkv | wi | wo | wf^T]
    wmat = jnp.zeros((N_LAYERS, HIDDEN, 4 * WCOL), jnp.float32)
    # bias / LayerNorm vector slab (all zero-padded to 128 lanes)
    vec = jnp.zeros((VEC_ROWS, FC_PAD), jnp.float32)
    vec = vec.at[ROW_TYPE, :HIDDEN].set(type_emb[0])
    vec = vec.at[ROW_EMB_G, :HIDDEN].set(1.0)     # emb LN gamma (beta stays 0)

    for li in range(N_LAYERS):
        lk = jax.random.split(keys[6 + li], 6)
        wq = nrm(lk[0], (HIDDEN, HIDDEN))
        wk = nrm(lk[1], (HIDDEN, HIDDEN))
        wv = nrm(lk[2], (HIDDEN, HIDDEN))
        wo = nrm(lk[3], (HIDDEN, HIDDEN))
        wi = nrm(lk[4], (HIDDEN, INTERMEDIATE))
        wf = nrm(lk[5], (INTERMEDIATE, HIDDEN))
        wqkv = jnp.concatenate([wq, wk, wv], axis=1)                    # [H, 3H]
        wmat = wmat.at[li, :, 0:3 * HIDDEN].set(wqkv)
        wmat = wmat.at[li, :, WCOL:WCOL + INTERMEDIATE].set(wi)
        wmat = wmat.at[li, :, 2 * WCOL:2 * WCOL + HIDDEN].set(wo)
        wmat = wmat.at[li, :, 3 * WCOL:3 * WCOL + INTERMEDIATE].set(wf.T)
        base = ROW_L0 + li * 8
        # attention / FFN biases are zero-init; LN gammas are 1
        vec = vec.at[base + 2, :HIDDEN].set(1.0)   # ln1 gamma
        vec = vec.at[base + 6, :HIDDEN].set(1.0)   # ln2 gamma

    vec = vec.at[ROW_FC_B, :NUM_CLASSES].set(fc_b)  # pool_b stays zero

    # pooler + classifier slab: rows 0:H hold [pool_w | fc_w(padded)], rest zero
    head = jnp.zeros((FC_PAD, 2 * FC_PAD), jnp.float32)
    head = head.at[0:HIDDEN, 0:HIDDEN].set(pool_w)
    head = head.at[0:HIDDEN, FC_PAD:FC_PAD + NUM_CLASSES].set(fc_w)

    return {
        "emb_slab": emb_slab,                        # bf16 [164, 32]
        "wmat_slab": wmat.astype(jnp.bfloat16),      # bf16 [L, 32, 512]
        "head_slab": head.astype(jnp.bfloat16),      # bf16 [128, 256]
        "vec_slab": vec,                             # f32  [21, 128]
    }


if __name__ == "__main__":
    key = jax.random.PRNGKey(0)
    pkey, ikey = jax.random.split(key)
    params = init_params(pkey)

    B, S = 2, SEQ_LEN
    input_ids = jax.random.randint(ikey, (B, S), 0, VOCAB, dtype=jnp.int32)
    attention_mask = jnp.ones((B, S), jnp.int32).at[1, 6:].set(0)  # some padding

    fwd = jax.jit(phobert_sentiment_forward)
    logits = fwd(params, input_ids, attention_mask)
    jax.block_until_ready(logits)
    assert logits.shape == (B, NUM_CLASSES)
    print("KERNEL_OK")
</pallas_src>

<mosaic_0001>
module attributes {stable_mosaic.version = 11 : i64} {
  func.func @_fused_phobert_kernel(%arg0: i32, %arg1: memref<16x2xi32, #tpu.memory_space<vmem>>, %arg2: memref<2x1x8xf32, #tpu.memory_space<vmem>>, %arg3: memref<164x32xbf16, #tpu.memory_space<vmem>>, %arg4: memref<2x32x512xbf16, #tpu.memory_space<vmem>>, %arg5: memref<128x256xbf16, #tpu.memory_space<vmem>>, %arg6: memref<21x128xf32, #tpu.memory_space<vmem>>, %arg7: memref<2x128xf32, #tpu.memory_space<vmem>>) attributes {dimension_semantics = [#tpu.dimension_semantics<parallel>], iteration_bounds = array<i64: 1>, scalar_prefetch = 0 : i64, scratch_operands = 0 : i64, tpu.core_type = #tpu.core_type<tc>, window_params = [{transform_indices = @transform_0, window_bounds = array<i64: 16, 2>}, {transform_indices = @transform_1, window_bounds = array<i64: 2, 1, 8>}, {pipeline_mode = #tpu.pipeline_mode<synchronous>, transform_indices = @transform_2, window_bounds = array<i64: 164, 32>}, {pipeline_mode = #tpu.pipeline_mode<synchronous>, transform_indices = @transform_3, window_bounds = array<i64: 2, 32, 512>}, {pipeline_mode = #tpu.pipeline_mode<synchronous>, transform_indices = @transform_4, window_bounds = array<i64: 128, 256>}, {pipeline_mode = #tpu.pipeline_mode<synchronous>, transform_indices = @transform_5, window_bounds = array<i64: 21, 128>}, {transform_indices = @transform_6, window_bounds = array<i64: 2, 128>}]} {
    %c0 = arith.constant 0 : index
    %c0_0 = arith.constant 0 : index
    %0 = vector.load %arg1[%c0, %c0_0] : memref<16x2xi32, #tpu.memory_space<vmem>>, vector<16x2xi32>
    %1 = tpu.iota {dimensions = array<i32: 1>} : vector<16x164xi32>
    %2 = vector.extract_strided_slice %0 {offsets = [0, 0], sizes = [16, 1], strides = [1, 1]} : vector<16x2xi32> to vector<16x1xi32>
    %3 = vector.broadcast %2 : vector<16x1xi32> to vector<16x164xi32>
    %4 = arith.cmpi eq, %1, %3 : vector<16x164xi32>
    %5 = arith.extui %4 : vector<16x164xi1> to vector<16x164xi32>
    %6 = arith.sitofp %5 : vector<16x164xi32> to vector<16x164xf32>
    %7 = vector.extract_strided_slice %0 {offsets = [0, 1], sizes = [16, 1], strides = [1, 1]} : vector<16x2xi32> to vector<16x1xi32>
    %8 = vector.broadcast %7 : vector<16x1xi32> to vector<16x164xi32>
    %9 = arith.cmpi eq, %1, %8 : vector<16x164xi32>
    %10 = arith.extui %9 : vector<16x164xi1> to vector<16x164xi32>
    %11 = arith.sitofp %10 : vector<16x164xi32> to vector<16x164xf32>
    %12 = arith.addf %6, %11 : vector<16x164xf32>
    %13 = arith.truncf %12 : vector<16x164xf32> to vector<16x164xbf16>
    %c0_1 = arith.constant 0 : index
    %c0_2 = arith.constant 0 : index
    %14 = vector.load %arg3[%c0_1, %c0_2] : memref<164x32xbf16, #tpu.memory_space<vmem>>, vector<164x32xbf16>
    %cst = arith.constant dense<0.000000e+00> : vector<16x32xf32>
    %15 = tpu.matmul %13, %14, %cst {dimension_numbers = #tpu.dot_dimension_numbers<[1], [0], [0], [1], [0, 0, 1, 1], [], []>} : vector<16x164xbf16>, vector<164x32xbf16>, vector<16x32xf32> -> vector<16x32xf32>
    %c0_3 = arith.constant 0 : index
    %c0_4 = arith.constant 0 : index
    %16 = vector.load %arg6[%c0_3, %c0_4] : memref<21x128xf32, #tpu.memory_space<vmem>>, vector<1x32xf32>
    %17 = vector.broadcast %16 : vector<1x32xf32> to vector<16x32xf32>
    %18 = arith.addf %15, %17 : vector<16x32xf32>
    %c1 = arith.constant 1 : index
    %c0_5 = arith.constant 0 : index
    %19 = vector.load %arg6[%c1, %c0_5] : memref<21x128xf32, #tpu.memory_space<vmem>>, vector<1x32xf32>
    %c2 = arith.constant 2 : index
    %c0_6 = arith.constant 0 : index
    %20 = vector.load %arg6[%c2, %c0_6] : memref<21x128xf32, #tpu.memory_space<vmem>>, vector<1x32xf32>
    %cst_7 = arith.constant dense<0.000000e+00> : vector<16xf32>
    %21 = vector.multi_reduction <add>, %18, %cst_7 [1] : vector<16x32xf32> to vector<16xf32>
    %22 = vector.shape_cast %21 : vector<16xf32> to vector<16x1xf32>
    %cst_8 = arith.constant 3.200000e+01 : f32
    %23 = vector.broadcast %cst_8 : f32 to vector<16x1xf32>
    %24 = arith.divf %22, %23 : vector<16x1xf32>
    %25 = arith.mulf %18, %18 : vector<16x32xf32>
    %cst_9 = arith.constant dense<0.000000e+00> : vector<16xf32>
    %26 = vector.multi_reduction <add>, %25, %cst_9 [1] : vector<16x32xf32> to vector<16xf32>
    %27 = vector.shape_cast %26 : vector<16xf32> to vector<16x1xf32>
    %cst_10 = arith.constant 3.200000e+01 : f32
    %28 = vector.broadcast %cst_10 : f32 to vector<16x1xf32>
    %29 = arith.divf %27, %28 : vector<16x1xf32>
    %30 = arith.mulf %24, %24 : vector<16x1xf32>
    %31 = arith.subf %29, %30 : vector<16x1xf32>
    %cst_11 = arith.constant 9.99999974E-6 : f32
    %32 = vector.broadcast %cst_11 : f32 to vector<16x1xf32>
    %33 = arith.addf %31, %32 : vector<16x1xf32>
    %34 = math.rsqrt %33 : vector<16x1xf32>
    %35 = vector.broadcast %24 : vector<16x1xf32> to vector<16x32xf32>
    %36 = arith.subf %18, %35 : vector<16x32xf32>
    %37 = vector.broadcast %34 : vector<16x1xf32> to vector<16x32xf32>
    %38 = arith.mulf %36, %37 : vector<16x32xf32>
    %39 = vector.broadcast %19 : vector<1x32xf32> to vector<16x32xf32>
    %40 = arith.mulf %38, %39 : vector<16x32xf32>
    %41 = vector.broadcast %20 : vector<1x32xf32> to vector<16x32xf32>
    %42 = arith.addf %40, %41 : vector<16x32xf32>
    %c0_12 = arith.constant 0 : index
    %c0_13 = arith.constant 0 : index
    %c0_14 = arith.constant 0 : index
    %43 = vector.load %arg4[%c0_12, %c0_13, %c0_14] : memref<2x32x512xbf16, #tpu.memory_space<vmem>>, vector<1x32x512xbf16>
    %44 = vector.shape_cast %43 : vector<1x32x512xbf16> to vector<32x512xbf16>
    %45 = arith.truncf %42 : vector<16x32xf32> to vector<16x32xbf16>
    %46 = vector.extract_strided_slice %44 {offsets = [0, 0], sizes = [32, 128], strides = [1, 1]} : vector<32x512xbf16> to vector<32x128xbf16>
    %cst_15 = arith.constant dense<0.000000e+00> : vector<16x128xf32>
    %47 = tpu.matmul %45, %46, %cst_15 {dimension_numbers = #tpu.dot_dimension_numbers<[1], [0], [0], [1], [0, 0, 1, 1], [], []>} : vector<16x32xbf16>, vector<32x128xbf16>, vector<16x128xf32> -> vector<16x128xf32>
    %c3 = arith.constant 3 : index
    %c0_16 = arith.constant 0 : index
    %48 = vector.load %arg6[%c3, %c0_16] : memref<21x128xf32, #tpu.memory_space<vmem>>, vector<1x128xf32>
    %49 = vector.broadcast %48 : vector<1x128xf32> to vector<16x128xf32>
    %50 = arith.addf %47, %49 : vector<16x128xf32>
    %51 = vector.extract_strided_slice %44 {offsets = [0, 256], sizes = [32, 32], strides = [1, 1]} : vector<32x512xbf16> to vector<32x32xbf16>
    %52 = vector.extract_strided_slice %50 {offsets = [0, 0], sizes = [8, 16], strides = [1, 1]} : vector<16x128xf32> to vector<8x16xf32>
    %53 = vector.extract_strided_slice %50 {offsets = [0, 32], sizes = [8, 16], strides = [1, 1]} : vector<16x128xf32> to vector<8x16xf32>
    %54 = vector.extract_strided_slice %50 {offsets = [0, 64], sizes = [8, 16], strides = [1, 1]} : vector<16x128xf32> to vector<8x16xf32>
    %cst_17 = arith.constant dense<0.000000e+00> : vector<8x8xf32>
    %55 = tpu.matmul %52, %53, %cst_17 {dimension_numbers = #tpu.dot_dimension_numbers<[1], [1], [0], [0], [0, 0, 1, 0], [], []>} : vector<8x16xf32>, vector<8x16xf32>, vector<8x8xf32> -> vector<8x8xf32>
    %cst_18 = arith.constant 2.500000e-01 : f32
    %56 = vector.broadcast %cst_18 : f32 to vector<8x8xf32>
    %57 = arith.mulf %55, %56 : vector<8x8xf32>
    %c0_19 = arith.constant 0 : index
    %c0_20 = arith.constant 0 : index
    %c0_21 = arith.constant 0 : index
    %58 = vector.load %arg2[%c0_19, %c0_20, %c0_21] : memref<2x1x8xf32, #tpu.memory_space<vmem>>, vector<1x1x8xf32>
    %59 = vector.shape_cast %58 : vector<1x1x8xf32> to vector<1x8xf32>
    %60 = vector.broadcast %59 : vector<1x8xf32> to vector<8x8xf32>
    %61 = arith.addf %57, %60 : vector<8x8xf32>
    %cst_22 = arith.constant dense<0xFF800000> : vector<8xf32>
    %62 = vector.multi_reduction <maximumf>, %61, %cst_22 [1] : vector<8x8xf32> to vector<8xf32>
    %63 = vector.shape_cast %62 : vector<8xf32> to vector<8x1xf32>
    %64 = vector.broadcast %63 : vector<8x1xf32> to vector<8x8xf32>
    %65 = arith.subf %61, %64 : vector<8x8xf32>
    %66 = math.exp %65 : vector<8x8xf32>
    %cst_23 = arith.constant dense<0.000000e+00> : vector<8xf32>
    %67 = vector.multi_reduction <add>, %66, %cst_23 [1] : vector<8x8xf32> to vector<8xf32>
    %68 = vector.shape_cast %67 : vector<8xf32> to vector<8x1xf32>
    %69 = tpu.reciprocal %68 {approx = true} : vector<8x1xf32> -> vector<8x1xf32>
    %70 = vector.broadcast %69 : vector<8x1xf32> to vector<8x8xf32>
    %71 = arith.mulf %66, %70 : vector<8x8xf32>
    %cst_24 = arith.constant dense<0.000000e+00> : vector<8x16xf32>
    %72 = tpu.matmul %71, %54, %cst_24 {dimension_numbers = #tpu.dot_dimension_numbers<[1], [0], [0], [1], [0, 0, 1, 1], [], []>} : vector<8x8xf32>, vector<8x16xf32>, vector<8x16xf32> -> vector<8x16xf32>
    %73 = vector.extract_strided_slice %50 {offsets = [8, 0], sizes = [8, 16], strides = [1, 1]} : vector<16x128xf32> to vector<8x16xf32>
    %74 = vector.extract_strided_slice %50 {offsets = [8, 32], sizes = [8, 16], strides = [1, 1]} : vector<16x128xf32> to vector<8x16xf32>
    %75 = vector.extract_strided_slice %50 {offsets = [8, 64], sizes = [8, 16], strides = [1, 1]} : vector<16x128xf32> to vector<8x16xf32>
    %cst_25 = arith.constant dense<0.000000e+00> : vector<8x8xf32>
    %76 = tpu.matmul %73, %74, %cst_25 {dimension_numbers = #tpu.dot_dimension_numbers<[1], [1], [0], [0], [0, 0, 1, 0], [], []>} : vector<8x16xf32>, vector<8x16xf32>, vector<8x8xf32> -> vector<8x8xf32>
    %cst_26 = arith.constant 2.500000e-01 : f32
    %77 = vector.broadcast %cst_26 : f32 to vector<8x8xf32>
    %78 = arith.mulf %76, %77 : vector<8x8xf32>
    %c1_27 = arith.constant 1 : index
    %c0_28 = arith.constant 0 : index
    %c0_29 = arith.constant 0 : index
    %79 = vector.load %arg2[%c1_27, %c0_28, %c0_29] : memref<2x1x8xf32, #tpu.memory_space<vmem>>, vector<1x1x8xf32>
    %80 = vector.shape_cast %79 : vector<1x1x8xf32> to vector<1x8xf32>
    %81 = vector.broadcast %80 : vector<1x8xf32> to vector<8x8xf32>
    %82 = arith.addf %78, %81 : vector<8x8xf32>
    %cst_30 = arith.constant dense<0xFF800000> : vector<8xf32>
    %83 = vector.multi_reduction <maximumf>, %82, %cst_30 [1] : vector<8x8xf32> to vector<8xf32>
    %84 = vector.shape_cast %83 : vector<8xf32> to vector<8x1xf32>
    %85 = vector.broadcast %84 : vector<8x1xf32> to vector<8x8xf32>
    %86 = arith.subf %82, %85 : vector<8x8xf32>
    %87 = math.exp %86 : vector<8x8xf32>
    %cst_31 = arith.constant dense<0.000000e+00> : vector<8xf32>
    %88 = vector.multi_reduction <add>, %87, %cst_31 [1] : vector<8x8xf32> to vector<8xf32>
    %89 = vector.shape_cast %88 : vector<8xf32> to vector<8x1xf32>
    %90 = tpu.reciprocal %89 {approx = true} : vector<8x1xf32> -> vector<8x1xf32>
    %91 = vector.broadcast %90 : vector<8x1xf32> to vector<8x8xf32>
    %92 = arith.mulf %87, %91 : vector<8x8xf32>
    %cst_32 = arith.constant dense<0.000000e+00> : vector<8x16xf32>
    %93 = tpu.matmul %92, %75, %cst_32 {dimension_numbers = #tpu.dot_dimension_numbers<[1], [0], [0], [1], [0, 0, 1, 1], [], []>} : vector<8x8xf32>, vector<8x16xf32>, vector<8x16xf32> -> vector<8x16xf32>
    %94 = tpu.concatenate %72, %93 in 0 : vector<8x16xf32>, vector<8x16xf32> -> vector<16x16xf32>
    %95 = arith.truncf %94 : vector<16x16xf32> to vector<16x16xbf16>
    %96 = vector.extract_strided_slice %51 {offsets = [0, 0], sizes = [16, 32], strides = [1, 1]} : vector<32x32xbf16> to vector<16x32xbf16>
    %cst_33 = arith.constant dense<0.000000e+00> : vector<16x32xf32>
    %97 = tpu.matmul %95, %96, %cst_33 {dimension_numbers = #tpu.dot_dimension_numbers<[1], [0], [0], [1], [0, 0, 1, 1], [], []>} : vector<16x16xbf16>, vector<16x32xbf16>, vector<16x32xf32> -> vector<16x32xf32>
    %98 = vector.extract_strided_slice %50 {offsets = [0, 16], sizes = [8, 16], strides = [1, 1]} : vector<16x128xf32> to vector<8x16xf32>
    %99 = vector.extract_strided_slice %50 {offsets = [0, 48], sizes = [8, 16], strides = [1, 1]} : vector<16x128xf32> to vector<8x16xf32>
    %100 = vector.extract_strided_slice %50 {offsets = [0, 80], sizes = [8, 16], strides = [1, 1]} : vector<16x128xf32> to vector<8x16xf32>
    %cst_34 = arith.constant dense<0.000000e+00> : vector<8x8xf32>
    %101 = tpu.matmul %98, %99, %cst_34 {dimension_numbers = #tpu.dot_dimension_numbers<[1], [1], [0], [0], [0, 0, 1, 0], [], []>} : vector<8x16xf32>, vector<8x16xf32>, vector<8x8xf32> -> vector<8x8xf32>
    %cst_35 = arith.constant 2.500000e-01 : f32
    %102 = vector.broadcast %cst_35 : f32 to vector<8x8xf32>
    %103 = arith.mulf %101, %102 : vector<8x8xf32>
    %c0_36 = arith.constant 0 : index
    %c0_37 = arith.constant 0 : index
    %c0_38 = arith.constant 0 : index
    %104 = vector.load %arg2[%c0_36, %c0_37, %c0_38] : memref<2x1x8xf32, #tpu.memory_space<vmem>>, vector<1x1x8xf32>
    %105 = vector.shape_cast %104 : vector<1x1x8xf32> to vector<1x8xf32>
    %106 = vector.broadcast %105 : vector<1x8xf32> to vector<8x8xf32>
    %107 = arith.addf %103, %106 : vector<8x8xf32>
    %cst_39 = arith.constant dense<0xFF800000> : vector<8xf32>
    %108 = vector.multi_reduction <maximumf>, %107, %cst_39 [1] : vector<8x8xf32> to vector<8xf32>
    %109 = vector.shape_cast %108 : vector<8xf32> to vector<8x1xf32>
    %110 = vector.broadcast %109 : vector<8x1xf32> to vector<8x8xf32>
    %111 = arith.subf %107, %110 : vector<8x8xf32>
    %112 = math.exp %111 : vector<8x8xf32>
    %cst_40 = arith.constant dense<0.000000e+00> : vector<8xf32>
    %113 = vector.multi_reduction <add>, %112, %cst_40 [1] : vector<8x8xf32> to vector<8xf32>
    %114 = vector.shape_cast %113 : vector<8xf32> to vector<8x1xf32>
    %115 = tpu.reciprocal %114 {approx = true} : vector<8x1xf32> -> vector<8x1xf32>
    %116 = vector.broadcast %115 : vector<8x1xf32> to vector<8x8xf32>
    %117 = arith.mulf %112, %116 : vector<8x8xf32>
    %cst_41 = arith.constant dense<0.000000e+00> : vector<8x16xf32>
    %118 = tpu.matmul %117, %100, %cst_41 {dimension_numbers = #tpu.dot_dimension_numbers<[1], [0], [0], [1], [0, 0, 1, 1], [], []>} : vector<8x8xf32>, vector<8x16xf32>, vector<8x16xf32> -> vector<8x16xf32>
    %119 = vector.extract_strided_slice %50 {offsets = [8, 16], sizes = [8, 16], strides = [1, 1]} : vector<16x128xf32> to vector<8x16xf32>
    %120 = vector.extract_strided_slice %50 {offsets = [8, 48], sizes = [8, 16], strides = [1, 1]} : vector<16x128xf32> to vector<8x16xf32>
    %121 = vector.extract_strided_slice %50 {offsets = [8, 80], sizes = [8, 16], strides = [1, 1]} : vector<16x128xf32> to vector<8x16xf32>
    %cst_42 = arith.constant dense<0.000000e+00> : vector<8x8xf32>
    %122 = tpu.matmul %119, %120, %cst_42 {dimension_numbers = #tpu.dot_dimension_numbers<[1], [1], [0], [0], [0, 0, 1, 0], [], []>} : vector<8x16xf32>, vector<8x16xf32>, vector<8x8xf32> -> vector<8x8xf32>
    %cst_43 = arith.constant 2.500000e-01 : f32
    %123 = vector.broadcast %cst_43 : f32 to vector<8x8xf32>
    %124 = arith.mulf %122, %123 : vector<8x8xf32>
    %c1_44 = arith.constant 1 : index
    %c0_45 = arith.constant 0 : index
    %c0_46 = arith.constant 0 : index
    %125 = vector.load %arg2[%c1_44, %c0_45, %c0_46] : memref<2x1x8xf32, #tpu.memory_space<vmem>>, vector<1x1x8xf32>
    %126 = vector.shape_cast %125 : vector<1x1x8xf32> to vector<1x8xf32>
    %127 = vector.broadcast %126 : vector<1x8xf32> to vector<8x8xf32>
    %128 = arith.addf %124, %127 : vector<8x8xf32>
    %cst_47 = arith.constant dense<0xFF800000> : vector<8xf32>
    %129 = vector.multi_reduction <maximumf>, %128, %cst_47 [1] : vector<8x8xf32> to vector<8xf32>
    %130 = vector.shape_cast %129 : vector<8xf32> to vector<8x1xf32>
    %131 = vector.broadcast %130 : vector<8x1xf32> to vector<8x8xf32>
    %132 = arith.subf %128, %131 : vector<8x8xf32>
    %133 = math.exp %132 : vector<8x8xf32>
    %cst_48 = arith.constant dense<0.000000e+00> : vector<8xf32>
    %134 = vector.multi_reduction <add>, %133, %cst_48 [1] : vector<8x8xf32> to vector<8xf32>
    %135 = vector.shape_cast %134 : vector<8xf32> to vector<8x1xf32>
    %136 = tpu.reciprocal %135 {approx = true} : vector<8x1xf32> -> vector<8x1xf32>
    %137 = vector.broadcast %136 : vector<8x1xf32> to vector<8x8xf32>
    %138 = arith.mulf %133, %137 : vector<8x8xf32>
    %cst_49 = arith.constant dense<0.000000e+00> : vector<8x16xf32>
    %139 = tpu.matmul %138, %121, %cst_49 {dimension_numbers = #tpu.dot_dimension_numbers<[1], [0], [0], [1], [0, 0, 1, 1], [], []>} : vector<8x8xf32>, vector<8x16xf32>, vector<8x16xf32> -> vector<8x16xf32>
    %140 = tpu.concatenate %118, %139 in 0 : vector<8x16xf32>, vector<8x16xf32> -> vector<16x16xf32>
    %141 = arith.truncf %140 : vector<16x16xf32> to vector<16x16xbf16>
    %142 = vector.extract_strided_slice %51 {offsets = [16, 0], sizes = [16, 32], strides = [1, 1]} : vector<32x32xbf16> to vector<16x32xbf16>
    %cst_50 = arith.constant dense<0.000000e+00> : vector<16x32xf32>
    %143 = tpu.matmul %141, %142, %cst_50 {dimension_numbers = #tpu.dot_dimension_numbers<[1], [0], [0], [1], [0, 0, 1, 1], [], []>} : vector<16x16xbf16>, vector<16x32xbf16>, vector<16x32xf32> -> vector<16x32xf32>
    %144 = arith.addf %97, %143 : vector<16x32xf32>
    %c4 = arith.constant 4 : index
    %c0_51 = arith.constant 0 : index
    %145 = vector.load %arg6[%c4, %c0_51] : memref<21x128xf32, #tpu.memory_space<vmem>>, vector<1x32xf32>
    %146 = vector.broadcast %145 : vector<1x32xf32> to vector<16x32xf32>
    %147 = arith.addf %144, %146 : vector<16x32xf32>
    %148 = arith.addf %147, %42 : vector<16x32xf32>
    %c5 = arith.constant 5 : index
    %c0_52 = arith.constant 0 : index
    %149 = vector.load %arg6[%c5, %c0_52] : memref<21x128xf32, #tpu.memory_space<vmem>>, vector<1x32xf32>
    %c6 = arith.constant 6 : index
    %c0_53 = arith.constant 0 : index
    %150 = vector.load %arg6[%c6, %c0_53] : memref<21x128xf32, #tpu.memory_space<vmem>>, vector<1x32xf32>
    %cst_54 = arith.constant dense<0.000000e+00> : vector<16xf32>
    %151 = vector.multi_reduction <add>, %148, %cst_54 [1] : vector<16x32xf32> to vector<16xf32>
    %152 = vector.shape_cast %151 : vector<16xf32> to vector<16x1xf32>
    %cst_55 = arith.constant 3.200000e+01 : f32
    %153 = vector.broadcast %cst_55 : f32 to vector<16x1xf32>
    %154 = arith.divf %152, %153 : vector<16x1xf32>
    %155 = arith.mulf %148, %148 : vector<16x32xf32>
    %cst_56 = arith.constant dense<0.000000e+00> : vector<16xf32>
    %156 = vector.multi_reduction <add>, %155, %cst_56 [1] : vector<16x32xf32> to vector<16xf32>
    %157 = vector.shape_cast %156 : vector<16xf32> to vector<16x1xf32>
    %cst_57 = arith.constant 3.200000e+01 : f32
    %158 = vector.broadcast %cst_57 : f32 to vector<16x1xf32>
    %159 = arith.divf %157, %158 : vector<16x1xf32>
    %160 = arith.mulf %154, %154 : vector<16x1xf32>
    %161 = arith.subf %159, %160 : vector<16x1xf32>
    %cst_58 = arith.constant 9.99999974E-6 : f32
    %162 = vector.broadcast %cst_58 : f32 to vector<16x1xf32>
    %163 = arith.addf %161, %162 : vector<16x1xf32>
    %164 = math.rsqrt %163 : vector<16x1xf32>
    %165 = vector.broadcast %154 : vector<16x1xf32> to vector<16x32xf32>
    %166 = arith.subf %148, %165 : vector<16x32xf32>
    %167 = vector.broadcast %164 : vector<16x1xf32> to vector<16x32xf32>
    %168 = arith.mulf %166, %167 : vector<16x32xf32>
    %169 = vector.broadcast %149 : vector<1x32xf32> to vector<16x32xf32>
    %170 = arith.mulf %168, %169 : vector<16x32xf32>
    %171 = vector.broadcast %150 : vector<1x32xf32> to vector<16x32xf32>
    %172 = arith.addf %170, %171 : vector<16x32xf32>
    %173 = arith.truncf %172 : vector<16x32xf32> to vector<16x32xbf16>
    %174 = vector.extract_strided_slice %44 {offsets = [0, 128], sizes = [32, 128], strides = [1, 1]} : vector<32x512xbf16> to vector<32x128xbf16>
    %cst_59 = arith.constant dense<0.000000e+00> : vector<16x128xf32>
    %175 = tpu.matmul %173, %174, %cst_59 {dimension_numbers = #tpu.dot_dimension_numbers<[1], [0], [0], [1], [0, 0, 1, 1], [], []>} : vector<16x32xbf16>, vector<32x128xbf16>, vector<16x128xf32> -> vector<16x128xf32>
    %c7 = arith.constant 7 : index
    %c0_60 = arith.constant 0 : index
    %176 = vector.load %arg6[%c7, %c0_60] : memref<21x128xf32, #tpu.memory_space<vmem>>, vector<1x128xf32>
    %177 = vector.broadcast %176 : vector<1x128xf32> to vector<16x128xf32>
    %178 = arith.addf %175, %177 : vector<16x128xf32>
    %cst_61 = arith.constant 5.000000e-01 : f32
    %179 = vector.broadcast %cst_61 : f32 to vector<16x128xf32>
    %180 = arith.mulf %179, %178 : vector<16x128xf32>
    %cst_62 = arith.constant 4.471500e-02 : f32
    %181 = vector.broadcast %cst_62 : f32 to vector<16x128xf32>
    %182 = arith.mulf %181, %178 : vector<16x128xf32>
    %183 = arith.mulf %182, %178 : vector<16x128xf32>
    %184 = arith.mulf %183, %178 : vector<16x128xf32>
    %185 = arith.addf %178, %184 : vector<16x128xf32>
    %cst_63 = arith.constant 0.797884583 : f32
    %186 = vector.broadcast %cst_63 : f32 to vector<16x128xf32>
    %187 = arith.mulf %186, %185 : vector<16x128xf32>
    %188 = math.tanh %187 : vector<16x128xf32>
    %cst_64 = arith.constant 1.000000e+00 : f32
    %189 = vector.broadcast %cst_64 : f32 to vector<16x128xf32>
    %190 = arith.addf %189, %188 : vector<16x128xf32>
    %191 = arith.mulf %180, %190 : vector<16x128xf32>
    %192 = arith.truncf %191 : vector<16x128xf32> to vector<16x128xbf16>
    %193 = vector.extract_strided_slice %44 {offsets = [0, 384], sizes = [32, 128], strides = [1, 1]} : vector<32x512xbf16> to vector<32x128xbf16>
    %cst_65 = arith.constant dense<0.000000e+00> : vector<16x32xf32>
    %194 = tpu.matmul %192, %193, %cst_65 {dimension_numbers = #tpu.dot_dimension_numbers<[1], [1], [0], [0], [0, 0, 1, 0], [], []>} : vector<16x128xbf16>, vector<32x128xbf16>, vector<16x32xf32> -> vector<16x32xf32>
    %c8 = arith.constant 8 : index
    %c0_66 = arith.constant 0 : index
    %195 = vector.load %arg6[%c8, %c0_66] : memref<21x128xf32, #tpu.memory_space<vmem>>, vector<1x32xf32>
    %196 = vector.broadcast %195 : vector<1x32xf32> to vector<16x32xf32>
    %197 = arith.addf %194, %196 : vector<16x32xf32>
    %198 = arith.addf %197, %172 : vector<16x32xf32>
    %c9 = arith.constant 9 : index
    %c0_67 = arith.constant 0 : index
    %199 = vector.load %arg6[%c9, %c0_67] : memref<21x128xf32, #tpu.memory_space<vmem>>, vector<1x32xf32>
    %c10 = arith.constant 10 : index
    %c0_68 = arith.constant 0 : index
    %200 = vector.load %arg6[%c10, %c0_68] : memref<21x128xf32, #tpu.memory_space<vmem>>, vector<1x32xf32>
    %cst_69 = arith.constant dense<0.000000e+00> : vector<16xf32>
    %201 = vector.multi_reduction <add>, %198, %cst_69 [1] : vector<16x32xf32> to vector<16xf32>
    %202 = vector.shape_cast %201 : vector<16xf32> to vector<16x1xf32>
    %cst_70 = arith.constant 3.200000e+01 : f32
    %203 = vector.broadcast %cst_70 : f32 to vector<16x1xf32>
    %204 = arith.divf %202, %203 : vector<16x1xf32>
    %205 = arith.mulf %198, %198 : vector<16x32xf32>
    %cst_71 = arith.constant dense<0.000000e+00> : vector<16xf32>
    %206 = vector.multi_reduction <add>, %205, %cst_71 [1] : vector<16x32xf32> to vector<16xf32>
    %207 = vector.shape_cast %206 : vector<16xf32> to vector<16x1xf32>
    %cst_72 = arith.constant 3.200000e+01 : f32
    %208 = vector.broadcast %cst_72 : f32 to vector<16x1xf32>
    %209 = arith.divf %207, %208 : vector<16x1xf32>
    %210 = arith.mulf %204, %204 : vector<16x1xf32>
    %211 = arith.subf %209, %210 : vector<16x1xf32>
    %cst_73 = arith.constant 9.99999974E-6 : f32
    %212 = vector.broadcast %cst_73 : f32 to vector<16x1xf32>
    %213 = arith.addf %211, %212 : vector<16x1xf32>
    %214 = math.rsqrt %213 : vector<16x1xf32>
    %215 = vector.broadcast %204 : vector<16x1xf32> to vector<16x32xf32>
    %216 = arith.subf %198, %215 : vector<16x32xf32>
    %217 = vector.broadcast %214 : vector<16x1xf32> to vector<16x32xf32>
    %218 = arith.mulf %216, %217 : vector<16x32xf32>
    %219 = vector.broadcast %199 : vector<1x32xf32> to vector<16x32xf32>
    %220 = arith.mulf %218, %219 : vector<16x32xf32>
    %221 = vector.broadcast %200 : vector<1x32xf32> to vector<16x32xf32>
    %222 = arith.addf %220, %221 : vector<16x32xf32>
    %c1_74 = arith.constant 1 : index
    %c0_75 = arith.constant 0 : index
    %c0_76 = arith.constant 0 : index
    %223 = vector.load %arg4[%c1_74, %c0_75, %c0_76] : memref<2x32x512xbf16, #tpu.memory_space<vmem>>, vector<1x32x512xbf16>
    %224 = vector.shape_cast %223 : vector<1x32x512xbf16> to vector<32x512xbf16>
    %225 = arith.truncf %222 : vector<16x32xf32> to vector<16x32xbf16>
    %226 = vector.extract_strided_slice %224 {offsets = [0, 0], sizes = [32, 128], strides = [1, 1]} : vector<32x512xbf16> to vector<32x128xbf16>
    %cst_77 = arith.constant dense<0.000000e+00> : vector<16x128xf32>
    %227 = tpu.matmul %225, %226, %cst_77 {dimension_numbers = #tpu.dot_dimension_numbers<[1], [0], [0], [1], [0, 0, 1, 1], [], []>} : vector<16x32xbf16>, vector<32x128xbf16>, vector<16x128xf32> -> vector<16x128xf32>
    %c11 = arith.constant 11 : index
    %c0_78 = arith.constant 0 : index
    %228 = vector.load %arg6[%c11, %c0_78] : memref<21x128xf32, #tpu.memory_space<vmem>>, vector<1x128xf32>
    %229 = vector.broadcast %228 : vector<1x128xf32> to vector<16x128xf32>
    %230 = arith.addf %227, %229 : vector<16x128xf32>
    %231 = vector.extract_strided_slice %224 {offsets = [0, 256], sizes = [32, 32], strides = [1, 1]} : vector<32x512xbf16> to vector<32x32xbf16>
    %232 = vector.extract_strided_slice %230 {offsets = [0, 0], sizes = [8, 16], strides = [1, 1]} : vector<16x128xf32> to vector<8x16xf32>
    %233 = vector.extract_strided_slice %230 {offsets = [0, 32], sizes = [8, 16], strides = [1, 1]} : vector<16x128xf32> to vector<8x16xf32>
    %234 = vector.extract_strided_slice %230 {offsets = [0, 64], sizes = [8, 16], strides = [1, 1]} : vector<16x128xf32> to vector<8x16xf32>
    %cst_79 = arith.constant dense<0.000000e+00> : vector<8x8xf32>
    %235 = tpu.matmul %232, %233, %cst_79 {dimension_numbers = #tpu.dot_dimension_numbers<[1], [1], [0], [0], [0, 0, 1, 0], [], []>} : vector<8x16xf32>, vector<8x16xf32>, vector<8x8xf32> -> vector<8x8xf32>
    %cst_80 = arith.constant 2.500000e-01 : f32
    %236 = vector.broadcast %cst_80 : f32 to vector<8x8xf32>
    %237 = arith.mulf %235, %236 : vector<8x8xf32>
    %c0_81 = arith.constant 0 : index
    %c0_82 = arith.constant 0 : index
    %c0_83 = arith.constant 0 : index
    %238 = vector.load %arg2[%c0_81, %c0_82, %c0_83] : memref<2x1x8xf32, #tpu.memory_space<vmem>>, vector<1x1x8xf32>
    %239 = vector.shape_cast %238 : vector<1x1x8xf32> to vector<1x8xf32>
    %240 = vector.broadcast %239 : vector<1x8xf32> to vector<8x8xf32>
    %241 = arith.addf %237, %240 : vector<8x8xf32>
    %cst_84 = arith.constant dense<0xFF800000> : vector<8xf32>
    %242 = vector.multi_reduction <maximumf>, %241, %cst_84 [1] : vector<8x8xf32> to vector<8xf32>
    %243 = vector.shape_cast %242 : vector<8xf32> to vector<8x1xf32>
    %244 = vector.broadcast %243 : vector<8x1xf32> to vector<8x8xf32>
    %245 = arith.subf %241, %244 : vector<8x8xf32>
    %246 = math.exp %245 : vector<8x8xf32>
    %cst_85 = arith.constant dense<0.000000e+00> : vector<8xf32>
    %247 = vector.multi_reduction <add>, %246, %cst_85 [1] : vector<8x8xf32> to vector<8xf32>
    %248 = vector.shape_cast %247 : vector<8xf32> to vector<8x1xf32>
    %249 = tpu.reciprocal %248 {approx = true} : vector<8x1xf32> -> vector<8x1xf32>
    %250 = vector.broadcast %249 : vector<8x1xf32> to vector<8x8xf32>
    %251 = arith.mulf %246, %250 : vector<8x8xf32>
    %cst_86 = arith.constant dense<0.000000e+00> : vector<8x16xf32>
    %252 = tpu.matmul %251, %234, %cst_86 {dimension_numbers = #tpu.dot_dimension_numbers<[1], [0], [0], [1], [0, 0, 1, 1], [], []>} : vector<8x8xf32>, vector<8x16xf32>, vector<8x16xf32> -> vector<8x16xf32>
    %253 = vector.extract_strided_slice %230 {offsets = [8, 0], sizes = [8, 16], strides = [1, 1]} : vector<16x128xf32> to vector<8x16xf32>
    %254 = vector.extract_strided_slice %230 {offsets = [8, 32], sizes = [8, 16], strides = [1, 1]} : vector<16x128xf32> to vector<8x16xf32>
    %255 = vector.extract_strided_slice %230 {offsets = [8, 64], sizes = [8, 16], strides = [1, 1]} : vector<16x128xf32> to vector<8x16xf32>
    %cst_87 = arith.constant dense<0.000000e+00> : vector<8x8xf32>
    %256 = tpu.matmul %253, %254, %cst_87 {dimension_numbers = #tpu.dot_dimension_numbers<[1], [1], [0], [0], [0, 0, 1, 0], [], []>} : vector<8x16xf32>, vector<8x16xf32>, vector<8x8xf32> -> vector<8x8xf32>
    %cst_88 = arith.constant 2.500000e-01 : f32
    %257 = vector.broadcast %cst_88 : f32 to vector<8x8xf32>
    %258 = arith.mulf %256, %257 : vector<8x8xf32>
    %c1_89 = arith.constant 1 : index
    %c0_90 = arith.constant 0 : index
    %c0_91 = arith.constant 0 : index
    %259 = vector.load %arg2[%c1_89, %c0_90, %c0_91] : memref<2x1x8xf32, #tpu.memory_space<vmem>>, vector<1x1x8xf32>
    %260 = vector.shape_cast %259 : vector<1x1x8xf32> to vector<1x8xf32>
    %261 = vector.broadcast %260 : vector<1x8xf32> to vector<8x8xf32>
    %262 = arith.addf %258, %261 : vector<8x8xf32>
    %cst_92 = arith.constant dense<0xFF800000> : vector<8xf32>
    %263 = vector.multi_reduction <maximumf>, %262, %cst_92 [1] : vector<8x8xf32> to vector<8xf32>
    %264 = vector.shape_cast %263 : vector<8xf32> to vector<8x1xf32>
    %265 = vector.broadcast %264 : vector<8x1xf32> to vector<8x8xf32>
    %266 = arith.subf %262, %265 : vector<8x8xf32>
    %267 = math.exp %266 : vector<8x8xf32>
    %cst_93 = arith.constant dense<0.000000e+00> : vector<8xf32>
    %268 = vector.multi_reduction <add>, %267, %cst_93 [1] : vector<8x8xf32> to vector<8xf32>
    %269 = vector.shape_cast %268 : vector<8xf32> to vector<8x1xf32>
    %270 = tpu.reciprocal %269 {approx = true} : vector<8x1xf32> -> vector<8x1xf32>
    %271 = vector.broadcast %270 : vector<8x1xf32> to vector<8x8xf32>
    %272 = arith.mulf %267, %271 : vector<8x8xf32>
    %cst_94 = arith.constant dense<0.000000e+00> : vector<8x16xf32>
    %273 = tpu.matmul %272, %255, %cst_94 {dimension_numbers = #tpu.dot_dimension_numbers<[1], [0], [0], [1], [0, 0, 1, 1], [], []>} : vector<8x8xf32>, vector<8x16xf32>, vector<8x16xf32> -> vector<8x16xf32>
    %274 = tpu.concatenate %252, %273 in 0 : vector<8x16xf32>, vector<8x16xf32> -> vector<16x16xf32>
    %275 = arith.truncf %274 : vector<16x16xf32> to vector<16x16xbf16>
    %276 = vector.extract_strided_slice %231 {offsets = [0, 0], sizes = [16, 32], strides = [1, 1]} : vector<32x32xbf16> to vector<16x32xbf16>
    %cst_95 = arith.constant dense<0.000000e+00> : vector<16x32xf32>
    %277 = tpu.matmul %275, %276, %cst_95 {dimension_numbers = #tpu.dot_dimension_numbers<[1], [0], [0], [1], [0, 0, 1, 1], [], []>} : vector<16x16xbf16>, vector<16x32xbf16>, vector<16x32xf32> -> vector<16x32xf32>
    %278 = vector.extract_strided_slice %230 {offsets = [0, 16], sizes = [8, 16], strides = [1, 1]} : vector<16x128xf32> to vector<8x16xf32>
    %279 = vector.extract_strided_slice %230 {offsets = [0, 48], sizes = [8, 16], strides = [1, 1]} : vector<16x128xf32> to vector<8x16xf32>
    %280 = vector.extract_strided_slice %230 {offsets = [0, 80], sizes = [8, 16], strides = [1, 1]} : vector<16x128xf32> to vector<8x16xf32>
    %cst_96 = arith.constant dense<0.000000e+00> : vector<8x8xf32>
    %281 = tpu.matmul %278, %279, %cst_96 {dimension_numbers = #tpu.dot_dimension_numbers<[1], [1], [0], [0], [0, 0, 1, 0], [], []>} : vector<8x16xf32>, vector<8x16xf32>, vector<8x8xf32> -> vector<8x8xf32>
    %cst_97 = arith.constant 2.500000e-01 : f32
    %282 = vector.broadcast %cst_97 : f32 to vector<8x8xf32>
    %283 = arith.mulf %281, %282 : vector<8x8xf32>
    %c0_98 = arith.constant 0 : index
    %c0_99 = arith.constant 0 : index
    %c0_100 = arith.constant 0 : index
    %284 = vector.load %arg2[%c0_98, %c0_99, %c0_100] : memref<2x1x8xf32, #tpu.memory_space<vmem>>, vector<1x1x8xf32>
    %285 = vector.shape_cast %284 : vector<1x1x8xf32> to vector<1x8xf32>
    %286 = vector.broadcast %285 : vector<1x8xf32> to vector<8x8xf32>
    %287 = arith.addf %283, %286 : vector<8x8xf32>
    %cst_101 = arith.constant dense<0xFF800000> : vector<8xf32>
    %288 = vector.multi_reduction <maximumf>, %287, %cst_101 [1] : vector<8x8xf32> to vector<8xf32>
    %289 = vector.shape_cast %288 : vector<8xf32> to vector<8x1xf32>
    %290 = vector.broadcast %289 : vector<8x1xf32> to vector<8x8xf32>
    %291 = arith.subf %287, %290 : vector<8x8xf32>
    %292 = math.exp %291 : vector<8x8xf32>
    %cst_102 = arith.constant dense<0.000000e+00> : vector<8xf32>
    %293 = vector.multi_reduction <add>, %292, %cst_102 [1] : vector<8x8xf32> to vector<8xf32>
    %294 = vector.shape_cast %293 : vector<8xf32> to vector<8x1xf32>
    %295 = tpu.reciprocal %294 {approx = true} : vector<8x1xf32> -> vector<8x1xf32>
    %296 = vector.broadcast %295 : vector<8x1xf32> to vector<8x8xf32>
    %297 = arith.mulf %292, %296 : vector<8x8xf32>
    %cst_103 = arith.constant dense<0.000000e+00> : vector<8x16xf32>
    %298 = tpu.matmul %297, %280, %cst_103 {dimension_numbers = #tpu.dot_dimension_numbers<[1], [0], [0], [1], [0, 0, 1, 1], [], []>} : vector<8x8xf32>, vector<8x16xf32>, vector<8x16xf32> -> vector<8x16xf32>
    %299 = vector.extract_strided_slice %230 {offsets = [8, 16], sizes = [8, 16], strides = [1, 1]} : vector<16x128xf32> to vector<8x16xf32>
    %300 = vector.extract_strided_slice %230 {offsets = [8, 48], sizes = [8, 16], strides = [1, 1]} : vector<16x128xf32> to vector<8x16xf32>
    %301 = vector.extract_strided_slice %230 {offsets = [8, 80], sizes = [8, 16], strides = [1, 1]} : vector<16x128xf32> to vector<8x16xf32>
    %cst_104 = arith.constant dense<0.000000e+00> : vector<8x8xf32>
    %302 = tpu.matmul %299, %300, %cst_104 {dimension_numbers = #tpu.dot_dimension_numbers<[1], [1], [0], [0], [0, 0, 1, 0], [], []>} : vector<8x16xf32>, vector<8x16xf32>, vector<8x8xf32> -> vector<8x8xf32>
    %cst_105 = arith.constant 2.500000e-01 : f32
    %303 = vector.broadcast %cst_105 : f32 to vector<8x8xf32>
    %304 = arith.mulf %302, %303 : vector<8x8xf32>
    %c1_106 = arith.constant 1 : index
    %c0_107 = arith.constant 0 : index
    %c0_108 = arith.constant 0 : index
    %305 = vector.load %arg2[%c1_106, %c0_107, %c0_108] : memref<2x1x8xf32, #tpu.memory_space<vmem>>, vector<1x1x8xf32>
    %306 = vector.shape_cast %305 : vector<1x1x8xf32> to vector<1x8xf32>
    %307 = vector.broadcast %306 : vector<1x8xf32> to vector<8x8xf32>
    %308 = arith.addf %304, %307 : vector<8x8xf32>
    %cst_109 = arith.constant dense<0xFF800000> : vector<8xf32>
    %309 = vector.multi_reduction <maximumf>, %308, %cst_109 [1] : vector<8x8xf32> to vector<8xf32>
    %310 = vector.shape_cast %309 : vector<8xf32> to vector<8x1xf32>
    %311 = vector.broadcast %310 : vector<8x1xf32> to vector<8x8xf32>
    %312 = arith.subf %308, %311 : vector<8x8xf32>
    %313 = math.exp %312 : vector<8x8xf32>
    %cst_110 = arith.constant dense<0.000000e+00> : vector<8xf32>
    %314 = vector.multi_reduction <add>, %313, %cst_110 [1] : vector<8x8xf32> to vector<8xf32>
    %315 = vector.shape_cast %314 : vector<8xf32> to vector<8x1xf32>
    %316 = tpu.reciprocal %315 {approx = true} : vector<8x1xf32> -> vector<8x1xf32>
    %317 = vector.broadcast %316 : vector<8x1xf32> to vector<8x8xf32>
    %318 = arith.mulf %313, %317 : vector<8x8xf32>
    %cst_111 = arith.constant dense<0.000000e+00> : vector<8x16xf32>
    %319 = tpu.matmul %318, %301, %cst_111 {dimension_numbers = #tpu.dot_dimension_numbers<[1], [0], [0], [1], [0, 0, 1, 1], [], []>} : vector<8x8xf32>, vector<8x16xf32>, vector<8x16xf32> -> vector<8x16xf32>
    %320 = tpu.concatenate %298, %319 in 0 : vector<8x16xf32>, vector<8x16xf32> -> vector<16x16xf32>
    %321 = arith.truncf %320 : vector<16x16xf32> to vector<16x16xbf16>
    %322 = vector.extract_strided_slice %231 {offsets = [16, 0], sizes = [16, 32], strides = [1, 1]} : vector<32x32xbf16> to vector<16x32xbf16>
    %cst_112 = arith.constant dense<0.000000e+00> : vector<16x32xf32>
    %323 = tpu.matmul %321, %322, %cst_112 {dimension_numbers = #tpu.dot_dimension_numbers<[1], [0], [0], [1], [0, 0, 1, 1], [], []>} : vector<16x16xbf16>, vector<16x32xbf16>, vector<16x32xf32> -> vector<16x32xf32>
    %324 = arith.addf %277, %323 : vector<16x32xf32>
    %c12 = arith.constant 12 : index
    %c0_113 = arith.constant 0 : index
    %325 = vector.load %arg6[%c12, %c0_113] : memref<21x128xf32, #tpu.memory_space<vmem>>, vector<1x32xf32>
    %326 = vector.broadcast %325 : vector<1x32xf32> to vector<16x32xf32>
    %327 = arith.addf %324, %326 : vector<16x32xf32>
    %328 = arith.addf %327, %222 : vector<16x32xf32>
    %c13 = arith.constant 13 : index
    %c0_114 = arith.constant 0 : index
    %329 = vector.load %arg6[%c13, %c0_114] : memref<21x128xf32, #tpu.memory_space<vmem>>, vector<1x32xf32>
    %c14 = arith.constant 14 : index
    %c0_115 = arith.constant 0 : index
    %330 = vector.load %arg6[%c14, %c0_115] : memref<21x128xf32, #tpu.memory_space<vmem>>, vector<1x32xf32>
    %cst_116 = arith.constant dense<0.000000e+00> : vector<16xf32>
    %331 = vector.multi_reduction <add>, %328, %cst_116 [1] : vector<16x32xf32> to vector<16xf32>
    %332 = vector.shape_cast %331 : vector<16xf32> to vector<16x1xf32>
    %cst_117 = arith.constant 3.200000e+01 : f32
    %333 = vector.broadcast %cst_117 : f32 to vector<16x1xf32>
    %334 = arith.divf %332, %333 : vector<16x1xf32>
    %335 = arith.mulf %328, %328 : vector<16x32xf32>
    %cst_118 = arith.constant dense<0.000000e+00> : vector<16xf32>
    %336 = vector.multi_reduction <add>, %335, %cst_118 [1] : vector<16x32xf32> to vector<16xf32>
    %337 = vector.shape_cast %336 : vector<16xf32> to vector<16x1xf32>
    %cst_119 = arith.constant 3.200000e+01 : f32
    %338 = vector.broadcast %cst_119 : f32 to vector<16x1xf32>
    %339 = arith.divf %337, %338 : vector<16x1xf32>
    %340 = arith.mulf %334, %334 : vector<16x1xf32>
    %341 = arith.subf %339, %340 : vector<16x1xf32>
    %cst_120 = arith.constant 9.99999974E-6 : f32
    %342 = vector.broadcast %cst_120 : f32 to vector<16x1xf32>
    %343 = arith.addf %341, %342 : vector<16x1xf32>
    %344 = math.rsqrt %343 : vector<16x1xf32>
    %345 = vector.broadcast %334 : vector<16x1xf32> to vector<16x32xf32>
    %346 = arith.subf %328, %345 : vector<16x32xf32>
    %347 = vector.broadcast %344 : vector<16x1xf32> to vector<16x32xf32>
    %348 = arith.mulf %346, %347 : vector<16x32xf32>
    %349 = vector.broadcast %329 : vector<1x32xf32> to vector<16x32xf32>
    %350 = arith.mulf %348, %349 : vector<16x32xf32>
    %351 = vector.broadcast %330 : vector<1x32xf32> to vector<16x32xf32>
    %352 = arith.addf %350, %351 : vector<16x32xf32>
    %353 = arith.truncf %352 : vector<16x32xf32> to vector<16x32xbf16>
    %354 = vector.extract_strided_slice %224 {offsets = [0, 128], sizes = [32, 128], strides = [1, 1]} : vector<32x512xbf16> to vector<32x128xbf16>
    %cst_121 = arith.constant dense<0.000000e+00> : vector<16x128xf32>
    %355 = tpu.matmul %353, %354, %cst_121 {dimension_numbers = #tpu.dot_dimension_numbers<[1], [0], [0], [1], [0, 0, 1, 1], [], []>} : vector<16x32xbf16>, vector<32x128xbf16>, vector<16x128xf32> -> vector<16x128xf32>
    %c15 = arith.constant 15 : index
    %c0_122 = arith.constant 0 : index
    %356 = vector.load %arg6[%c15, %c0_122] : memref<21x128xf32, #tpu.memory_space<vmem>>, vector<1x128xf32>
    %357 = vector.broadcast %356 : vector<1x128xf32> to vector<16x128xf32>
    %358 = arith.addf %355, %357 : vector<16x128xf32>
    %cst_123 = arith.constant 5.000000e-01 : f32
    %359 = vector.broadcast %cst_123 : f32 to vector<16x128xf32>
    %360 = arith.mulf %359, %358 : vector<16x128xf32>
    %cst_124 = arith.constant 4.471500e-02 : f32
    %361 = vector.broadcast %cst_124 : f32 to vector<16x128xf32>
    %362 = arith.mulf %361, %358 : vector<16x128xf32>
    %363 = arith.mulf %362, %358 : vector<16x128xf32>
    %364 = arith.mulf %363, %358 : vector<16x128xf32>
    %365 = arith.addf %358, %364 : vector<16x128xf32>
    %cst_125 = arith.constant 0.797884583 : f32
    %366 = vector.broadcast %cst_125 : f32 to vector<16x128xf32>
    %367 = arith.mulf %366, %365 : vector<16x128xf32>
    %368 = math.tanh %367 : vector<16x128xf32>
    %cst_126 = arith.constant 1.000000e+00 : f32
    %369 = vector.broadcast %cst_126 : f32 to vector<16x128xf32>
    %370 = arith.addf %369, %368 : vector<16x128xf32>
    %371 = arith.mulf %360, %370 : vector<16x128xf32>
    %372 = arith.truncf %371 : vector<16x128xf32> to vector<16x128xbf16>
    %373 = vector.extract_strided_slice %224 {offsets = [0, 384], sizes = [32, 128], strides = [1, 1]} : vector<32x512xbf16> to vector<32x128xbf16>
    %cst_127 = arith.constant dense<0.000000e+00> : vector<16x32xf32>
    %374 = tpu.matmul %372, %373, %cst_127 {dimension_numbers = #tpu.dot_dimension_numbers<[1], [1], [0], [0], [0, 0, 1, 0], [], []>} : vector<16x128xbf16>, vector<32x128xbf16>, vector<16x32xf32> -> vector<16x32xf32>
    %c16 = arith.constant 16 : index
    %c0_128 = arith.constant 0 : index
    %375 = vector.load %arg6[%c16, %c0_128] : memref<21x128xf32, #tpu.memory_space<vmem>>, vector<1x32xf32>
    %376 = vector.broadcast %375 : vector<1x32xf32> to vector<16x32xf32>
    %377 = arith.addf %374, %376 : vector<16x32xf32>
    %378 = arith.addf %377, %352 : vector<16x32xf32>
    %c17 = arith.constant 17 : index
    %c0_129 = arith.constant 0 : index
    %379 = vector.load %arg6[%c17, %c0_129] : memref<21x128xf32, #tpu.memory_space<vmem>>, vector<1x32xf32>
    %c18 = arith.constant 18 : index
    %c0_130 = arith.constant 0 : index
    %380 = vector.load %arg6[%c18, %c0_130] : memref<21x128xf32, #tpu.memory_space<vmem>>, vector<1x32xf32>
    %cst_131 = arith.constant dense<0.000000e+00> : vector<16xf32>
    %381 = vector.multi_reduction <add>, %378, %cst_131 [1] : vector<16x32xf32> to vector<16xf32>
    %382 = vector.shape_cast %381 : vector<16xf32> to vector<16x1xf32>
    %cst_132 = arith.constant 3.200000e+01 : f32
    %383 = vector.broadcast %cst_132 : f32 to vector<16x1xf32>
    %384 = arith.divf %382, %383 : vector<16x1xf32>
    %385 = arith.mulf %378, %378 : vector<16x32xf32>
    %cst_133 = arith.constant dense<0.000000e+00> : vector<16xf32>
    %386 = vector.multi_reduction <add>, %385, %cst_133 [1] : vector<16x32xf32> to vector<16xf32>
    %387 = vector.shape_cast %386 : vector<16xf32> to vector<16x1xf32>
    %cst_134 = arith.constant 3.200000e+01 : f32
    %388 = vector.broadcast %cst_134 : f32 to vector<16x1xf32>
    %389 = arith.divf %387, %388 : vector<16x1xf32>
    %390 = arith.mulf %384, %384 : vector<16x1xf32>
    %391 = arith.subf %389, %390 : vector<16x1xf32>
    %cst_135 = arith.constant 9.99999974E-6 : f32
    %392 = vector.broadcast %cst_135 : f32 to vector<16x1xf32>
    %393 = arith.addf %391, %392 : vector<16x1xf32>
    %394 = math.rsqrt %393 : vector<16x1xf32>
    %395 = vector.broadcast %384 : vector<16x1xf32> to vector<16x32xf32>
    %396 = arith.subf %378, %395 : vector<16x32xf32>
    %397 = vector.broadcast %394 : vector<16x1xf32> to vector<16x32xf32>
    %398 = arith.mulf %396, %397 : vector<16x32xf32>
    %399 = vector.broadcast %379 : vector<1x32xf32> to vector<16x32xf32>
    %400 = arith.mulf %398, %399 : vector<16x32xf32>
    %401 = vector.broadcast %380 : vector<1x32xf32> to vector<16x32xf32>
    %402 = arith.addf %400, %401 : vector<16x32xf32>
    %403 = vector.extract_strided_slice %402 {offsets = [0, 0], sizes = [1, 32], strides = [1, 1]} : vector<16x32xf32> to vector<1x32xf32>
    %404 = vector.extract_strided_slice %402 {offsets = [8, 0], sizes = [1, 32], strides = [1, 1]} : vector<16x32xf32> to vector<1x32xf32>
    %405 = tpu.concatenate %403, %404 in 0 : vector<1x32xf32>, vector<1x32xf32> -> vector<2x32xf32>
    %406 = arith.truncf %405 : vector<2x32xf32> to vector<2x32xbf16>
    %c0_136 = arith.constant 0 : index
    %c0_137 = arith.constant 0 : index
    %407 = vector.load %arg5[%c0_136, %c0_137] : memref<128x256xbf16, #tpu.memory_space<vmem>>, vector<32x128xbf16>
    %cst_138 = arith.constant dense<0.000000e+00> : vector<2x128xf32>
    %408 = tpu.matmul %406, %407, %cst_138 {dimension_numbers = #tpu.dot_dimension_numbers<[1], [0], [0], [1], [0, 0, 1, 1], [], []>} : vector<2x32xbf16>, vector<32x128xbf16>, vector<2x128xf32> -> vector<2x128xf32>
    %c19 = arith.constant 19 : index
    %c0_139 = arith.constant 0 : index
    %409 = vector.load %arg6[%c19, %c0_139] : memref<21x128xf32, #tpu.memory_space<vmem>>, vector<1x128xf32>
    %410 = vector.broadcast %409 : vector<1x128xf32> to vector<2x128xf32>
    %411 = arith.addf %408, %410 : vector<2x128xf32>
    %412 = math.tanh %411 : vector<2x128xf32>
    %413 = arith.truncf %412 : vector<2x128xf32> to vector<2x128xbf16>
    %c0_140 = arith.constant 0 : index
    %c128 = arith.constant 128 : index
    %414 = vector.load %arg5[%c0_140, %c128] : memref<128x256xbf16, #tpu.memory_space<vmem>>, vector<128x128xbf16>
    %cst_141 = arith.constant dense<0.000000e+00> : vector<2x128xf32>
    %415 = tpu.matmul %413, %414, %cst_141 {dimension_numbers = #tpu.dot_dimension_numbers<[1], [0], [0], [1], [0, 0, 1, 1], [], []>} : vector<2x128xbf16>, vector<128x128xbf16>, vector<2x128xf32> -> vector<2x128xf32>
    %c20 = arith.constant 20 : index
    %c0_142 = arith.constant 0 : index
    %416 = vector.load %arg6[%c20, %c0_142] : memref<21x128xf32, #tpu.memory_space<vmem>>, vector<1x128xf32>
    %417 = vector.broadcast %416 : vector<1x128xf32> to vector<2x128xf32>
    %418 = arith.addf %415, %417 : vector<2x128xf32>
    %c0_143 = arith.constant 0 : index
    %c0_144 = arith.constant 0 : index
    %419 = vector.load %arg7[%c0_143, %c0_144] : memref<2x128xf32, #tpu.memory_space<vmem>>, vector<2x128xf32>
    tpu.vector_store %arg7[%c0_143, %c0_144], %418 {strides = array<i32>} : memref<2x128xf32, #tpu.memory_space<vmem>>, vector<2x128xf32>,
    return
  }
  func.func @transform_0(%arg0: i32) -> (i32, i32) {
    %c0_i32 = arith.constant 0 : i32
    %c0_i32_0 = arith.constant 0 : i32
    return %arg0, %c0_i32 : i32, i32
  }
  func.func @transform_1(%arg0: i32) -> (i32, i32, i32) {
    %c0_i32 = arith.constant 0 : i32
    %c0_i32_0 = arith.constant 0 : i32
    %c0_i32_1 = arith.constant 0 : i32
    return %arg0, %c0_i32, %c0_i32_0 : i32, i32, i32
  }
  func.func @transform_2(%arg0: i32) -> (i32, i32) {
    %c0_i32 = arith.constant 0 : i32
    %c0_i32_0 = arith.constant 0 : i32
    %c0_i32_1 = arith.constant 0 : i32
    return %c0_i32, %c0_i32_0 : i32, i32
  }
  func.func @transform_3(%arg0: i32) -> (i32, i32, i32) {
    %c0_i32 = arith.constant 0 : i32
    %c0_i32_0 = arith.constant 0 : i32
    %c0_i32_1 = arith.constant 0 : i32
    %c0_i32_2 = arith.constant 0 : i32
    return %c0_i32, %c0_i32_0, %c0_i32_1 : i32, i32, i32
  }
  func.func @transform_4(%arg0: i32) -> (i32, i32) {
    %c0_i32 = arith.constant 0 : i32
    %c0_i32_0 = arith.constant 0 : i32
    %c0_i32_1 = arith.constant 0 : i32
    return %c0_i32, %c0_i32_0 : i32, i32
  }
  func.func @transform_5(%arg0: i32) -> (i32, i32) {
    %c0_i32 = arith.constant 0 : i32
    %c0_i32_0 = arith.constant 0 : i32
    %c0_i32_1 = arith.constant 0 : i32
    return %c0_i32, %c0_i32_0 : i32, i32
  }
  func.func @transform_6(%arg0: i32) -> (i32, i32) {
    %c0_i32 = arith.constant 0 : i32
    %c0_i32_0 = arith.constant 0 : i32
    return %arg0, %c0_i32 : i32, i32
  }
}

</mosaic_0001>

<llo_original>
// kernel: phobert_sentiment_forward.1
$region0: #{phobert_sentiment_forward.1}
  #allocation0 [shape = 'u32[]', space=smem, size = 0x4, offset = 0x4, fixed_abs, tag = 'smem constant byte address 0x4 - core index']
  #allocation1 [shape = 'u32[144,128]{1,0:T(1,128)}', space=vmem, size = 0x12000, scoped, tag = 'internal scratch']
  %s0 = inlined_call_operand.vmem [shape: s32[16,2], index: 0, kind: input, shape index: {}]
  %s1 = inlined_call_operand.vmem [shape: f32[2,1,8], index: 1, kind: input, shape index: {}]
  %s2 = inlined_call_operand.vmem [shape: bf16[164,32], index: 2, kind: input, shape index: {}]
  %s3 = inlined_call_operand.vmem [shape: bf16[2,32,512], index: 3, kind: input, shape index: {}]
  %s4 = inlined_call_operand.hbm [shape: bf16[128,256], index: 4, kind: input, shape index: {}]
  %s5 = inlined_call_operand.vmem [shape: f32[21,128], index: 5, kind: input, shape index: {}]
  %s6 = inlined_call_operand.hbm [shape: f32[2,128], index: 6, kind: output, shape index: {}]
  %s7 = sld [smem:[#allocation0]]
  $region38: #{phobert_sentiment_forward.1} parent=0
    _
  %s9 = ssub.s32 1, %s7
  %s10 = scalar_select 0, %s9, %s7
  $region1: #{phobert_sentiment_forward.1} parent=0
    #allocation2 [shape = 'u8[65536]{0}', space=vmem, size = 0x10000, scoped, tag = 'input window, operand 4, single buffered']
    #allocation3 [shape = 's32[1]{0}', space=sflag, size = 0x4, scoped, tag = 'scoped memory for phobert_sentiment_forward.1']
    #allocation4 [shape = 's32[1]{0}', space=sflag, size = 0x4, scoped, tag = 'scoped memory for phobert_sentiment_forward.1']
    #allocation5 [shape = 'u8[1024]{0}', space=vmem, size = 0x400, scoped, tag = 'output window, operand 0, single buffered']
    %11 = vsyncpa [#allocation3], 0
    %12 = vsyncpa [#allocation4], 0
    // Predicated region
    $region2: #{phobert_sentiment_forward.1} parent=1 // pred_check
      _
    $region3: #{phobert_sentiment_forward.1} parent=1 // pred_check_branch
      %14 = sbr.rel (0) target = $region5
    $region4: #{phobert_sentiment_forward.1} parent=1 // pred_region
      _
    $region5: #{phobert_sentiment_forward.1} parent=1 // pred_fallthru
      _
    // Predicated region
    $region6: #{phobert_sentiment_forward.1} parent=1 // pred_check
      _
    $region7: #{phobert_sentiment_forward.1} parent=1 // pred_check_branch
      %16 = sbr.rel (0) target = $region9
    $region8: #{phobert_sentiment_forward.1} parent=1 // pred_region
      _
    $region9: #{phobert_sentiment_forward.1} parent=1 // pred_fallthru
      _
    // Predicated region
    $region10: #{phobert_sentiment_forward.1} parent=1 // pred_check
      _
    $region11: #{phobert_sentiment_forward.1} parent=1 // pred_check_branch
      %18 = sbr.rel (0) target = $region13
    $region12: #{phobert_sentiment_forward.1} parent=1 // pred_region
      _
    $region13: #{phobert_sentiment_forward.1} parent=1 // pred_fallthru
      _
    // Predicated region
    $region14: #{phobert_sentiment_forward.1} parent=1 // pred_check
      _
    $region15: #{phobert_sentiment_forward.1} parent=1 // pred_check_branch
      %20 = sbr.rel (0) target = $region17
    $region16: #{phobert_sentiment_forward.1} parent=1 // pred_region
      _
    $region17: #{phobert_sentiment_forward.1} parent=1 // pred_fallthru
      _
    // Predicated region
    $region18: #{phobert_sentiment_forward.1} parent=1 // pred_check
      _
    $region19: #{phobert_sentiment_forward.1} parent=1 // pred_check_branch
      %22 = sbr.rel (0) target = $region21
    $region20: #{phobert_sentiment_forward.1} parent=1 // pred_region
      %s24 = ssub.s32 2048, 2048
      %25 = vsyncadd [#allocation3], %s24
      %s26 = sshll.u32 [#allocation2], 4
      %s27 = int_to_ptr.vmem [resolvable:$true] %s26
      %32 = dma.hbm_to_vmem [thread:$0]  %s4, 2048, %s27, [#allocation3], 128, 128, 8
    $region21: #{phobert_sentiment_forward.1} parent=1 // pred_fallthru
      _
    // Predicated region
    $region22: #{phobert_sentiment_forward.1} parent=1 // pred_check
      _
    $region23: #{phobert_sentiment_forward.1} parent=1 // pred_check_branch
      %34 = sbr.rel (0) target = $region25
    $region24: #{phobert_sentiment_forward.1} parent=1 // pred_region
      _
    $region25: #{phobert_sentiment_forward.1} parent=1 // pred_fallthru
      _
    // Predicated region
    $region26: #{phobert_sentiment_forward.1} parent=1 // pred_check
      _
    $region27: #{phobert_sentiment_forward.1} parent=1 // pred_check_branch
      %36 = sbr.rel (0) target = $region29
    $region28: #{phobert_sentiment_forward.1} parent=1 // pred_region
      %37 = dma.done [#allocation3], 2048
    $region29: #{phobert_sentiment_forward.1} parent=1 // pred_fallthru
      _
    %v39 = vld [vmem:[%s0] sm:$0xff]
    %v40 = vld [vmem:[%s0 + $0x8] sm:$0xff]
    %v41 = vlaneseq
    %v42 = vand.u32 %v41, 127
    %v43 = vadd.s32 %v42, 128
    %44 = vset.pattern.permute.xlu0 0
    %45 = vperm.xlu0 %44, %v39
    %v46 = vpop.permute.xlu0 %45
    %47 = vset.pattern.permute.xlu0 0
    %48 = vperm.xlu0 %47, %v40
    %v49 = vpop.permute.xlu0 %48
    %vm50 = vcmp.eq.s32.totalorder %v42, %v46
    %vm51 = vcmp.eq.s32.totalorder %v43, %v46
    %vm52 = vcmp.eq.s32.totalorder %v42, %v49
    %vm53 = vcmp.eq.s32.totalorder %v43, %v49
    %v54 = vsel %vm50, 1, 0
    %v55 = vsel %vm51, 1, 0
    %v56 = vsel %vm52, 1, 0
    %v57 = vsel %vm53, 1, 0
    %v58 = vcvt.s32.f32 %v54
    %v59 = vcvt.s32.f32 %v55
    %v60 = vcvt.s32.f32 %v56
    %v61 = vcvt.s32.f32 %v57
    %62 = vset.pattern.permute.xlu0 1
    %63 = vperm.xlu0 %62, %v39
    %v64 = vpop.permute.xlu0 %63
    %65 = vset.pattern.permute.xlu0 1
    %66 = vperm.xlu0 %65, %v40
    %v67 = vpop.permute.xlu0 %66
    %vm68 = vcmp.eq.s32.totalorder %v42, %v64
    %vm69 = vcmp.eq.s32.totalorder %v43, %v64
    %vm70 = vcmp.eq.s32.totalorder %v42, %v67
    %vm71 = vcmp.eq.s32.totalorder %v43, %v67
    %v72 = vsel %vm68, 1, 0
    %v73 = vsel %vm69, 1, 0
    %v74 = vsel %vm70, 1, 0
    %v75 = vsel %vm71, 1, 0
    %v76 = vcvt.s32.f32 %v72
    %v77 = vcvt.s32.f32 %v73
    %v78 = vcvt.s32.f32 %v74
    %v79 = vcvt.s32.f32 %v75
    %v80 = vadd.f32 %v58, %v76
    %v81 = vadd.f32 %v59, %v77
    %v82 = vadd.f32 %v60, %v78
    %v83 = vadd.f32 %v61, %v79
    %v84 = vpack.c.bf16 %v82, %v80
    %v85 = vpack.c.bf16 %v83, %v81
    %v86 = vld [vmem:[%s2] sm:$0xf]
    %v87 = vld [vmem:[%s2 + $0x4] sm:$0xf]
    %v88 = vld [vmem:[%s2 + $0x8] sm:$0xf]
    %v89 = vld [vmem:[%s2 + $0xc] sm:$0xf]
    %v90 = vld [vmem:[%s2 + $0x10] sm:$0xf]
    %v91 = vld [vmem:[%s2 + $0x14] sm:$0xf]
    %v92 = vld [vmem:[%s2 + $0x18] sm:$0xf]
    %v93 = vld [vmem:[%s2 + $0x1c] sm:$0xf]
    %v94 = vld [vmem:[%s2 + $0x20] sm:$0xf]
    %v95 = vld [vmem:[%s2 + $0x24] sm:$0xf]
    %v96 = vld [vmem:[%s2 + $0x28] sm:$0xf]
    %v97 = vld [vmem:[%s2 + $0x2c] sm:$0xf]
    %v98 = vld [vmem:[%s2 + $0x30] sm:$0xf]
    %v99 = vld [vmem:[%s2 + $0x34] sm:$0xf]
    %v100 = vld [vmem:[%s2 + $0x38] sm:$0xf]
    %v101 = vld [vmem:[%s2 + $0x3c] sm:$0xf]
    %v102 = vld [vmem:[%s2 + $0x40] sm:$0xf]
    %v103 = vld [vmem:[%s2 + $0x44] sm:$0xf]
    %v104 = vld [vmem:[%s2 + $0x48] sm:$0xf]
    %v105 = vld [vmem:[%s2 + $0x4c] sm:$0xf]
    %v106 = vld [vmem:[%s2 + $0x50] sm:$0x3]
    %v107 = vld [vmem:[%s5] sm:$0x1]
    %v108 = vlaneseq
    %v109 = vshrl.u32 %v108, 7
    %v110 = vsub.s32 0, %v109
    %v111 = vrot.slane %v107, %v110
    %v133 = vunpack.c.l.b16 %v86
    %v134 = vunpack.c.l.b16 %v87
    %v135 = vunpack.c.l.b16 %v88
    %v136 = vunpack.c.l.b16 %v89
    %v137 = vunpack.c.l.b16 %v90
    %v138 = vunpack.c.l.b16 %v91
    %v139 = vunpack.c.l.b16 %v92
    %v140 = vunpack.c.l.b16 %v93
    %v141 = vunpack.c.l.b16 %v94
    %v142 = vunpack.c.l.b16 %v95
    %v143 = vunpack.c.l.b16 %v96
    %v144 = vunpack.c.l.b16 %v97
    %v145 = vunpack.c.l.b16 %v98
    %v146 = vunpack.c.l.b16 %v99
    %v147 = vunpack.c.l.b16 %v100
    %v148 = vunpack.c.l.b16 %v101
    %v149 = vunpack.c.l.b16 %v102
    %v150 = vunpack.c.l.b16 %v103
    %v151 = vunpack.c.l.b16 %v104
    %v152 = vunpack.c.l.b16 %v105
    %v153 = vunpack.c.l.b16 %v106
    %v154 = vpack.c.b16 %v134, %v133
    %v155 = vpack.c.b16 %v136, %v135
    %v156 = vpack.c.b16 %v138, %v137
    %v157 = vpack.c.b16 %v140, %v139
    %v158 = vpack.c.b16 %v142, %v141
    %v159 = vpack.c.b16 %v144, %v143
    %v160 = vpack.c.b16 %v146, %v145
    %v161 = vpack.c.b16 %v148, %v147
    %v162 = vpack.c.b16 %v150, %v149
    %v163 = vpack.c.b16 %v152, %v151
    %v164 = vpack.c.b16 %v153, %v153
    %vm175 = vcmask 293888
    %v177 = vsel %vm175, %v85, 0
    %vm179 = vcmask 1041408
    %v181 = vsel %vm179, %v164, 0
    %183 = vmatprep.subr.bf16.mxu0 0
    %184 = vmatpush1.bf16.msra.mxu0 %v154
    %185 = vmatprep.subr.bf16.mxu0 0
    %186 = vmatpush1.bf16.msra.mxu0 %v155
    %187 = vmatprep.subr.bf16.mxu0 0
    %188 = vmatpush1.bf16.msra.mxu0 %v156
    %189 = vmatprep.subr.bf16.mxu0 0
    %190 = vmatpush1.bf16.msra.mxu0 %v157
    %191 = vmatprep.subr.bf16.mxu0 0
    %192 = vmatpush1.bf16.msra.mxu0 %v158
    %193 = vmatprep.subr.bf16.mxu0 0
    %194 = vmatpush1.bf16.msra.mxu0 %v159
    %195 = vmatprep.subr.bf16.mxu0 0
    %196 = vmatpush1.bf16.msra.mxu0 %v160
    %197 = vmatprep.subr.bf16.mxu0 0
    %198 = vmatpush1.bf16.msra.mxu0 %v161
    %199 = vmatprep.subr.bf16.mxu0 0
    %200 = vmatpush1.bf16.msra.mxu0 %v162
    %201 = vmatprep.subr.bf16.mxu0 0
    %202 = vmatpush1.bf16.msra.mxu0 %v163
    %203 = vmatprep.subr.bf16.mxu0 0
    %204 = vmatpush1.bf16.msra.mxu0 %v181
    %205 = vmatprep.subr.bf16.mxu0 0
    %206 = vmatpush1.bf16.msra.mxu0 0
    %207 = vmatprep.subr.bf16.mxu0 0
    %208 = vmatpush1.bf16.msra.mxu0 0
    %209 = vmatprep.subr.bf16.mxu0 0
    %210 = vmatpush1.bf16.msra.mxu0 0
    %211 = vmatprep.subr.bf16.mxu0 0
    %212 = vmatpush1.bf16.msra.mxu0 0
    %213 = vmatprep.subr.bf16.mxu0 0
    %214 = vmatpush1.bf16.msra.mxu0 0
    %215 = vmatprep.mubr.bf16.mxu0 %v177
    %216 = vmatmul.mubr.bf16.gmra.mrb[0].mxu0 %v84
    %v217 = vpop.f32.mrb[0].mxu0
    %v218 = vadd.f32 %v111, %v217
    %v219 = vpop.f32.mrb[0].mxu0
    %v220 = vpop.f32.mrb[0].mxu0
    %v221 = vadd.f32 %v111, %v220
    %v222 = vpop.f32.mrb[0].mxu0
    %223 = vdwg.mxu0
    %v224 = vld [vmem:[%s5 + $0x1] sm:$0x1]
    %v225 = vld [vmem:[%s5 + $0x2] sm:$0x1]
    %vm226 = vcmask 261120
    %v227 = vsel %vm226, %v218, 0.0
    %228 = vadd.xlane.f32.xlu0 %v227
    %v229 = vpop.xlane.xlu0 %228
    %v230 = vsel %vm226, %v221, 0.0
    %231 = vadd.xlane.f32.xlu0 %v230
    %v232 = vpop.xlane.xlu0 %231
    %v233 = vrcp.pop 32.0
    %v234 = vmul.f32 %v229, %v233
    %v235 = vmul.f32 %v232, %v233
    %v236 = vmul.f32 %v218, %v218
    %v237 = vmul.f32 %v221, %v221
    %v238 = vsel %vm226, %v236, 0.0
    %239 = vadd.xlane.f32.xlu0 %v238
    %v240 = vpop.xlane.xlu0 %239
    %v241 = vsel %vm226, %v237, 0.0
    %242 = vadd.xlane.f32.xlu0 %v241
    %v243 = vpop.xlane.xlu0 %242
    %v244 = vmul.f32 %v240, %v233
    %v245 = vmul.f32 %v243, %v233
    %v246 = vmul.f32 %v234, %v234
    %v247 = vmul.f32 %v235, %v235
    %v248 = vsub.f32 %v244, %v246
    %v249 = vsub.f32 %v245, %v247
    %v250 = vadd.f32 %v248, 1e-05
    %v251 = vadd.f32 %v249, 1e-05
    %v252 = vrsqrt.pop %v250
    %v253 = vrsqrt.pop %v251
    %v254 = vsub.f32 %v218, %v234
    %v255 = vsub.f32 %v221, %v235
    %v256 = vmul.f32 %v254, %v252
    %v257 = vmul.f32 %v255, %v253
    %v258 = vlaneseq
    %v259 = vshrl.u32 %v258, 7
    %v260 = vsub.s32 0, %v259
    %v261 = vrot.slane %v224, %v260
    %v262 = vmul.f32 %v256, %v261
    %v263 = vmul.f32 %v257, %v261
    %v264 = vlaneseq
    %v265 = vshrl.u32 %v264, 7
    %v266 = vsub.s32 0, %v265
    %v267 = vrot.slane %v225, %v266
    %v268 = vadd.f32 %v262, %v267
    %v269 = vadd.f32 %v263, %v267
    %v270 = vld [vmem:[%s3] sm:$0xff]
    %v271 = vld [vmem:[%s3 + $0x8] sm:$0xff]
    %v272 = vld [vmem:[%s3 + $0x10] sm:$0xff]
    %v273 = vld [vmem:[%s3 + $0x18] sm:$0xff]
    %v274 = vld [vmem:[%s3 + $0x20] sm:$0xff]
    %v275 = vld [vmem:[%s3 + $0x28] sm:$0xff]
    %v276 = vld [vmem:[%s3 + $0x30] sm:$0xff]
    %v277 = vld [vmem:[%s3 + $0x38] sm:$0xff]
    %v278 = vpack.c.bf16 %v269, %v268
    %v279 = vld [vmem:[%s5 + $0x3] sm:$0x1]
    %v280 = vlaneseq
    %v281 = vshrl.u32 %v280, 7
    %v282 = vsub.s32 0, %v281
    %v283 = vrot.slane %v279, %v282
    %v288 = vunpack.c.l.b16 %v270
    %v289 = vunpack.c.l.b16 %v272
    %v290 = vunpack.c.l.b16 %v274
    %v291 = vunpack.c.l.b16 %v276
    %v292 = vpack.c.b16 %v289, %v288
    %v293 = vpack.c.b16 %v291, %v290
    %v297 = vsel %vm226, %v278, 0
    %299 = vmatprep.subr.bf16.mxu0 0
    %300 = vmatpush1.bf16.msra.mxu0 %v292
    %301 = vmatprep.subr.bf16.mxu0 0
    %302 = vmatpush1.bf16.msra.mxu0 %v293
    %303 = vmatprep.subr.bf16.mxu0 0
    %304 = vmatpush1.bf16.msra.mxu0 0
    %305 = vmatprep.subr.bf16.mxu0 0
    %306 = vmatpush1.bf16.msra.mxu0 0
    %307 = vmatprep.subr.bf16.mxu0 0
    %308 = vmatpush1.bf16.msra.mxu0 0
    %309 = vmatprep.subr.bf16.mxu0 0
    %310 = vmatpush1.bf16.msra.mxu0 0
    %311 = vmatprep.subr.bf16.mxu0 0
    %312 = vmatpush1.bf16.msra.mxu0 0
    %313 = vmatprep.subr.bf16.mxu0 0
    %314 = vmatpush1.bf16.msra.mxu0 0
    %315 = vmatprep.subr.bf16.mxu0 0
    %316 = vmatpush1.bf16.msra.mxu0 0
    %317 = vmatprep.subr.bf16.mxu0 0
    %318 = vmatpush1.bf16.msra.mxu0 0
    %319 = vmatprep.subr.bf16.mxu0 0
    %320 = vmatpush1.bf16.msra.mxu0 0
    %321 = vmatprep.subr.bf16.mxu0 0
    %322 = vmatpush1.bf16.msra.mxu0 0
    %323 = vmatprep.subr.bf16.mxu0 0
    %324 = vmatpush1.bf16.msra.mxu0 0
    %325 = vmatprep.subr.bf16.mxu0 0
    %326 = vmatpush1.bf16.msra.mxu0 0
    %327 = vmatprep.subr.bf16.mxu0 0
    %328 = vmatpush1.bf16.msra.mxu0 0
    %329 = vmatprep.subr.bf16.mxu0 0
    %330 = vmatpush1.bf16.msra.mxu0 0
    %331 = vmatprep.mubr.bf16.mxu0 0
    %332 = vmatmul.mubr.bf16.gmra.mrb[0].mxu0 %v297
    %v333 = vpop.f32.mrb[0].mxu0
    %v334 = vadd.f32 %v283, %v333
    %v335 = vpop.f32.mrb[0].mxu0
    %v336 = vpop.f32.mrb[0].mxu0
    %v337 = vadd.f32 %v283, %v336
    %v338 = vpop.f32.mrb[0].mxu0
    %339 = vdwg.mxu0
    %341 = vrot.lane.b32.xlu0 %v334, 96
    %v342 = vpop.permute.xlu0 %341
    %vm343 = vcmask 130048
    %v344 = vsel %vm343, %v334, 0
    %v346 = vsel %vm343, %v342, 0
    %348 = vmatprep.subr.mxu0 0.0
    %349 = vmatpush1.xpose.msra.mxu0 %v346
    %350 = vmatprep.subr.mxu0 0.0
    %351 = vmatpush1.xpose.msra.mxu0 0.0
    %352 = vmatprep.subr.mxu0 0.0
    %353 = vmatpush1.xpose.msra.mxu0 0.0
    %354 = vmatprep.subr.mxu0 0.0
    %355 = vmatpush1.xpose.msra.mxu0 0.0
    %356 = vmatprep.subr.mxu0 0.0
    %357 = vmatpush1.xpose.msra.mxu0 0.0
    %358 = vmatprep.subr.mxu0 0.0
    %359 = vmatpush1.xpose.msra.mxu0 0.0
    %360 = vmatprep.subr.mxu0 0.0
    %361 = vmatpush1.xpose.msra.mxu0 0.0
    %362 = vmatprep.subr.mxu0 0.0
    %363 = vmatpush1.xpose.msra.mxu0 0.0
    %364 = vmatprep.subr.mxu0 0.0
    %365 = vmatpush1.xpose.msra.mxu0 0.0
    %366 = vmatprep.subr.mxu0 0.0
    %367 = vmatpush1.xpose.msra.mxu0 0.0
    %368 = vmatprep.subr.mxu0 0.0
    %369 = vmatpush1.xpose.msra.mxu0 0.0
    %370 = vmatprep.subr.mxu0 0.0
    %371 = vmatpush1.xpose.msra.mxu0 0.0
    %372 = vmatprep.subr.mxu0 0.0
    %373 = vmatpush1.xpose.msra.mxu0 0.0
    %374 = vmatprep.subr.mxu0 0.0
    %375 = vmatpush1.xpose.msra.mxu0 0.0
    %376 = vmatprep.subr.mxu0 0.0
    %377 = vmatpush1.xpose.msra.mxu0 0.0
    %378 = vmatprep.subr.mxu0 0.0
    %379 = vmatpush1.xpose.msra.mxu0 0.0
    %380 = vmatprep.subr.mxu0 0.0
    %381 = vmatpush1.xpose.msra.mxu0 0.0
    %382 = vmatprep.subr.mxu0 0.0
    %383 = vmatpush1.xpose.msra.mxu0 0.0
    %384 = vmatprep.subr.mxu0 0.0
    %385 = vmatpush1.xpose.msra.mxu0 0.0
    %386 = vmatprep.subr.mxu0 0.0
    %387 = vmatpush1.xpose.msra.mxu0 0.0
    %388 = vmatprep.subr.mxu0 0.0
    %389 = vmatpush1.xpose.msra.mxu0 0.0
    %390 = vmatprep.subr.mxu0 0.0
    %391 = vmatpush1.xpose.msra.mxu0 0.0
    %392 = vmatprep.subr.mxu0 0.0
    %393 = vmatpush1.xpose.msra.mxu0 0.0
    %394 = vmatprep.subr.mxu0 0.0
    %395 = vmatpush1.xpose.msra.mxu0 0.0
    %396 = vmatprep.subr.mxu0 0.0
    %397 = vmatpush1.xpose.msra.mxu0 0.0
    %398 = vmatprep.subr.mxu0 0.0
    %399 = vmatpush1.xpose.msra.mxu0 0.0
    %400 = vmatprep.subr.mxu0 0.0
    %401 = vmatpush1.xpose.msra.mxu0 0.0
    %402 = vmatprep.subr.mxu0 0.0
    %403 = vmatpush1.xpose.msra.mxu0 0.0
    %404 = vmatprep.subr.mxu0 0.0
    %405 = vmatpush1.xpose.msra.mxu0 0.0
    %406 = vmatprep.subr.mxu0 0.0
    %407 = vmatpush1.xpose.msra.mxu0 0.0
    %408 = vmatprep.subr.mxu0 0.0
    %409 = vmatpush1.xpose.msra.mxu0 0.0
    %410 = vmatprep.subr.mxu0 0.0
    %411 = vmatpush1.xpose.msra.mxu0 0.0
    %412 = vmatprep.mubr.f32.mxu0 0.0
    %413 = vmatmul.mubr.f32.gmra.mrb[0].mxu0 %v344
    %v414 = vpop.f32.mrb[0].mxu0
    %v415 = vadd.f32 0.0, %v414
    %v416 = vpop.f32.mrb[0].mxu0
    %417 = vdwg.mxu0
    %v418 = vmul.f32 %v415, 0.25
    %v419 = vld [vmem:[%s1] sm:$0x1]
    %v421 = vlaneseq
    %v422 = vshrl.u32 %v421, 7
    %v423 = vsub.s32 0, %v422
    %v424 = vrot.slane %v419, %v423
    %v426 = vadd.f32 %v418, %v424
    %vm427 = vcmask 64512
    %v428 = vsel %vm427, %v426, -inf
    %429 = vmax.xlane.f32.xlu0 %v428
    %v430 = vpop.xlane.xlu0 %429
    %v431 = vsub.f32 %v426, %v430
    %v432 = vmul.f32 %v431, 1.442695
    %v433 = vpow.pop %v432
    %v434 = vsel %vm427, %v433, 0.0
    %435 = vadd.xlane.f32.xlu0 %v434
    %v436 = vpop.xlane.xlu0 %435
    %v437 = vrcp.pop %v436
    %v438 = vmul.f32 %v433, %v437
    %439 = vrot.lane.b32.xlu0 %v334, 64
    %v440 = vpop.permute.xlu0 %439
    %v443 = vsel %vm427, %v438, 0
    %445 = vmatprep.subr.mxu0 0.0
    %446 = vmatpush1.msra.mxu0 %v440
    %447 = vmatprep.subr.mxu0 0.0
    %448 = vmatpush1.msra.mxu0 0.0
    %449 = vmatprep.subr.mxu0 0.0
    %450 = vmatpush1.msra.mxu0 0.0
    %451 = vmatprep.subr.mxu0 0.0
    %452 = vmatpush1.msra.mxu0 0.0
    %453 = vmatprep.subr.mxu0 0.0
    %454 = vmatpush1.msra.mxu0 0.0
    %455 = vmatprep.subr.mxu0 0.0
    %456 = vmatpush1.msra.mxu0 0.0
    %457 = vmatprep.subr.mxu0 0.0
    %458 = vmatpush1.msra.mxu0 0.0
    %459 = vmatprep.subr.mxu0 0.0
    %460 = vmatpush1.msra.mxu0 0.0
    %461 = vmatprep.subr.mxu0 0.0
    %462 = vmatpush1.msra.mxu0 0.0
    %463 = vmatprep.subr.mxu0 0.0
    %464 = vmatpush1.msra.mxu0 0.0
    %465 = vmatprep.subr.mxu0 0.0
    %466 = vmatpush1.msra.mxu0 0.0
    %467 = vmatprep.subr.mxu0 0.0
    %468 = vmatpush1.msra.mxu0 0.0
    %469 = vmatprep.subr.mxu0 0.0
    %470 = vmatpush1.msra.mxu0 0.0
    %471 = vmatprep.subr.mxu0 0.0
    %472 = vmatpush1.msra.mxu0 0.0
    %473 = vmatprep.subr.mxu0 0.0
    %474 = vmatpush1.msra.mxu0 0.0
    %475 = vmatprep.subr.mxu0 0.0
    %476 = vmatpush1.msra.mxu0 0.0
    %477 = vmatprep.subr.mxu0 0.0
    %478 = vmatpush1.msra.mxu0 0.0
    %479 = vmatprep.subr.mxu0 0.0
    %480 = vmatpush1.msra.mxu0 0.0
    %481 = vmatprep.subr.mxu0 0.0
    %482 = vmatpush1.msra.mxu0 0.0
    %483 = vmatprep.subr.mxu0 0.0
    %484 = vmatpush1.msra.mxu0 0.0
    %485 = vmatprep.subr.mxu0 0.0
    %486 = vmatpush1.msra.mxu0 0.0
    %487 = vmatprep.subr.mxu0 0.0
    %488 = vmatpush1.msra.mxu0 0.0
    %489 = vmatprep.subr.mxu0 0.0
    %490 = vmatpush1.msra.mxu0 0.0
    %491 = vmatprep.subr.mxu0 0.0
    %492 = vmatpush1.msra.mxu0 0.0
    %493 = vmatprep.subr.mxu0 0.0
    %494 = vmatpush1.msra.mxu0 0.0
    %495 = vmatprep.subr.mxu0 0.0
    %496 = vmatpush1.msra.mxu0 0.0
    %497 = vmatprep.subr.mxu0 0.0
    %498 = vmatpush1.msra.mxu0 0.0
    %499 = vmatprep.subr.mxu0 0.0
    %500 = vmatpush1.msra.mxu0 0.0
    %501 = vmatprep.subr.mxu0 0.0
    %502 = vmatpush1.msra.mxu0 0.0
    %503 = vmatprep.subr.mxu0 0.0
    %504 = vmatpush1.msra.mxu0 0.0
    %505 = vmatprep.subr.mxu0 0.0
    %506 = vmatpush1.msra.mxu0 0.0
    %507 = vmatprep.subr.mxu0 0.0
    %508 = vmatpush1.msra.mxu0 0.0
    %509 = vmatprep.mubr.f32.mxu0 0.0
    %510 = vmatmul.mubr.f32.gmra.mrb[0].mxu0 %v443
    %v511 = vpop.f32.mrb[0].mxu0
    %v512 = vadd.f32 0.0, %v511
    %v513 = vpop.f32.mrb[0].mxu0
    %514 = vdwg.mxu0
    %516 = vrot.lane.b32.xlu0 %v337, 96
    %v517 = vpop.permute.xlu0 %516
    %v518 = vsel %vm343, %v337, 0
    %v520 = vsel %vm343, %v517, 0
    %522 = vmatprep.subr.mxu0 0.0
    %523 = vmatpush1.xpose.msra.mxu0 %v520
    %524 = vmatprep.subr.mxu0 0.0
    %525 = vmatpush1.xpose.msra.mxu0 0.0
    %526 = vmatprep.subr.mxu0 0.0
    %527 = vmatpush1.xpose.msra.mxu0 0.0
    %528 = vmatprep.subr.mxu0 0.0
    %529 = vmatpush1.xpose.msra.mxu0 0.0
    %530 = vmatprep.subr.mxu0 0.0
    %531 = vmatpush1.xpose.msra.mxu0 0.0
    %532 = vmatprep.subr.mxu0 0.0
    %533 = vmatpush1.xpose.msra.mxu0 0.0
    %534 = vmatprep.subr.mxu0 0.0
    %535 = vmatpush1.xpose.msra.mxu0 0.0
    %536 = vmatprep.subr.mxu0 0.0
    %537 = vmatpush1.xpose.msra.mxu0 0.0
    %538 = vmatprep.subr.mxu0 0.0
    %539 = vmatpush1.xpose.msra.mxu0 0.0
    %540 = vmatprep.subr.mxu0 0.0
    %541 = vmatpush1.xpose.msra.mxu0 0.0
    %542 = vmatprep.subr.mxu0 0.0
    %543 = vmatpush1.xpose.msra.mxu0 0.0
    %544 = vmatprep.subr.mxu0 0.0
    %545 = vmatpush1.xpose.msra.mxu0 0.0
    %546 = vmatprep.subr.mxu0 0.0
    %547 = vmatpush1.xpose.msra.mxu0 0.0
    %548 = vmatprep.subr.mxu0 0.0
    %549 = vmatpush1.xpose.msra.mxu0 0.0
    %550 = vmatprep.subr.mxu0 0.0
    %551 = vmatpush1.xpose.msra.mxu0 0.0
    %552 = vmatprep.subr.mxu0 0.0
    %553 = vmatpush1.xpose.msra.mxu0 0.0
    %554 = vmatprep.subr.mxu0 0.0
    %555 = vmatpush1.xpose.msra.mxu0 0.0
    %556 = vmatprep.subr.mxu0 0.0
    %557 = vmatpush1.xpose.msra.mxu0 0.0
    %558 = vmatprep.subr.mxu0 0.0
    %559 = vmatpush1.xpose.msra.mxu0 0.0
    %560 = vmatprep.subr.mxu0 0.0
    %561 = vmatpush1.xpose.msra.mxu0 0.0
    %562 = vmatprep.subr.mxu0 0.0
    %563 = vmatpush1.xpose.msra.mxu0 0.0
    %564 = vmatprep.subr.mxu0 0.0
    %565 = vmatpush1.xpose.msra.mxu0 0.0
    %566 = vmatprep.subr.mxu0 0.0
    %567 = vmatpush1.xpose.msra.mxu0 0.0
    %568 = vmatprep.subr.mxu0 0.0
    %569 = vmatpush1.xpose.msra.mxu0 0.0
    %570 = vmatprep.subr.mxu0 0.0
    %571 = vmatpush1.xpose.msra.mxu0 0.0
    %572 = vmatprep.subr.mxu0 0.0
    %573 = vmatpush1.xpose.msra.mxu0 0.0
    %574 = vmatprep.subr.mxu0 0.0
    %575 = vmatpush1.xpose.msra.mxu0 0.0
    %576 = vmatprep.subr.mxu0 0.0
    %577 = vmatpush1.xpose.msra.mxu0 0.0
    %578 = vmatprep.subr.mxu0 0.0
    %579 = vmatpush1.xpose.msra.mxu0 0.0
    %580 = vmatprep.subr.mxu0 0.0
    %581 = vmatpush1.xpose.msra.mxu0 0.0
    %582 = vmatprep.subr.mxu0 0.0
    %583 = vmatpush1.xpose.msra.mxu0 0.0
    %584 = vmatprep.subr.mxu0 0.0
    %585 = vmatpush1.xpose.msra.mxu0 0.0
    %586 = vmatprep.mubr.f32.mxu0 0.0
    %587 = vmatmul.mubr.f32.gmra.mrb[0].mxu0 %v518
    %v588 = vpop.f32.mrb[0].mxu0
    %v589 = vadd.f32 0.0, %v588
    %v590 = vpop.f32.mrb[0].mxu0
    %591 = vdwg.mxu0
    %v592 = vmul.f32 %v589, 0.25
    %s593 = scalar_lea.vmem %s1, 1
    %v594 = vld [vmem:[%s593] sm:$0x1]
    %v596 = vlaneseq
    %v597 = vshrl.u32 %v596, 7
    %v598 = vsub.s32 0, %v597
    %v599 = vrot.slane %v594, %v598
    %v601 = vadd.f32 %v592, %v599
    %v602 = vsel %vm427, %v601, -inf
    %603 = vmax.xlane.f32.xlu0 %v602
    %v604 = vpop.xlane.xlu0 %603
    %v605 = vsub.f32 %v601, %v604
    %v606 = vmul.f32 %v605, 1.442695
    %v607 = vpow.pop %v606
    %v608 = vsel %vm427, %v607, 0.0
    %609 = vadd.xlane.f32.xlu0 %v608
    %v610 = vpop.xlane.xlu0 %609
    %v611 = vrcp.pop %v610
    %v612 = vmul.f32 %v607, %v611
    %613 = vrot.lane.b32.xlu0 %v337, 64
    %v614 = vpop.permute.xlu0 %613
    %v617 = vsel %vm427, %v612, 0
    %619 = vmatprep.subr.mxu0 0.0
    %620 = vmatpush1.msra.mxu0 %v614
    %621 = vmatprep.subr.mxu0 0.0
    %622 = vmatpush1.msra.mxu0 0.0
    %623 = vmatprep.subr.mxu0 0.0
    %624 = vmatpush1.msra.mxu0 0.0
    %625 = vmatprep.subr.mxu0 0.0
    %626 = vmatpush1.msra.mxu0 0.0
    %627 = vmatprep.subr.mxu0 0.0
    %628 = vmatpush1.msra.mxu0 0.0
    %629 = vmatprep.subr.mxu0 0.0
    %630 = vmatpush1.msra.mxu0 0.0
    %631 = vmatprep.subr.mxu0 0.0
    %632 = vmatpush1.msra.mxu0 0.0
    %633 = vmatprep.subr.mxu0 0.0
    %634 = vmatpush1.msra.mxu0 0.0
    %635 = vmatprep.subr.mxu0 0.0
    %636 = vmatpush1.msra.mxu0 0.0
    %637 = vmatprep.subr.mxu0 0.0
    %638 = vmatpush1.msra.mxu0 0.0
    %639 = vmatprep.subr.mxu0 0.0
    %640 = vmatpush1.msra.mxu0 0.0
    %641 = vmatprep.subr.mxu0 0.0
    %642 = vmatpush1.msra.mxu0 0.0
    %643 = vmatprep.subr.mxu0 0.0
    %644 = vmatpush1.msra.mxu0 0.0
    %645 = vmatprep.subr.mxu0 0.0
    %646 = vmatpush1.msra.mxu0 0.0
    %647 = vmatprep.subr.mxu0 0.0
    %648 = vmatpush1.msra.mxu0 0.0
    %649 = vmatprep.subr.mxu0 0.0
    %650 = vmatpush1.msra.mxu0 0.0
    %651 = vmatprep.subr.mxu0 0.0
    %652 = vmatpush1.msra.mxu0 0.0
    %653 = vmatprep.subr.mxu0 0.0
    %654 = vmatpush1.msra.mxu0 0.0
    %655 = vmatprep.subr.mxu0 0.0
    %656 = vmatpush1.msra.mxu0 0.0
    %657 = vmatprep.subr.mxu0 0.0
    %658 = vmatpush1.msra.mxu0 0.0
    %659 = vmatprep.subr.mxu0 0.0
    %660 = vmatpush1.msra.mxu0 0.0
    %661 = vmatprep.subr.mxu0 0.0
    %662 = vmatpush1.msra.mxu0 0.0
    %663 = vmatprep.subr.mxu0 0.0
    %664 = vmatpush1.msra.mxu0 0.0
    %665 = vmatprep.subr.mxu0 0.0
    %666 = vmatpush1.msra.mxu0 0.0
    %667 = vmatprep.subr.mxu0 0.0
    %668 = vmatpush1.msra.mxu0 0.0
    %669 = vmatprep.subr.mxu0 0.0
    %670 = vmatpush1.msra.mxu0 0.0
    %671 = vmatprep.subr.mxu0 0.0
    %672 = vmatpush1.msra.mxu0 0.0
    %673 = vmatprep.subr.mxu0 0.0
    %674 = vmatpush1.msra.mxu0 0.0
    %675 = vmatprep.subr.mxu0 0.0
    %676 = vmatpush1.msra.mxu0 0.0
    %677 = vmatprep.subr.mxu0 0.0
    %678 = vmatpush1.msra.mxu0 0.0
    %679 = vmatprep.subr.mxu0 0.0
    %680 = vmatpush1.msra.mxu0 0.0
    %681 = vmatprep.subr.mxu0 0.0
    %682 = vmatpush1.msra.mxu0 0.0
    %683 = vmatprep.mubr.f32.mxu0 0.0
    %684 = vmatmul.mubr.f32.gmra.mrb[0].mxu0 %v617
    %v685 = vpop.f32.mrb[0].mxu0
    %v686 = vadd.f32 0.0, %v685
    %v687 = vpop.f32.mrb[0].mxu0
    %688 = vdwg.mxu0
    %v689 = vpack.c.bf16 %v686, %v512
    %690 = vrot.lane.b32.xlu0 %v334, 112
    %v691 = vpop.permute.xlu0 %690
    %692 = vrot.lane.b32.xlu0 %v334, 80
    %v693 = vpop.permute.xlu0 %692
    %v694 = vsel %vm343, %v691, 0
    %v696 = vsel %vm343, %v693, 0
    %698 = vmatprep.subr.mxu0 0.0
    %699 = vmatpush1.xpose.msra.mxu0 %v696
    %700 = vmatprep.subr.mxu0 0.0
    %701 = vmatpush1.xpose.msra.mxu0 0.0
    %702 = vmatprep.subr.mxu0 0.0
    %703 = vmatpush1.xpose.msra.mxu0 0.0
    %704 = vmatprep.subr.mxu0 0.0
    %705 = vmatpush1.xpose.msra.mxu0 0.0
    %706 = vmatprep.subr.mxu0 0.0
    %707 = vmatpush1.xpose.msra.mxu0 0.0
    %708 = vmatprep.subr.mxu0 0.0
    %709 = vmatpush1.xpose.msra.mxu0 0.0
    %710 = vmatprep.subr.mxu0 0.0
    %711 = vmatpush1.xpose.msra.mxu0 0.0
    %712 = vmatprep.subr.mxu0 0.0
    %713 = vmatpush1.xpose.msra.mxu0 0.0
    %714 = vmatprep.subr.mxu0 0.0
    %715 = vmatpush1.xpose.msra.mxu0 0.0
    %716 = vmatprep.subr.mxu0 0.0
    %717 = vmatpush1.xpose.msra.mxu0 0.0
    %718 = vmatprep.subr.mxu0 0.0
    %719 = vmatpush1.xpose.msra.mxu0 0.0
    %720 = vmatprep.subr.mxu0 0.0
    %721 = vmatpush1.xpose.msra.mxu0 0.0
    %722 = vmatprep.subr.mxu0 0.0
    %723 = vmatpush1.xpose.msra.mxu0 0.0
    %724 = vmatprep.subr.mxu0 0.0
    %725 = vmatpush1.xpose.msra.mxu0 0.0
    %726 = vmatprep.subr.mxu0 0.0
    %727 = vmatpush1.xpose.msra.mxu0 0.0
    %728 = vmatprep.subr.mxu0 0.0
    %729 = vmatpush1.xpose.msra.mxu0 0.0
    %730 = vmatprep.subr.mxu0 0.0
    %731 = vmatpush1.xpose.msra.mxu0 0.0
    %732 = vmatprep.subr.mxu0 0.0
    %733 = vmatpush1.xpose.msra.mxu0 0.0
    %734 = vmatprep.subr.mxu0 0.0
    %735 = vmatpush1.xpose.msra.mxu0 0.0
    %736 = vmatprep.subr.mxu0 0.0
    %737 = vmatpush1.xpose.msra.mxu0 0.0
    %738 = vmatprep.subr.mxu0 0.0
    %739 = vmatpush1.xpose.msra.mxu0 0.0
    %740 = vmatprep.subr.mxu0 0.0
    %741 = vmatpush1.xpose.msra.mxu0 0.0
    %742 = vmatprep.subr.mxu0 0.0
    %743 = vmatpush1.xpose.msra.mxu0 0.0
    %744 = vmatprep.subr.mxu0 0.0
    %745 = vmatpush1.xpose.msra.mxu0 0.0
    %746 = vmatprep.subr.mxu0 0.0
    %747 = vmatpush1.xpose.msra.mxu0 0.0
    %748 = vmatprep.subr.mxu0 0.0
    %749 = vmatpush1.xpose.msra.mxu0 0.0
    %750 = vmatprep.subr.mxu0 0.0
    %751 = vmatpush1.xpose.msra.mxu0 0.0
    %752 = vmatprep.subr.mxu0 0.0
    %753 = vmatpush1.xpose.msra.mxu0 0.0
    %754 = vmatprep.subr.mxu0 0.0
    %755 = vmatpush1.xpose.msra.mxu0 0.0
    %756 = vmatprep.subr.mxu0 0.0
    %757 = vmatpush1.xpose.msra.mxu0 0.0
    %758 = vmatprep.subr.mxu0 0.0
    %759 = vmatpush1.xpose.msra.mxu0 0.0
    %760 = vmatprep.subr.mxu0 0.0
    %761 = vmatpush1.xpose.msra.mxu0 0.0
    %762 = vmatprep.mubr.f32.mxu0 0.0
    %763 = vmatmul.mubr.f32.gmra.mrb[0].mxu0 %v694
    %v764 = vpop.f32.mrb[0].mxu0
    %v765 = vadd.f32 0.0, %v764
    %v766 = vpop.f32.mrb[0].mxu0
    %767 = vdwg.mxu0
    %v768 = vmul.f32 %v765, 0.25
    %v769 = vadd.f32 %v768, %v424
    %v770 = vsel %vm427, %v769, -inf
    %771 = vmax.xlane.f32.xlu0 %v770
    %v772 = vpop.xlane.xlu0 %771
    %v773 = vsub.f32 %v769, %v772
    %v774 = vmul.f32 %v773, 1.442695
    %v775 = vpow.pop %v774
    %v776 = vsel %vm427, %v775, 0.0
    %777 = vadd.xlane.f32.xlu0 %v776
    %v778 = vpop.xlane.xlu0 %777
    %v779 = vrcp.pop %v778
    %v780 = vmul.f32 %v775, %v779
    %781 = vrot.lane.b32.xlu0 %v334, 48
    %v782 = vpop.permute.xlu0 %781
    %v785 = vsel %vm427, %v780, 0
    %787 = vmatprep.subr.mxu0 0.0
    %788 = vmatpush1.msra.mxu0 %v782
    %789 = vmatprep.subr.mxu0 0.0
    %790 = vmatpush1.msra.mxu0 0.0
    %791 = vmatprep.subr.mxu0 0.0
    %792 = vmatpush1.msra.mxu0 0.0
    %793 = vmatprep.subr.mxu0 0.0
    %794 = vmatpush1.msra.mxu0 0.0
    %795 = vmatprep.subr.mxu0 0.0
    %796 = vmatpush1.msra.mxu0 0.0
    %797 = vmatprep.subr.mxu0 0.0
    %798 = vmatpush1.msra.mxu0 0.0
    %799 = vmatprep.subr.mxu0 0.0
    %800 = vmatpush1.msra.mxu0 0.0
    %801 = vmatprep.subr.mxu0 0.0
    %802 = vmatpush1.msra.mxu0 0.0
    %803 = vmatprep.subr.mxu0 0.0
    %804 = vmatpush1.msra.mxu0 0.0
    %805 = vmatprep.subr.mxu0 0.0
    %806 = vmatpush1.msra.mxu0 0.0
    %807 = vmatprep.subr.mxu0 0.0
    %808 = vmatpush1.msra.mxu0 0.0
    %809 = vmatprep.subr.mxu0 0.0
    %810 = vmatpush1.msra.mxu0 0.0
    %811 = vmatprep.subr.mxu0 0.0
    %812 = vmatpush1.msra.mxu0 0.0
    %813 = vmatprep.subr.mxu0 0.0
    %814 = vmatpush1.msra.mxu0 0.0
    %815 = vmatprep.subr.mxu0 0.0
    %816 = vmatpush1.msra.mxu0 0.0
    %817 = vmatprep.subr.mxu0 0.0
    %818 = vmatpush1.msra.mxu0 0.0
    %819 = vmatprep.subr.mxu0 0.0
    %820 = vmatpush1.msra.mxu0 0.0
    %821 = vmatprep.subr.mxu0 0.0
    %822 = vmatpush1.msra.mxu0 0.0
    %823 = vmatprep.subr.mxu0 0.0
    %824 = vmatpush1.msra.mxu0 0.0
    %825 = vmatprep.subr.mxu0 0.0
    %826 = vmatpush1.msra.mxu0 0.0
    %827 = vmatprep.subr.mxu0 0.0
    %828 = vmatpush1.msra.mxu0 0.0
    %829 = vmatprep.subr.mxu0 0.0
    %830 = vmatpush1.msra.mxu0 0.0
    %831 = vmatprep.subr.mxu0 0.0
    %832 = vmatpush1.msra.mxu0 0.0
    %833 = vmatprep.subr.mxu0 0.0
    %834 = vmatpush1.msra.mxu0 0.0
    %835 = vmatprep.subr.mxu0 0.0
    %836 = vmatpush1.msra.mxu0 0.0
    %837 = vmatprep.subr.mxu0 0.0
    %838 = vmatpush1.msra.mxu0 0.0
    %839 = vmatprep.subr.mxu0 0.0
    %840 = vmatpush1.msra.mxu0 0.0
    %841 = vmatprep.subr.mxu0 0.0
    %842 = vmatpush1.msra.mxu0 0.0
    %843 = vmatprep.subr.mxu0 0.0
    %844 = vmatpush1.msra.mxu0 0.0
    %845 = vmatprep.subr.mxu0 0.0
    %846 = vmatpush1.msra.mxu0 0.0
    %847 = vmatprep.subr.mxu0 0.0
    %848 = vmatpush1.msra.mxu0 0.0
    %849 = vmatprep.subr.mxu0 0.0
    %850 = vmatpush1.msra.mxu0 0.0
    %851 = vmatprep.mubr.f32.mxu0 0.0
    %852 = vmatmul.mubr.f32.gmra.mrb[0].mxu0 %v785
    %v853 = vpop.f32.mrb[0].mxu0
    %v854 = vadd.f32 0.0, %v853
    %v855 = vpop.f32.mrb[0].mxu0
    %856 = vdwg.mxu0
    %857 = vrot.lane.b32.xlu0 %v337, 112
    %v858 = vpop.permute.xlu0 %857
    %859 = vrot.lane.b32.xlu0 %v337, 80
    %v860 = vpop.permute.xlu0 %859
    %v861 = vsel %vm343, %v858, 0
    %v863 = vsel %vm343, %v860, 0
    %865 = vmatprep.subr.mxu0 0.0
    %866 = vmatpush1.xpose.msra.mxu0 %v863
    %867 = vmatprep.subr.mxu0 0.0
    %868 = vmatpush1.xpose.msra.mxu0 0.0
    %869 = vmatprep.subr.mxu0 0.0
    %870 = vmatpush1.xpose.msra.mxu0 0.0
    %871 = vmatprep.subr.mxu0 0.0
    %872 = vmatpush1.xpose.msra.mxu0 0.0
    %873 = vmatprep.subr.mxu0 0.0
    %874 = vmatpush1.xpose.msra.mxu0 0.0
    %875 = vmatprep.subr.mxu0 0.0
    %876 = vmatpush1.xpose.msra.mxu0 0.0
    %877 = vmatprep.subr.mxu0 0.0
    %878 = vmatpush1.xpose.msra.mxu0 0.0
    %879 = vmatprep.subr.mxu0 0.0
    %880 = vmatpush1.xpose.msra.mxu0 0.0
    %881 = vmatprep.subr.mxu0 0.0
    %882 = vmatpush1.xpose.msra.mxu0 0.0
    %883 = vmatprep.subr.mxu0 0.0
    %884 = vmatpush1.xpose.msra.mxu0 0.0
    %885 = vmatprep.subr.mxu0 0.0
    %886 = vmatpush1.xpose.msra.mxu0 0.0
    %887 = vmatprep.subr.mxu0 0.0
    %888 = vmatpush1.xpose.msra.mxu0 0.0
    %889 = vmatprep.subr.mxu0 0.0
    %890 = vmatpush1.xpose.msra.mxu0 0.0
    %891 = vmatprep.subr.mxu0 0.0
    %892 = vmatpush1.xpose.msra.mxu0 0.0
    %893 = vmatprep.subr.mxu0 0.0
    %894 = vmatpush1.xpose.msra.mxu0 0.0
    %895 = vmatprep.subr.mxu0 0.0
    %896 = vmatpush1.xpose.msra.mxu0 0.0
    %897 = vmatprep.subr.mxu0 0.0
    %898 = vmatpush1.xpose.msra.mxu0 0.0
    %899 = vmatprep.subr.mxu0 0.0
    %900 = vmatpush1.xpose.msra.mxu0 0.0
    %901 = vmatprep.subr.mxu0 0.0
    %902 = vmatpush1.xpose.msra.mxu0 0.0
    %903 = vmatprep.subr.mxu0 0.0
    %904 = vmatpush1.xpose.msra.mxu0 0.0
    %905 = vmatprep.subr.mxu0 0.0
    %906 = vmatpush1.xpose.msra.mxu0 0.0
    %907 = vmatprep.subr.mxu0 0.0
    %908 = vmatpush1.xpose.msra.mxu0 0.0
    %909 = vmatprep.subr.mxu0 0.0
    %910 = vmatpush1.xpose.msra.mxu0 0.0
    %911 = vmatprep.subr.mxu0 0.0
    %912 = vmatpush1.xpose.msra.mxu0 0.0
    %913 = vmatprep.subr.mxu0 0.0
    %914 = vmatpush1.xpose.msra.mxu0 0.0
    %915 = vmatprep.subr.mxu0 0.0
    %916 = vmatpush1.xpose.msra.mxu0 0.0
    %917 = vmatprep.subr.mxu0 0.0
    %918 = vmatpush1.xpose.msra.mxu0 0.0
    %919 = vmatprep.subr.mxu0 0.0
    %920 = vmatpush1.xpose.msra.mxu0 0.0
    %921 = vmatprep.subr.mxu0 0.0
    %922 = vmatpush1.xpose.msra.mxu0 0.0
    %923 = vmatprep.subr.mxu0 0.0
    %924 = vmatpush1.xpose.msra.mxu0 0.0
    %925 = vmatprep.subr.mxu0 0.0
    %926 = vmatpush1.xpose.msra.mxu0 0.0
    %927 = vmatprep.subr.mxu0 0.0
    %928 = vmatpush1.xpose.msra.mxu0 0.0
    %929 = vmatprep.mubr.f32.mxu0 0.0
    %930 = vmatmul.mubr.f32.gmra.mrb[0].mxu0 %v861
    %v931 = vpop.f32.mrb[0].mxu0
    %v932 = vadd.f32 0.0, %v931
    %v933 = vpop.f32.mrb[0].mxu0
    %934 = vdwg.mxu0
    %v935 = vmul.f32 %v932, 0.25
    %v936 = vadd.f32 %v935, %v599
    %v937 = vsel %vm427, %v936, -inf
    %938 = vmax.xlane.f32.xlu0 %v937
    %v939 = vpop.xlane.xlu0 %938
    %v940 = vsub.f32 %v936, %v939
    %v941 = vmul.f32 %v940, 1.442695
    %v942 = vpow.pop %v941
    %v943 = vsel %vm427, %v942, 0.0
    %944 = vadd.xlane.f32.xlu0 %v943
    %v945 = vpop.xlane.xlu0 %944
    %v946 = vrcp.pop %v945
    %v947 = vmul.f32 %v942, %v946
    %948 = vrot.lane.b32.xlu0 %v337, 48
    %v949 = vpop.permute.xlu0 %948
    %v952 = vsel %vm427, %v947, 0
    %954 = vmatprep.subr.mxu0 0.0
    %955 = vmatpush1.msra.mxu0 %v949
    %956 = vmatprep.subr.mxu0 0.0
    %957 = vmatpush1.msra.mxu0 0.0
    %958 = vmatprep.subr.mxu0 0.0
    %959 = vmatpush1.msra.mxu0 0.0
    %960 = vmatprep.subr.mxu0 0.0
    %961 = vmatpush1.msra.mxu0 0.0
    %962 = vmatprep.subr.mxu0 0.0
    %963 = vmatpush1.msra.mxu0 0.0
    %964 = vmatprep.subr.mxu0 0.0
    %965 = vmatpush1.msra.mxu0 0.0
    %966 = vmatprep.subr.mxu0 0.0
    %967 = vmatpush1.msra.mxu0 0.0
    %968 = vmatprep.subr.mxu0 0.0
    %969 = vmatpush1.msra.mxu0 0.0
    %970 = vmatprep.subr.mxu0 0.0
    %971 = vmatpush1.msra.mxu0 0.0
    %972 = vmatprep.subr.mxu0 0.0
    %973 = vmatpush1.msra.mxu0 0.0
    %974 = vmatprep.subr.mxu0 0.0
    %975 = vmatpush1.msra.mxu0 0.0
    %976 = vmatprep.subr.mxu0 0.0
    %977 = vmatpush1.msra.mxu0 0.0
    %978 = vmatprep.subr.mxu0 0.0
    %979 = vmatpush1.msra.mxu0 0.0
    %980 = vmatprep.subr.mxu0 0.0
    %981 = vmatpush1.msra.mxu0 0.0
    %982 = vmatprep.subr.mxu0 0.0
    %983 = vmatpush1.msra.mxu0 0.0
    %984 = vmatprep.subr.mxu0 0.0
    %985 = vmatpush1.msra.mxu0 0.0
    %986 = vmatprep.subr.mxu0 0.0
    %987 = vmatpush1.msra.mxu0 0.0
    %988 = vmatprep.subr.mxu0 0.0
    %989 = vmatpush1.msra.mxu0 0.0
    %990 = vmatprep.subr.mxu0 0.0
    %991 = vmatpush1.msra.mxu0 0.0
    %992 = vmatprep.subr.mxu0 0.0
    %993 = vmatpush1.msra.mxu0 0.0
    %994 = vmatprep.subr.mxu0 0.0
    %995 = vmatpush1.msra.mxu0 0.0
    %996 = vmatprep.subr.mxu0 0.0
    %997 = vmatpush1.msra.mxu0 0.0
    %998 = vmatprep.subr.mxu0 0.0
    %999 = vmatpush1.msra.mxu0 0.0
    %1000 = vmatprep.subr.mxu0 0.0
    %1001 = vmatpush1.msra.mxu0 0.0
    %1002 = vmatprep.subr.mxu0 0.0
    %1003 = vmatpush1.msra.mxu0 0.0
    %1004 = vmatprep.subr.mxu0 0.0
    %1005 = vmatpush1.msra.mxu0 0.0
    %1006 = vmatprep.subr.mxu0 0.0
    %1007 = vmatpush1.msra.mxu0 0.0
    %1008 = vmatprep.subr.mxu0 0.0
    %1009 = vmatpush1.msra.mxu0 0.0
    %1010 = vmatprep.subr.mxu0 0.0
    %1011 = vmatpush1.msra.mxu0 0.0
    %1012 = vmatprep.subr.mxu0 0.0
    %1013 = vmatpush1.msra.mxu0 0.0
    %1014 = vmatprep.subr.mxu0 0.0
    %1015 = vmatpush1.msra.mxu0 0.0
    %1016 = vmatprep.subr.mxu0 0.0
    %1017 = vmatpush1.msra.mxu0 0.0
    %1018 = vmatprep.mubr.f32.mxu0 0.0
    %1019 = vmatmul.mubr.f32.gmra.mrb[0].mxu0 %v952
    %v1020 = vpop.f32.mrb[0].mxu0
    %v1021 = vadd.f32 0.0, %v1020
    %v1022 = vpop.f32.mrb[0].mxu0
    %1023 = vdwg.mxu0
    %v1024 = vpack.c.bf16 %v1021, %v854
    %v1027 = vunpack.c.l.b16 %v275
    %v1028 = vunpack.c.l.b16 %v277
    %v1029 = vpack.c.b16 %v1028, %v1027
    %v1032 = vsel %vm343, %v1024, 0
    %1034 = vmatprep.subr.bf16.mxu0 0
    %1035 = vmatpush1.bf16.msra.mxu0 %v1029
    %1036 = vmatprep.subr.bf16.mxu0 0
    %1037 = vmatpush1.bf16.msra.mxu0 0
    %1038 = vmatprep.subr.bf16.mxu0 0
    %1039 = vmatpush1.bf16.msra.mxu0 0
    %1040 = vmatprep.subr.bf16.mxu0 0
    %1041 = vmatpush1.bf16.msra.mxu0 0
    %1042 = vmatprep.subr.bf16.mxu0 0
    %1043 = vmatpush1.bf16.msra.mxu0 0
    %1044 = vmatprep.subr.bf16.mxu0 0
    %1045 = vmatpush1.bf16.msra.mxu0 0
    %1046 = vmatprep.subr.bf16.mxu0 0
    %1047 = vmatpush1.bf16.msra.mxu0 0
    %1048 = vmatprep.subr.bf16.mxu0 0
    %1049 = vmatpush1.bf16.msra.mxu0 0
    %1050 = vmatprep.subr.bf16.mxu0 0
    %1051 = vmatpush1.bf16.msra.mxu0 0
    %1052 = vmatprep.subr.bf16.mxu0 0
    %1053 = vmatpush1.bf16.msra.mxu0 0
    %1054 = vmatprep.subr.bf16.mxu0 0
    %1055 = vmatpush1.bf16.msra.mxu0 0
    %1056 = vmatprep.subr.bf16.mxu0 0
    %1057 = vmatpush1.bf16.msra.mxu0 0
    %1058 = vmatprep.subr.bf16.mxu0 0
    %1059 = vmatpush1.bf16.msra.mxu0 0
    %1060 = vmatprep.subr.bf16.mxu0 0
    %1061 = vmatpush1.bf16.msra.mxu0 0
    %1062 = vmatprep.subr.bf16.mxu0 0
    %1063 = vmatpush1.bf16.msra.mxu0 0
    %1064 = vmatprep.subr.bf16.mxu0 0
    %1065 = vmatpush1.bf16.msra.mxu0 0
    %1066 = vmatprep.mubr.bf16.mxu0 0
    %1067 = vmatmul.mubr.bf16.gmra.mrb[0].mxu0 %v1032
    %v1068 = vpop.f32.mrb[0].mxu0
    %v1069 = vadd.f32 0.0, %v1068
    %v1070 = vpop.f32.mrb[0].mxu0
    %v1071 = vpop.f32.mrb[0].mxu0
    %v1072 = vadd.f32 0.0, %v1071
    %v1073 = vpop.f32.mrb[0].mxu0
    %1074 = vdwg.mxu0
    %v1077 = vunpack.c.l.b16 %v271
    %v1078 = vunpack.c.l.b16 %v273
    %v1079 = vpack.c.b16 %v1078, %v1077
    %v1082 = vsel %vm343, %v689, 0
    %1084 = vmatprep.subr.bf16.mxu0 0
    %1085 = vmatpush1.bf16.msra.mxu0 %v1079
    %1086 = vmatprep.subr.bf16.mxu0 0
    %1087 = vmatpush1.bf16.msra.mxu0 0
    %1088 = vmatprep.subr.bf16.mxu0 0
    %1089 = vmatpush1.bf16.msra.mxu0 0
    %1090 = vmatprep.subr.bf16.mxu0 0
    %1091 = vmatpush1.bf16.msra.mxu0 0
    %1092 = vmatprep.subr.bf16.mxu0 0
    %1093 = vmatpush1.bf16.msra.mxu0 0
    %1094 = vmatprep.subr.bf16.mxu0 0
    %1095 = vmatpush1.bf16.msra.mxu0 0
    %1096 = vmatprep.subr.bf16.mxu0 0
    %1097 = vmatpush1.bf16.msra.mxu0 0
    %1098 = vmatprep.subr.bf16.mxu0 0
    %1099 = vmatpush1.bf16.msra.mxu0 0
    %1100 = vmatprep.subr.bf16.mxu0 0
    %1101 = vmatpush1.bf16.msra.mxu0 0
    %1102 = vmatprep.subr.bf16.mxu0 0
    %1103 = vmatpush1.bf16.msra.mxu0 0
    %1104 = vmatprep.subr.bf16.mxu0 0
    %1105 = vmatpush1.bf16.msra.mxu0 0
    %1106 = vmatprep.subr.bf16.mxu0 0
    %1107 = vmatpush1.bf16.msra.mxu0 0
    %1108 = vmatprep.subr.bf16.mxu0 0
    %1109 = vmatpush1.bf16.msra.mxu0 0
    %1110 = vmatprep.subr.bf16.mxu0 0
    %1111 = vmatpush1.bf16.msra.mxu0 0
    %1112 = vmatprep.subr.bf16.mxu0 0
    %1113 = vmatpush1.bf16.msra.mxu0 0
    %1114 = vmatprep.subr.bf16.mxu0 0
    %1115 = vmatpush1.bf16.msra.mxu0 0
    %1116 = vmatprep.mubr.bf16.mxu0 0
    %1117 = vmatmul.mubr.bf16.gmra.mrb[0].mxu0 %v1082
    %v1118 = vpop.f32.mrb[0].mxu0
    %v1119 = vadd.f32 %v1069, %v1118
    %v1120 = vpop.f32.mrb[0].mxu0
    %v1121 = vpop.f32.mrb[0].mxu0
    %v1122 = vadd.f32 %v1072, %v1121
    %v1123 = vpop.f32.mrb[0].mxu0
    %1124 = vdwg.mxu0
    %v1125 = vld [vmem:[%s5 + $0x4] sm:$0x1]
    %v1126 = vlaneseq
    %v1127 = vshrl.u32 %v1126, 7
    %v1128 = vsub.s32 0, %v1127
    %v1129 = vrot.slane %v1125, %v1128
    %v1130 = vadd.f32 %v1119, %v1129
    %v1131 = vadd.f32 %v1122, %v1129
    %v1132 = vadd.f32 %v1130, %v268
    %v1133 = vadd.f32 %v1131, %v269
    %v1134 = vld [vmem:[%s5 + $0x5] sm:$0x1]
    %v1135 = vld [vmem:[%s5 + $0x6] sm:$0x1]
    %v1136 = vsel %vm226, %v1132, 0.0
    %1137 = vadd.xlane.f32.xlu0 %v1136
    %v1138 = vpop.xlane.xlu0 %1137
    %v1139 = vsel %vm226, %v1133, 0.0
    %1140 = vadd.xlane.f32.xlu0 %v1139
    %v1141 = vpop.xlane.xlu0 %1140
    %v1142 = vmul.f32 %v1138, %v233
    %v1143 = vmul.f32 %v1141, %v233
    %v1144 = vmul.f32 %v1132, %v1132
    %v1145 = vmul.f32 %v1133, %v1133
    %v1146 = vsel %vm226, %v1144, 0.0
    %1147 = vadd.xlane.f32.xlu0 %v1146
    %v1148 = vpop.xlane.xlu0 %1147
    %v1149 = vsel %vm226, %v1145, 0.0
    %1150 = vadd.xlane.f32.xlu0 %v1149
    %v1151 = vpop.xlane.xlu0 %1150
    %v1152 = vmul.f32 %v1148, %v233
    %v1153 = vmul.f32 %v1151, %v233
    %v1154 = vmul.f32 %v1142, %v1142
    %v1155 = vmul.f32 %v1143, %v1143
    %v1156 = vsub.f32 %v1152, %v1154
    %v1157 = vsub.f32 %v1153, %v1155
    %v1158 = vadd.f32 %v1156, 1e-05
    %v1159 = vadd.f32 %v1157, 1e-05
    %v1160 = vrsqrt.pop %v1158
    %v1161 = vrsqrt.pop %v1159
    %v1162 = vsub.f32 %v1132, %v1142
    %v1163 = vsub.f32 %v1133, %v1143
    %v1164 = vmul.f32 %v1162, %v1160
    %v1165 = vmul.f32 %v1163, %v1161
    %v1166 = vlaneseq
    %v1167 = vshrl.u32 %v1166, 7
    %v1168 = vsub.s32 0, %v1167
    %v1169 = vrot.slane %v1134, %v1168
    %v1170 = vmul.f32 %v1164, %v1169
    %v1171 = vmul.f32 %v1165, %v1169
    %v1172 = vlaneseq
    %v1173 = vshrl.u32 %v1172, 7
    %v1174 = vsub.s32 0, %v1173
    %v1175 = vrot.slane %v1135, %v1174
    %v1176 = vadd.f32 %v1170, %v1175
    %v1177 = vadd.f32 %v1171, %v1175
    %v1178 = vpack.c.bf16 %v1177, %v1176
    %v1179 = vld [vmem:[%s5 + $0x7] sm:$0x1]
    %v1180 = vlaneseq
    %v1181 = vshrl.u32 %v1180, 7
    %v1182 = vsub.s32 0, %v1181
    %v1183 = vrot.slane %v1179, %v1182
    %v1184 = vunpack.c.h.b16 %v270
    %v1185 = vunpack.c.h.b16 %v272
    %v1186 = vunpack.c.h.b16 %v274
    %v1187 = vunpack.c.h.b16 %v276
    %v1188 = vpack.c.b16 %v1185, %v1184
    %v1189 = vpack.c.b16 %v1187, %v1186
    %v1193 = vsel %vm226, %v1178, 0
    %1195 = vmatprep.subr.bf16.mxu0 0
    %1196 = vmatpush1.bf16.msra.mxu0 %v1188
    %1197 = vmatprep.subr.bf16.mxu0 0
    %1198 = vmatpush1.bf16.msra.mxu0 %v1189
    %1199 = vmatprep.subr.bf16.mxu0 0
    %1200 = vmatpush1.bf16.msra.mxu0 0
    %1201 = vmatprep.subr.bf16.mxu0 0
    %1202 = vmatpush1.bf16.msra.mxu0 0
    %1203 = vmatprep.subr.bf16.mxu0 0
    %1204 = vmatpush1.bf16.msra.mxu0 0
    %1205 = vmatprep.subr.bf16.mxu0 0
    %1206 = vmatpush1.bf16.msra.mxu0 0
    %1207 = vmatprep.subr.bf16.mxu0 0
    %1208 = vmatpush1.bf16.msra.mxu0 0
    %1209 = vmatprep.subr.bf16.mxu0 0
    %1210 = vmatpush1.bf16.msra.mxu0 0
    %1211 = vmatprep.subr.bf16.mxu0 0
    %1212 = vmatpush1.bf16.msra.mxu0 0
    %1213 = vmatprep.subr.bf16.mxu0 0
    %1214 = vmatpush1.bf16.msra.mxu0 0
    %1215 = vmatprep.subr.bf16.mxu0 0
    %1216 = vmatpush1.bf16.msra.mxu0 0
    %1217 = vmatprep.subr.bf16.mxu0 0
    %1218 = vmatpush1.bf16.msra.mxu0 0
    %1219 = vmatprep.subr.bf16.mxu0 0
    %1220 = vmatpush1.bf16.msra.mxu0 0
    %1221 = vmatprep.subr.bf16.mxu0 0
    %1222 = vmatpush1.bf16.msra.mxu0 0
    %1223 = vmatprep.subr.bf16.mxu0 0
    %1224 = vmatpush1.bf16.msra.mxu0 0
    %1225 = vmatprep.subr.bf16.mxu0 0
    %1226 = vmatpush1.bf16.msra.mxu0 0
    %1227 = vmatprep.mubr.bf16.mxu0 0
    %1228 = vmatmul.mubr.bf16.gmra.mrb[0].mxu0 %v1193
    %v1229 = vpop.f32.mrb[0].mxu0
    %v1230 = vadd.f32 %v1183, %v1229
    %v1231 = vpop.f32.mrb[0].mxu0
    %v1232 = vpop.f32.mrb[0].mxu0
    %v1233 = vadd.f32 %v1183, %v1232
    %v1234 = vpop.f32.mrb[0].mxu0
    %1235 = vdwg.mxu0
    %v1236 = vmul.f32 %v1230, 0.5
    %v1237 = vmul.f32 %v1233, 0.5
    %v1238 = vmul.f32 %v1230, 0.044715
    %v1239 = vmul.f32 %v1233, 0.044715
    %v1240 = vmul.f32 %v1238, %v1230
    %v1241 = vmul.f32 %v1239, %v1233
    %v1242 = vmul.f32 %v1240, %v1230
    %v1243 = vmul.f32 %v1241, %v1233
    %v1244 = vadd.f32 %v1230, %v1242
    %v1245 = vadd.f32 %v1233, %v1243
    %v1246 = vmul.f32 %v1244, 0.7978846
    %v1247 = vmul.f32 %v1245, 0.7978846
    %v1248 = vtanh.pop %v1246
    %v1249 = vtanh.pop %v1247
    %v1250 = vadd.f32 %v1248, 1.0
    %v1251 = vadd.f32 %v1249, 1.0
    %v1252 = vmul.f32 %v1236, %v1250
    %v1253 = vmul.f32 %v1237, %v1251
    %v1254 = vpack.c.bf16 %v1253, %v1252
    %v1255 = vld [vmem:[%s5 + $0x8] sm:$0x1]
    %v1256 = vlaneseq
    %v1257 = vshrl.u32 %v1256, 7
    %v1258 = vsub.s32 0, %v1257
    %v1259 = vrot.slane %v1255, %v1258
    %v1260 = vunpack.c.h.b16 %v271
    %v1261 = vunpack.c.h.b16 %v273
    %v1262 = vunpack.c.h.b16 %v275
    %v1263 = vunpack.c.h.b16 %v277
    %v1264 = vpack.c.b16 %v1261, %v1260
    %v1265 = vpack.c.b16 %v1263, %v1262
    %1268 = vmatprep.subr.bf16.mxu0 0
    %1269 = vmatpush1.bf16.xpose.msra.mxu0 %v1264
    %1270 = vmatprep.subr.bf16.mxu0 0
    %1271 = vmatpush1.bf16.xpose.msra.mxu0 %v1265
    %1272 = vmatprep.subr.bf16.mxu0 0
    %1273 = vmatpush1.bf16.xpose.msra.mxu0 0
    %1274 = vmatprep.subr.bf16.mxu0 0
    %1275 = vmatpush1.bf16.xpose.msra.mxu0 0
    %1276 = vmatprep.subr.bf16.mxu0 0
    %1277 = vmatpush1.bf16.xpose.msra.mxu0 0
    %1278 = vmatprep.subr.bf16.mxu0 0
    %1279 = vmatpush1.bf16.xpose.msra.mxu0 0
    %1280 = vmatprep.subr.bf16.mxu0 0
    %1281 = vmatpush1.bf16.xpose.msra.mxu0 0
    %1282 = vmatprep.subr.bf16.mxu0 0
    %1283 = vmatpush1.bf16.xpose.msra.mxu0 0
    %1284 = vmatprep.subr.bf16.mxu0 0
    %1285 = vmatpush1.bf16.xpose.msra.mxu0 0
    %1286 = vmatprep.subr.bf16.mxu0 0
    %1287 = vmatpush1.bf16.xpose.msra.mxu0 0
    %1288 = vmatprep.subr.bf16.mxu0 0
    %1289 = vmatpush1.bf16.xpose.msra.mxu0 0
    %1290 = vmatprep.subr.bf16.mxu0 0
    %1291 = vmatpush1.bf16.xpose.msra.mxu0 0
    %1292 = vmatprep.subr.bf16.mxu0 0
    %1293 = vmatpush1.bf16.xpose.msra.mxu0 0
    %1294 = vmatprep.subr.bf16.mxu0 0
    %1295 = vmatpush1.bf16.xpose.msra.mxu0 0
    %1296 = vmatprep.subr.bf16.mxu0 0
    %1297 = vmatpush1.bf16.xpose.msra.mxu0 0
    %1298 = vmatprep.subr.bf16.mxu0 0
    %1299 = vmatpush1.bf16.xpose.msra.mxu0 0
    %1300 = vmatprep.mubr.bf16.mxu0 0
    %1301 = vmatmul.mubr.bf16.gmra.mrb[0].mxu0 %v1254
    %v1302 = vpop.f32.mrb[0].mxu0
    %v1303 = vadd.f32 %v1259, %v1302
    %v1304 = vpop.f32.mrb[0].mxu0
    %v1305 = vpop.f32.mrb[0].mxu0
    %v1306 = vadd.f32 %v1259, %v1305
    %v1307 = vpop.f32.mrb[0].mxu0
    %1308 = vdwg.mxu0
    %v1309 = vadd.f32 %v1303, %v1176
    %v1310 = vadd.f32 %v1306, %v1177
    %v1311 = vld [vmem:[%s5 + $0x9] sm:$0x1]
    %v1312 = vld [vmem:[%s5 + $0xa] sm:$0x1]
    %v1313 = vsel %vm226, %v1309, 0.0
    %1314 = vadd.xlane.f32.xlu0 %v1313
    %v1315 = vpop.xlane.xlu0 %1314
    %v1316 = vsel %vm226, %v1310, 0.0
    %1317 = vadd.xlane.f32.xlu0 %v1316
    %v1318 = vpop.xlane.xlu0 %1317
    %v1319 = vmul.f32 %v1315, %v233
    %v1320 = vmul.f32 %v1318, %v233
    %v1321 = vmul.f32 %v1309, %v1309
    %v1322 = vmul.f32 %v1310, %v1310
    %v1323 = vsel %vm226, %v1321, 0.0
    %1324 = vadd.xlane.f32.xlu0 %v1323
    %v1325 = vpop.xlane.xlu0 %1324
    %v1326 = vsel %vm226, %v1322, 0.0
    %1327 = vadd.xlane.f32.xlu0 %v1326
    %v1328 = vpop.xlane.xlu0 %1327
    %v1329 = vmul.f32 %v1325, %v233
    %v1330 = vmul.f32 %v1328, %v233
    %v1331 = vmul.f32 %v1319, %v1319
    %v1332 = vmul.f32 %v1320, %v1320
    %v1333 = vsub.f32 %v1329, %v1331
    %v1334 = vsub.f32 %v1330, %v1332
    %v1335 = vadd.f32 %v1333, 1e-05
    %v1336 = vadd.f32 %v1334, 1e-05
    %v1337 = vrsqrt.pop %v1335
    %v1338 = vrsqrt.pop %v1336
    %v1339 = vsub.f32 %v1309, %v1319
    %v1340 = vsub.f32 %v1310, %v1320
    %v1341 = vmul.f32 %v1339, %v1337
    %v1342 = vmul.f32 %v1340, %v1338
    %v1343 = vlaneseq
    %v1344 = vshrl.u32 %v1343, 7
    %v1345 = vsub.s32 0, %v1344
    %v1346 = vrot.slane %v1311, %v1345
    %v1347 = vmul.f32 %v1341, %v1346
    %v1348 = vmul.f32 %v1342, %v1346
    %v1349 = vlaneseq
    %v1350 = vshrl.u32 %v1349, 7
    %v1351 = vsub.s32 0, %v1350
    %v1352 = vrot.slane %v1312, %v1351
    %v1353 = vadd.f32 %v1347, %v1352
    %v1354 = vadd.f32 %v1348, %v1352
    %s1355 = scalar_lea.vmem %s3, 64
    %v1356 = vld [vmem:[%s1355] sm:$0xff]
    %v1357 = vld [vmem:[%s1355 + $0x8] sm:$0xff]
    %v1358 = vld [vmem:[%s1355 + $0x10] sm:$0xff]
    %v1359 = vld [vmem:[%s1355 + $0x18] sm:$0xff]
    %v1360 = vld [vmem:[%s1355 + $0x20] sm:$0xff]
    %v1361 = vld [vmem:[%s1355 + $0x28] sm:$0xff]
    %v1362 = vld [vmem:[%s1355 + $0x30] sm:$0xff]
    %v1363 = vld [vmem:[%s1355 + $0x38] sm:$0xff]
    %v1364 = vpack.c.bf16 %v1354, %v1353
    %v1365 = vld [vmem:[%s5 + $0xb] sm:$0x1]
    %v1366 = vlaneseq
    %v1367 = vshrl.u32 %v1366, 7
    %v1368 = vsub.s32 0, %v1367
    %v1369 = vrot.slane %v1365, %v1368
    %v1374 = vunpack.c.l.b16 %v1356
    %v1375 = vunpack.c.l.b16 %v1358
    %v1376 = vunpack.c.l.b16 %v1360
    %v1377 = vunpack.c.l.b16 %v1362
    %v1378 = vpack.c.b16 %v1375, %v1374
    %v1379 = vpack.c.b16 %v1377, %v1376
    %v1383 = vsel %vm226, %v1364, 0
    %1385 = vmatprep.subr.bf16.mxu0 0
    %1386 = vmatpush1.bf16.msra.mxu0 %v1378
    %1387 = vmatprep.subr.bf16.mxu0 0
    %1388 = vmatpush1.bf16.msra.mxu0 %v1379
    %1389 = vmatprep.subr.bf16.mxu0 0
    %1390 = vmatpush1.bf16.msra.mxu0 0
    %1391 = vmatprep.subr.bf16.mxu0 0
    %1392 = vmatpush1.bf16.msra.mxu0 0
    %1393 = vmatprep.subr.bf16.mxu0 0
    %1394 = vmatpush1.bf16.msra.mxu0 0
    %1395 = vmatprep.subr.bf16.mxu0 0
    %1396 = vmatpush1.bf16.msra.mxu0 0
    %1397 = vmatprep.subr.bf16.mxu0 0
    %1398 = vmatpush1.bf16.msra.mxu0 0
    %1399 = vmatprep.subr.bf16.mxu0 0
    %1400 = vmatpush1.bf16.msra.mxu0 0
    %1401 = vmatprep.subr.bf16.mxu0 0
    %1402 = vmatpush1.bf16.msra.mxu0 0
    %1403 = vmatprep.subr.bf16.mxu0 0
    %1404 = vmatpush1.bf16.msra.mxu0 0
    %1405 = vmatprep.subr.bf16.mxu0 0
    %1406 = vmatpush1.bf16.msra.mxu0 0
    %1407 = vmatprep.subr.bf16.mxu0 0
    %1408 = vmatpush1.bf16.msra.mxu0 0
    %1409 = vmatprep.subr.bf16.mxu0 0
    %1410 = vmatpush1.bf16.msra.mxu0 0
    %1411 = vmatprep.subr.bf16.mxu0 0
    %1412 = vmatpush1.bf16.msra.mxu0 0
    %1413 = vmatprep.subr.bf16.mxu0 0
    %1414 = vmatpush1.bf16.msra.mxu0 0
    %1415 = vmatprep.subr.bf16.mxu0 0
    %1416 = vmatpush1.bf16.msra.mxu0 0
    %1417 = vmatprep.mubr.bf16.mxu0 0
    %1418 = vmatmul.mubr.bf16.gmra.mrb[0].mxu0 %v1383
    %v1419 = vpop.f32.mrb[0].mxu0
    %v1420 = vadd.f32 %v1369, %v1419
    %v1421 = vpop.f32.mrb[0].mxu0
    %v1422 = vpop.f32.mrb[0].mxu0
    %v1423 = vadd.f32 %v1369, %v1422
    %v1424 = vpop.f32.mrb[0].mxu0
    %1425 = vdwg.mxu0
    %1427 = vrot.lane.b32.xlu0 %v1420, 96
    %v1428 = vpop.permute.xlu0 %1427
    %v1429 = vsel %vm343, %v1420, 0
    %v1431 = vsel %vm343, %v1428, 0
    %1433 = vmatprep.subr.mxu0 0.0
    %1434 = vmatpush1.xpose.msra.mxu0 %v1431
    %1435 = vmatprep.subr.mxu0 0.0
    %1436 = vmatpush1.xpose.msra.mxu0 0.0
    %1437 = vmatprep.subr.mxu0 0.0
    %1438 = vmatpush1.xpose.msra.mxu0 0.0
    %1439 = vmatprep.subr.mxu0 0.0
    %1440 = vmatpush1.xpose.msra.mxu0 0.0
    %1441 = vmatprep.subr.mxu0 0.0
    %1442 = vmatpush1.xpose.msra.mxu0 0.0
    %1443 = vmatprep.subr.mxu0 0.0
    %1444 = vmatpush1.xpose.msra.mxu0 0.0
    %1445 = vmatprep.subr.mxu0 0.0
    %1446 = vmatpush1.xpose.msra.mxu0 0.0
    %1447 = vmatprep.subr.mxu0 0.0
    %1448 = vmatpush1.xpose.msra.mxu0 0.0
    %1449 = vmatprep.subr.mxu0 0.0
    %1450 = vmatpush1.xpose.msra.mxu0 0.0
    %1451 = vmatprep.subr.mxu0 0.0
    %1452 = vmatpush1.xpose.msra.mxu0 0.0
    %1453 = vmatprep.subr.mxu0 0.0
    %1454 = vmatpush1.xpose.msra.mxu0 0.0
    %1455 = vmatprep.subr.mxu0 0.0
    %1456 = vmatpush1.xpose.msra.mxu0 0.0
    %1457 = vmatprep.subr.mxu0 0.0
    %1458 = vmatpush1.xpose.msra.mxu0 0.0
    %1459 = vmatprep.subr.mxu0 0.0
    %1460 = vmatpush1.xpose.msra.mxu0 0.0
    %1461 = vmatprep.subr.mxu0 0.0
    %1462 = vmatpush1.xpose.msra.mxu0 0.0
    %1463 = vmatprep.subr.mxu0 0.0
    %1464 = vmatpush1.xpose.msra.mxu0 0.0
    %1465 = vmatprep.subr.mxu0 0.0
    %1466 = vmatpush1.xpose.msra.mxu0 0.0
    %1467 = vmatprep.subr.mxu0 0.0
    %1468 = vmatpush1.xpose.msra.mxu0 0.0
    %1469 = vmatprep.subr.mxu0 0.0
    %1470 = vmatpush1.xpose.msra.mxu0 0.0
    %1471 = vmatprep.subr.mxu0 0.0
    %1472 = vmatpush1.xpose.msra.mxu0 0.0
    %1473 = vmatprep.subr.mxu0 0.0
    %1474 = vmatpush1.xpose.msra.mxu0 0.0
    %1475 = vmatprep.subr.mxu0 0.0
    %1476 = vmatpush1.xpose.msra.mxu0 0.0
    %1477 = vmatprep.subr.mxu0 0.0
    %1478 = vmatpush1.xpose.msra.mxu0 0.0
    %1479 = vmatprep.subr.mxu0 0.0
    %1480 = vmatpush1.xpose.msra.mxu0 0.0
    %1481 = vmatprep.subr.mxu0 0.0
    %1482 = vmatpush1.xpose.msra.mxu0 0.0
    %1483 = vmatprep.subr.mxu0 0.0
    %1484 = vmatpush1.xpose.msra.mxu0 0.0
    %1485 = vmatprep.subr.mxu0 0.0
    %1486 = vmatpush1.xpose.msra.mxu0 0.0
    %1487 = vmatprep.subr.mxu0 0.0
    %1488 = vmatpush1.xpose.msra.mxu0 0.0
    %1489 = vmatprep.subr.mxu0 0.0
    %1490 = vmatpush1.xpose.msra.mxu0 0.0
    %1491 = vmatprep.subr.mxu0 0.0
    %1492 = vmatpush1.xpose.msra.mxu0 0.0
    %1493 = vmatprep.subr.mxu0 0.0
    %1494 = vmatpush1.xpose.msra.mxu0 0.0
    %1495 = vmatprep.subr.mxu0 0.0
    %1496 = vmatpush1.xpose.msra.mxu0 0.0
    %1497 = vmatprep.mubr.f32.mxu0 0.0
    %1498 = vmatmul.mubr.f32.gmra.mrb[0].mxu0 %v1429
    %v1499 = vpop.f32.mrb[0].mxu0
    %v1500 = vadd.f32 0.0, %v1499
    %v1501 = vpop.f32.mrb[0].mxu0
    %1502 = vdwg.mxu0
    %v1503 = vmul.f32 %v1500, 0.25
    %v1504 = vadd.f32 %v1503, %v424
    %v1505 = vsel %vm427, %v1504, -inf
    %1506 = vmax.xlane.f32.xlu0 %v1505
    %v1507 = vpop.xlane.xlu0 %1506
    %v1508 = vsub.f32 %v1504, %v1507
    %v1509 = vmul.f32 %v1508, 1.442695
    %v1510 = vpow.pop %v1509
    %v1511 = vsel %vm427, %v1510, 0.0
    %1512 = vadd.xlane.f32.xlu0 %v1511
    %v1513 = vpop.xlane.xlu0 %1512
    %v1514 = vrcp.pop %v1513
    %v1515 = vmul.f32 %v1510, %v1514
    %1516 = vrot.lane.b32.xlu0 %v1420, 64
    %v1517 = vpop.permute.xlu0 %1516
    %v1520 = vsel %vm427, %v1515, 0
    %1522 = vmatprep.subr.mxu0 0.0
    %1523 = vmatpush1.msra.mxu0 %v1517
    %1524 = vmatprep.subr.mxu0 0.0
    %1525 = vmatpush1.msra.mxu0 0.0
    %1526 = vmatprep.subr.mxu0 0.0
    %1527 = vmatpush1.msra.mxu0 0.0
    %1528 = vmatprep.subr.mxu0 0.0
    %1529 = vmatpush1.msra.mxu0 0.0
    %1530 = vmatprep.subr.mxu0 0.0
    %1531 = vmatpush1.msra.mxu0 0.0
    %1532 = vmatprep.subr.mxu0 0.0
    %1533 = vmatpush1.msra.mxu0 0.0
    %1534 = vmatprep.subr.mxu0 0.0
    %1535 = vmatpush1.msra.mxu0 0.0
    %1536 = vmatprep.subr.mxu0 0.0
    %1537 = vmatpush1.msra.mxu0 0.0
    %1538 = vmatprep.subr.mxu0 0.0
    %1539 = vmatpush1.msra.mxu0 0.0
    %1540 = vmatprep.subr.mxu0 0.0
    %1541 = vmatpush1.msra.mxu0 0.0
    %1542 = vmatprep.subr.mxu0 0.0
    %1543 = vmatpush1.msra.mxu0 0.0
    %1544 = vmatprep.subr.mxu0 0.0
    %1545 = vmatpush1.msra.mxu0 0.0
    %1546 = vmatprep.subr.mxu0 0.0
    %1547 = vmatpush1.msra.mxu0 0.0
    %1548 = vmatprep.subr.mxu0 0.0
    %1549 = vmatpush1.msra.mxu0 0.0
    %1550 = vmatprep.subr.mxu0 0.0
    %1551 = vmatpush1.msra.mxu0 0.0
    %1552 = vmatprep.subr.mxu0 0.0
    %1553 = vmatpush1.msra.mxu0 0.0
    %1554 = vmatprep.subr.mxu0 0.0
    %1555 = vmatpush1.msra.mxu0 0.0
    %1556 = vmatprep.subr.mxu0 0.0
    %1557 = vmatpush1.msra.mxu0 0.0
    %1558 = vmatprep.subr.mxu0 0.0
    %1559 = vmatpush1.msra.mxu0 0.0
    %1560 = vmatprep.subr.mxu0 0.0
    %1561 = vmatpush1.msra.mxu0 0.0
    %1562 = vmatprep.subr.mxu0 0.0
    %1563 = vmatpush1.msra.mxu0 0.0
    %1564 = vmatprep.subr.mxu0 0.0
    %1565 = vmatpush1.msra.mxu0 0.0
    %1566 = vmatprep.subr.mxu0 0.0
    %1567 = vmatpush1.msra.mxu0 0.0
    %1568 = vmatprep.subr.mxu0 0.0
    %1569 = vmatpush1.msra.mxu0 0.0
    %1570 = vmatprep.subr.mxu0 0.0
    %1571 = vmatpush1.msra.mxu0 0.0
    %1572 = vmatprep.subr.mxu0 0.0
    %1573 = vmatpush1.msra.mxu0 0.0
    %1574 = vmatprep.subr.mxu0 0.0
    %1575 = vmatpush1.msra.mxu0 0.0
    %1576 = vmatprep.subr.mxu0 0.0
    %1577 = vmatpush1.msra.mxu0 0.0
    %1578 = vmatprep.subr.mxu0 0.0
    %1579 = vmatpush1.msra.mxu0 0.0
    %1580 = vmatprep.subr.mxu0 0.0
    %1581 = vmatpush1.msra.mxu0 0.0
    %1582 = vmatprep.subr.mxu0 0.0
    %1583 = vmatpush1.msra.mxu0 0.0
    %1584 = vmatprep.subr.mxu0 0.0
    %1585 = vmatpush1.msra.mxu0 0.0
    %1586 = vmatprep.mubr.f32.mxu0 0.0
    %1587 = vmatmul.mubr.f32.gmra.mrb[0].mxu0 %v1520
    %v1588 = vpop.f32.mrb[0].mxu0
    %v1589 = vadd.f32 0.0, %v1588
    %v1590 = vpop.f32.mrb[0].mxu0
    %1591 = vdwg.mxu0
    %1593 = vrot.lane.b32.xlu0 %v1423, 96
    %v1594 = vpop.permute.xlu0 %1593
    %v1595 = vsel %vm343, %v1423, 0
    %v1597 = vsel %vm343, %v1594, 0
    %1599 = vmatprep.subr.mxu0 0.0
    %1600 = vmatpush1.xpose.msra.mxu0 %v1597
    %1601 = vmatprep.subr.mxu0 0.0
    %1602 = vmatpush1.xpose.msra.mxu0 0.0
    %1603 = vmatprep.subr.mxu0 0.0
    %1604 = vmatpush1.xpose.msra.mxu0 0.0
    %1605 = vmatprep.subr.mxu0 0.0
    %1606 = vmatpush1.xpose.msra.mxu0 0.0
    %1607 = vmatprep.subr.mxu0 0.0
    %1608 = vmatpush1.xpose.msra.mxu0 0.0
    %1609 = vmatprep.subr.mxu0 0.0
    %1610 = vmatpush1.xpose.msra.mxu0 0.0
    %1611 = vmatprep.subr.mxu0 0.0
    %1612 = vmatpush1.xpose.msra.mxu0 0.0
    %1613 = vmatprep.subr.mxu0 0.0
    %1614 = vmatpush1.xpose.msra.mxu0 0.0
    %1615 = vmatprep.subr.mxu0 0.0
    %1616 = vmatpush1.xpose.msra.mxu0 0.0
    %1617 = vmatprep.subr.mxu0 0.0
    %1618 = vmatpush1.xpose.msra.mxu0 0.0
    %1619 = vmatprep.subr.mxu0 0.0
    %1620 = vmatpush1.xpose.msra.mxu0 0.0
    %1621 = vmatprep.subr.mxu0 0.0
    %1622 = vmatpush1.xpose.msra.mxu0 0.0
    %1623 = vmatprep.subr.mxu0 0.0
    %1624 = vmatpush1.xpose.msra.mxu0 0.0
    %1625 = vmatprep.subr.mxu0 0.0
    %1626 = vmatpush1.xpose.msra.mxu0 0.0
    %1627 = vmatprep.subr.mxu0 0.0
    %1628 = vmatpush1.xpose.msra.mxu0 0.0
    %1629 = vmatprep.subr.mxu0 0.0
    %1630 = vmatpush1.xpose.msra.mxu0 0.0
    %1631 = vmatprep.subr.mxu0 0.0
    %1632 = vmatpush1.xpose.msra.mxu0 0.0
    %1633 = vmatprep.subr.mxu0 0.0
    %1634 = vmatpush1.xpose.msra.mxu0 0.0
    %1635 = vmatprep.subr.mxu0 0.0
    %1636 = vmatpush1.xpose.msra.mxu0 0.0
    %1637 = vmatprep.subr.mxu0 0.0
    %1638 = vmatpush1.xpose.msra.mxu0 0.0
    %1639 = vmatprep.subr.mxu0 0.0
    %1640 = vmatpush1.xpose.msra.mxu0 0.0
    %1641 = vmatprep.subr.mxu0 0.0
    %1642 = vmatpush1.xpose.msra.mxu0 0.0
    %1643 = vmatprep.subr.mxu0 0.0
    %1644 = vmatpush1.xpose.msra.mxu0 0.0
    %1645 = vmatprep.subr.mxu0 0.0
    %1646 = vmatpush1.xpose.msra.mxu0 0.0
    %1647 = vmatprep.subr.mxu0 0.0
    %1648 = vmatpush1.xpose.msra.mxu0 0.0
    %1649 = vmatprep.subr.mxu0 0.0
    %1650 = vmatpush1.xpose.msra.mxu0 0.0
    %1651 = vmatprep.subr.mxu0 0.0
    %1652 = vmatpush1.xpose.msra.mxu0 0.0
    %1653 = vmatprep.subr.mxu0 0.0
    %1654 = vmatpush1.xpose.msra.mxu0 0.0
    %1655 = vmatprep.subr.mxu0 0.0
    %1656 = vmatpush1.xpose.msra.mxu0 0.0
    %1657 = vmatprep.subr.mxu0 0.0
    %1658 = vmatpush1.xpose.msra.mxu0 0.0
    %1659 = vmatprep.subr.mxu0 0.0
    %1660 = vmatpush1.xpose.msra.mxu0 0.0
    %1661 = vmatprep.subr.mxu0 0.0
    %1662 = vmatpush1.xpose.msra.mxu0 0.0
    %1663 = vmatprep.mubr.f32.mxu0 0.0
    %1664 = vmatmul.mubr.f32.gmra.mrb[0].mxu0 %v1595
    %v1665 = vpop.f32.mrb[0].mxu0
    %v1666 = vadd.f32 0.0, %v1665
    %v1667 = vpop.f32.mrb[0].mxu0
    %1668 = vdwg.mxu0
    %v1669 = vmul.f32 %v1666, 0.25
    %v1670 = vadd.f32 %v1669, %v599
    %v1671 = vsel %vm427, %v1670, -inf
    %1672 = vmax.xlane.f32.xlu0 %v1671
    %v1673 = vpop.xlane.xlu0 %1672
    %v1674 = vsub.f32 %v1670, %v1673
    %v1675 = vmul.f32 %v1674, 1.442695
    %v1676 = vpow.pop %v1675
    %v1677 = vsel %vm427, %v1676, 0.0
    %1678 = vadd.xlane.f32.xlu0 %v1677
    %v1679 = vpop.xlane.xlu0 %1678
    %v1680 = vrcp.pop %v1679
    %v1681 = vmul.f32 %v1676, %v1680
    %1682 = vrot.lane.b32.xlu0 %v1423, 64
    %v1683 = vpop.permute.xlu0 %1682
    %v1686 = vsel %vm427, %v1681, 0
    %1688 = vmatprep.subr.mxu0 0.0
    %1689 = vmatpush1.msra.mxu0 %v1683
    %1690 = vmatprep.subr.mxu0 0.0
    %1691 = vmatpush1.msra.mxu0 0.0
    %1692 = vmatprep.subr.mxu0 0.0
    %1693 = vmatpush1.msra.mxu0 0.0
    %1694 = vmatprep.subr.mxu0 0.0
    %1695 = vmatpush1.msra.mxu0 0.0
    %1696 = vmatprep.subr.mxu0 0.0
    %1697 = vmatpush1.msra.mxu0 0.0
    %1698 = vmatprep.subr.mxu0 0.0
    %1699 = vmatpush1.msra.mxu0 0.0
    %1700 = vmatprep.subr.mxu0 0.0
    %1701 = vmatpush1.msra.mxu0 0.0
    %1702 = vmatprep.subr.mxu0 0.0
    %1703 = vmatpush1.msra.mxu0 0.0
    %1704 = vmatprep.subr.mxu0 0.0
    %1705 = vmatpush1.msra.mxu0 0.0
    %1706 = vmatprep.subr.mxu0 0.0
    %1707 = vmatpush1.msra.mxu0 0.0
    %1708 = vmatprep.subr.mxu0 0.0
    %1709 = vmatpush1.msra.mxu0 0.0
    %1710 = vmatprep.subr.mxu0 0.0
    %1711 = vmatpush1.msra.mxu0 0.0
    %1712 = vmatprep.subr.mxu0 0.0
    %1713 = vmatpush1.msra.mxu0 0.0
    %1714 = vmatprep.subr.mxu0 0.0
    %1715 = vmatpush1.msra.mxu0 0.0
    %1716 = vmatprep.subr.mxu0 0.0
    %1717 = vmatpush1.msra.mxu0 0.0
    %1718 = vmatprep.subr.mxu0 0.0
    %1719 = vmatpush1.msra.mxu0 0.0
    %1720 = vmatprep.subr.mxu0 0.0
    %1721 = vmatpush1.msra.mxu0 0.0
    %1722 = vmatprep.subr.mxu0 0.0
    %1723 = vmatpush1.msra.mxu0 0.0
    %1724 = vmatprep.subr.mxu0 0.0
    %1725 = vmatpush1.msra.mxu0 0.0
    %1726 = vmatprep.subr.mxu0 0.0
    %1727 = vmatpush1.msra.mxu0 0.0
    %1728 = vmatprep.subr.mxu0 0.0
    %1729 = vmatpush1.msra.mxu0 0.0
    %1730 = vmatprep.subr.mxu0 0.0
    %1731 = vmatpush1.msra.mxu0 0.0
    %1732 = vmatprep.subr.mxu0 0.0
    %1733 = vmatpush1.msra.mxu0 0.0
    %1734 = vmatprep.subr.mxu0 0.0
    %1735 = vmatpush1.msra.mxu0 0.0
    %1736 = vmatprep.subr.mxu0 0.0
    %1737 = vmatpush1.msra.mxu0 0.0
    %1738 = vmatprep.subr.mxu0 0.0
    %1739 = vmatpush1.msra.mxu0 0.0
    %1740 = vmatprep.subr.mxu0 0.0
    %1741 = vmatpush1.msra.mxu0 0.0
    %1742 = vmatprep.subr.mxu0 0.0
    %1743 = vmatpush1.msra.mxu0 0.0
    %1744 = vmatprep.subr.mxu0 0.0
    %1745 = vmatpush1.msra.mxu0 0.0
    %1746 = vmatprep.subr.mxu0 0.0
    %1747 = vmatpush1.msra.mxu0 0.0
    %1748 = vmatprep.subr.mxu0 0.0
    %1749 = vmatpush1.msra.mxu0 0.0
    %1750 = vmatprep.subr.mxu0 0.0
    %1751 = vmatpush1.msra.mxu0 0.0
    %1752 = vmatprep.mubr.f32.mxu0 0.0
    %1753 = vmatmul.mubr.f32.gmra.mrb[0].mxu0 %v1686
    %v1754 = vpop.f32.mrb[0].mxu0
    %v1755 = vadd.f32 0.0, %v1754
    %v1756 = vpop.f32.mrb[0].mxu0
    %1757 = vdwg.mxu0
    %v1758 = vpack.c.bf16 %v1755, %v1589
    %1759 = vrot.lane.b32.xlu0 %v1420, 112
    %v1760 = vpop.permute.xlu0 %1759
    %1761 = vrot.lane.b32.xlu0 %v1420, 80
    %v1762 = vpop.permute.xlu0 %1761
    %v1763 = vsel %vm343, %v1760, 0
    %v1765 = vsel %vm343, %v1762, 0
    %1767 = vmatprep.subr.mxu0 0.0
    %1768 = vmatpush1.xpose.msra.mxu0 %v1765
    %1769 = vmatprep.subr.mxu0 0.0
    %1770 = vmatpush1.xpose.msra.mxu0 0.0
    %1771 = vmatprep.subr.mxu0 0.0
    %1772 = vmatpush1.xpose.msra.mxu0 0.0
    %1773 = vmatprep.subr.mxu0 0.0
    %1774 = vmatpush1.xpose.msra.mxu0 0.0
    %1775 = vmatprep.subr.mxu0 0.0
    %1776 = vmatpush1.xpose.msra.mxu0 0.0
    %1777 = vmatprep.subr.mxu0 0.0
    %1778 = vmatpush1.xpose.msra.mxu0 0.0
    %1779 = vmatprep.subr.mxu0 0.0
    %1780 = vmatpush1.xpose.msra.mxu0 0.0
    %1781 = vmatprep.subr.mxu0 0.0
    %1782 = vmatpush1.xpose.msra.mxu0 0.0
    %1783 = vmatprep.subr.mxu0 0.0
    %1784 = vmatpush1.xpose.msra.mxu0 0.0
    %1785 = vmatprep.subr.mxu0 0.0
    %1786 = vmatpush1.xpose.msra.mxu0 0.0
    %1787 = vmatprep.subr.mxu0 0.0
    %1788 = vmatpush1.xpose.msra.mxu0 0.0
    %1789 = vmatprep.subr.mxu0 0.0
    %1790 = vmatpush1.xpose.msra.mxu0 0.0
    %1791 = vmatprep.subr.mxu0 0.0
    %1792 = vmatpush1.xpose.msra.mxu0 0.0
    %1793 = vmatprep.subr.mxu0 0.0
    %1794 = vmatpush1.xpose.msra.mxu0 0.0
    %1795 = vmatprep.subr.mxu0 0.0
    %1796 = vmatpush1.xpose.msra.mxu0 0.0
    %1797 = vmatprep.subr.mxu0 0.0
    %1798 = vmatpush1.xpose.msra.mxu0 0.0
    %1799 = vmatprep.subr.mxu0 0.0
    %1800 = vmatpush1.xpose.msra.mxu0 0.0
    %1801 = vmatprep.subr.mxu0 0.0
    %1802 = vmatpush1.xpose.msra.mxu0 0.0
    %1803 = vmatprep.subr.mxu0 0.0
    %1804 = vmatpush1.xpose.msra.mxu0 0.0
    %1805 = vmatprep.subr.mxu0 0.0
    %1806 = vmatpush1.xpose.msra.mxu0 0.0
    %1807 = vmatprep.subr.mxu0 0.0
    %1808 = vmatpush1.xpose.msra.mxu0 0.0
    %1809 = vmatprep.subr.mxu0 0.0
    %1810 = vmatpush1.xpose.msra.mxu0 0.0
    %1811 = vmatprep.subr.mxu0 0.0
    %1812 = vmatpush1.xpose.msra.mxu0 0.0
    %1813 = vmatprep.subr.mxu0 0.0
    %1814 = vmatpush1.xpose.msra.mxu0 0.0
    %1815 = vmatprep.subr.mxu0 0.0
    %1816 = vmatpush1.xpose.msra.mxu0 0.0
    %1817 = vmatprep.subr.mxu0 0.0
    %1818 = vmatpush1.xpose.msra.mxu0 0.0
    %1819 = vmatprep.subr.mxu0 0.0
    %1820 = vmatpush1.xpose.msra.mxu0 0.0
    %1821 = vmatprep.subr.mxu0 0.0
    %1822 = vmatpush1.xpose.msra.mxu0 0.0
    %1823 = vmatprep.subr.mxu0 0.0
    %1824 = vmatpush1.xpose.msra.mxu0 0.0
    %1825 = vmatprep.subr.mxu0 0.0
    %1826 = vmatpush1.xpose.msra.mxu0 0.0
    %1827 = vmatprep.subr.mxu0 0.0
    %1828 = vmatpush1.xpose.msra.mxu0 0.0
    %1829 = vmatprep.subr.mxu0 0.0
    %1830 = vmatpush1.xpose.msra.mxu0 0.0
    %1831 = vmatprep.mubr.f32.mxu0 0.0
    %1832 = vmatmul.mubr.f32.gmra.mrb[0].mxu0 %v1763
    %v1833 = vpop.f32.mrb[0].mxu0
    %v1834 = vadd.f32 0.0, %v1833
    %v1835 = vpop.f32.mrb[0].mxu0
    %1836 = vdwg.mxu0
    %v1837 = vmul.f32 %v1834, 0.25
    %v1838 = vadd.f32 %v1837, %v424
    %v1839 = vsel %vm427, %v1838, -inf
    %1840 = vmax.xlane.f32.xlu0 %v1839
    %v1841 = vpop.xlane.xlu0 %1840
    %v1842 = vsub.f32 %v1838, %v1841
    %v1843 = vmul.f32 %v1842, 1.442695
    %v1844 = vpow.pop %v1843
    %v1845 = vsel %vm427, %v1844, 0.0
    %1846 = vadd.xlane.f32.xlu0 %v1845
    %v1847 = vpop.xlane.xlu0 %1846
    %v1848 = vrcp.pop %v1847
    %v1849 = vmul.f32 %v1844, %v1848
    %1850 = vrot.lane.b32.xlu0 %v1420, 48
    %v1851 = vpop.permute.xlu0 %1850
    %v1854 = vsel %vm427, %v1849, 0
    %1856 = vmatprep.subr.mxu0 0.0
    %1857 = vmatpush1.msra.mxu0 %v1851
    %1858 = vmatprep.subr.mxu0 0.0
    %1859 = vmatpush1.msra.mxu0 0.0
    %1860 = vmatprep.subr.mxu0 0.0
    %1861 = vmatpush1.msra.mxu0 0.0
    %1862 = vmatprep.subr.mxu0 0.0
    %1863 = vmatpush1.msra.mxu0 0.0
    %1864 = vmatprep.subr.mxu0 0.0
    %1865 = vmatpush1.msra.mxu0 0.0
    %1866 = vmatprep.subr.mxu0 0.0
    %1867 = vmatpush1.msra.mxu0 0.0
    %1868 = vmatprep.subr.mxu0 0.0
    %1869 = vmatpush1.msra.mxu0 0.0
    %1870 = vmatprep.subr.mxu0 0.0
    %1871 = vmatpush1.msra.mxu0 0.0
    %1872 = vmatprep.subr.mxu0 0.0
    %1873 = vmatpush1.msra.mxu0 0.0
    %1874 = vmatprep.subr.mxu0 0.0
    %1875 = vmatpush1.msra.mxu0 0.0
    %1876 = vmatprep.subr.mxu0 0.0
    %1877 = vmatpush1.msra.mxu0 0.0
    %1878 = vmatprep.subr.mxu0 0.0
    %1879 = vmatpush1.msra.mxu0 0.0
    %1880 = vmatprep.subr.mxu0 0.0
    %1881 = vmatpush1.msra.mxu0 0.0
    %1882 = vmatprep.subr.mxu0 0.0
    %1883 = vmatpush1.msra.mxu0 0.0
    %1884 = vmatprep.subr.mxu0 0.0
    %1885 = vmatpush1.msra.mxu0 0.0
    %1886 = vmatprep.subr.mxu0 0.0
    %1887 = vmatpush1.msra.mxu0 0.0
    %1888 = vmatprep.subr.mxu0 0.0
    %1889 = vmatpush1.msra.mxu0 0.0
    %1890 = vmatprep.subr.mxu0 0.0
    %1891 = vmatpush1.msra.mxu0 0.0
    %1892 = vmatprep.subr.mxu0 0.0
    %1893 = vmatpush1.msra.mxu0 0.0
    %1894 = vmatprep.subr.mxu0 0.0
    %1895 = vmatpush1.msra.mxu0 0.0
    %1896 = vmatprep.subr.mxu0 0.0
    %1897 = vmatpush1.msra.mxu0 0.0
    %1898 = vmatprep.subr.mxu0 0.0
    %1899 = vmatpush1.msra.mxu0 0.0
    %1900 = vmatprep.subr.mxu0 0.0
    %1901 = vmatpush1.msra.mxu0 0.0
    %1902 = vmatprep.subr.mxu0 0.0
    %1903 = vmatpush1.msra.mxu0 0.0
    %1904 = vmatprep.subr.mxu0 0.0
    %1905 = vmatpush1.msra.mxu0 0.0
    %1906 = vmatprep.subr.mxu0 0.0
    %1907 = vmatpush1.msra.mxu0 0.0
    %1908 = vmatprep.subr.mxu0 0.0
    %1909 = vmatpush1.msra.mxu0 0.0
    %1910 = vmatprep.subr.mxu0 0.0
    %1911 = vmatpush1.msra.mxu0 0.0
    %1912 = vmatprep.subr.mxu0 0.0
    %1913 = vmatpush1.msra.mxu0 0.0
    %1914 = vmatprep.subr.mxu0 0.0
    %1915 = vmatpush1.msra.mxu0 0.0
    %1916 = vmatprep.subr.mxu0 0.0
    %1917 = vmatpush1.msra.mxu0 0.0
    %1918 = vmatprep.subr.mxu0 0.0
    %1919 = vmatpush1.msra.mxu0 0.0
    %1920 = vmatprep.mubr.f32.mxu0 0.0
    %1921 = vmatmul.mubr.f32.gmra.mrb[0].mxu0 %v1854
    %v1922 = vpop.f32.mrb[0].mxu0
    %v1923 = vadd.f32 0.0, %v1922
    %v1924 = vpop.f32.mrb[0].mxu0
    %1925 = vdwg.mxu0
    %1926 = vrot.lane.b32.xlu0 %v1423, 112
    %v1927 = vpop.permute.xlu0 %1926
    %1928 = vrot.lane.b32.xlu0 %v1423, 80
    %v1929 = vpop.permute.xlu0 %1928
    %v1930 = vsel %vm343, %v1927, 0
    %v1932 = vsel %vm343, %v1929, 0
    %1934 = vmatprep.subr.mxu0 0.0
    %1935 = vmatpush1.xpose.msra.mxu0 %v1932
    %1936 = vmatprep.subr.mxu0 0.0
    %1937 = vmatpush1.xpose.msra.mxu0 0.0
    %1938 = vmatprep.subr.mxu0 0.0
    %1939 = vmatpush1.xpose.msra.mxu0 0.0
    %1940 = vmatprep.subr.mxu0 0.0
    %1941 = vmatpush1.xpose.msra.mxu0 0.0
    %1942 = vmatprep.subr.mxu0 0.0
    %1943 = vmatpush1.xpose.msra.mxu0 0.0
    %1944 = vmatprep.subr.mxu0 0.0
    %1945 = vmatpush1.xpose.msra.mxu0 0.0
    %1946 = vmatprep.subr.mxu0 0.0
    %1947 = vmatpush1.xpose.msra.mxu0 0.0
    %1948 = vmatprep.subr.mxu0 0.0
    %1949 = vmatpush1.xpose.msra.mxu0 0.0
    %1950 = vmatprep.subr.mxu0 0.0
    %1951 = vmatpush1.xpose.msra.mxu0 0.0
    %1952 = vmatprep.subr.mxu0 0.0
    %1953 = vmatpush1.xpose.msra.mxu0 0.0
    %1954 = vmatprep.subr.mxu0 0.0
    %1955 = vmatpush1.xpose.msra.mxu0 0.0
    %1956 = vmatprep.subr.mxu0 0.0
    %1957 = vmatpush1.xpose.msra.mxu0 0.0
    %1958 = vmatprep.subr.mxu0 0.0
    %1959 = vmatpush1.xpose.msra.mxu0 0.0
    %1960 = vmatprep.subr.mxu0 0.0
    %1961 = vmatpush1.xpose.msra.mxu0 0.0
    %1962 = vmatprep.subr.mxu0 0.0
    %1963 = vmatpush1.xpose.msra.mxu0 0.0
    %1964 = vmatprep.subr.mxu0 0.0
    %1965 = vmatpush1.xpose.msra.mxu0 0.0
    %1966 = vmatprep.subr.mxu0 0.0
    %1967 = vmatpush1.xpose.msra.mxu0 0.0
    %1968 = vmatprep.subr.mxu0 0.0
    %1969 = vmatpush1.xpose.msra.mxu0 0.0
    %1970 = vmatprep.subr.mxu0 0.0
    %1971 = vmatpush1.xpose.msra.mxu0 0.0
    %1972 = vmatprep.subr.mxu0 0.0
    %1973 = vmatpush1.xpose.msra.mxu0 0.0
    %1974 = vmatprep.subr.mxu0 0.0
    %1975 = vmatpush1.xpose.msra.mxu0 0.0
    %1976 = vmatprep.subr.mxu0 0.0
    %1977 = vmatpush1.xpose.msra.mxu0 0.0
    %1978 = vmatprep.subr.mxu0 0.0
    %1979 = vmatpush1.xpose.msra.mxu0 0.0
    %1980 = vmatprep.subr.mxu0 0.0
    %1981 = vmatpush1.xpose.msra.mxu0 0.0
    %1982 = vmatprep.subr.mxu0 0.0
    %1983 = vmatpush1.xpose.msra.mxu0 0.0
    %1984 = vmatprep.subr.mxu0 0.0
    %1985 = vmatpush1.xpose.msra.mxu0 0.0
    %1986 = vmatprep.subr.mxu0 0.0
    %1987 = vmatpush1.xpose.msra.mxu0 0.0
    %1988 = vmatprep.subr.mxu0 0.0
    %1989 = vmatpush1.xpose.msra.mxu0 0.0
    %1990 = vmatprep.subr.mxu0 0.0
    %1991 = vmatpush1.xpose.msra.mxu0 0.0
    %1992 = vmatprep.subr.mxu0 0.0
    %1993 = vmatpush1.xpose.msra.mxu0 0.0
    %1994 = vmatprep.subr.mxu0 0.0
    %1995 = vmatpush1.xpose.msra.mxu0 0.0
    %1996 = vmatprep.subr.mxu0 0.0
    %1997 = vmatpush1.xpose.msra.mxu0 0.0
    %1998 = vmatprep.mubr.f32.mxu0 0.0
    %1999 = vmatmul.mubr.f32.gmra.mrb[0].mxu0 %v1930
    %v2000 = vpop.f32.mrb[0].mxu0
    %v2001 = vadd.f32 0.0, %v2000
    %v2002 = vpop.f32.mrb[0].mxu0
    %2003 = vdwg.mxu0
    %v2004 = vmul.f32 %v2001, 0.25
    %v2005 = vadd.f32 %v2004, %v599
    %v2006 = vsel %vm427, %v2005, -inf
    %2007 = vmax.xlane.f32.xlu0 %v2006
    %v2008 = vpop.xlane.xlu0 %2007
    %v2009 = vsub.f32 %v2005, %v2008
    %v2010 = vmul.f32 %v2009, 1.442695
    %v2011 = vpow.pop %v2010
    %v2012 = vsel %vm427, %v2011, 0.0
    %2013 = vadd.xlane.f32.xlu0 %v2012
    %v2014 = vpop.xlane.xlu0 %2013
    %v2015 = vrcp.pop %v2014
    %v2016 = vmul.f32 %v2011, %v2015
    %2017 = vrot.lane.b32.xlu0 %v1423, 48
    %v2018 = vpop.permute.xlu0 %2017
    %v2021 = vsel %vm427, %v2016, 0
    %2023 = vmatprep.subr.mxu0 0.0
    %2024 = vmatpush1.msra.mxu0 %v2018
    %2025 = vmatprep.subr.mxu0 0.0
    %2026 = vmatpush1.msra.mxu0 0.0
    %2027 = vmatprep.subr.mxu0 0.0
    %2028 = vmatpush1.msra.mxu0 0.0
    %2029 = vmatprep.subr.mxu0 0.0
    %2030 = vmatpush1.msra.mxu0 0.0
    %2031 = vmatprep.subr.mxu0 0.0
    %2032 = vmatpush1.msra.mxu0 0.0
    %2033 = vmatprep.subr.mxu0 0.0
    %2034 = vmatpush1.msra.mxu0 0.0
    %2035 = vmatprep.subr.mxu0 0.0
    %2036 = vmatpush1.msra.mxu0 0.0
    %2037 = vmatprep.subr.mxu0 0.0
    %2038 = vmatpush1.msra.mxu0 0.0
    %2039 = vmatprep.subr.mxu0 0.0
    %2040 = vmatpush1.msra.mxu0 0.0
    %2041 = vmatprep.subr.mxu0 0.0
    %2042 = vmatpush1.msra.mxu0 0.0
    %2043 = vmatprep.subr.mxu0 0.0
    %2044 = vmatpush1.msra.mxu0 0.0
    %2045 = vmatprep.subr.mxu0 0.0
    %2046 = vmatpush1.msra.mxu0 0.0
    %2047 = vmatprep.subr.mxu0 0.0
    %2048 = vmatpush1.msra.mxu0 0.0
    %2049 = vmatprep.subr.mxu0 0.0
    %2050 = vmatpush1.msra.mxu0 0.0
    %2051 = vmatprep.subr.mxu0 0.0
    %2052 = vmatpush1.msra.mxu0 0.0
    %2053 = vmatprep.subr.mxu0 0.0
    %2054 = vmatpush1.msra.mxu0 0.0
    %2055 = vmatprep.subr.mxu0 0.0
    %2056 = vmatpush1.msra.mxu0 0.0
    %2057 = vmatprep.subr.mxu0 0.0
    %2058 = vmatpush1.msra.mxu0 0.0
    %2059 = vmatprep.subr.mxu0 0.0
    %2060 = vmatpush1.msra.mxu0 0.0
    %2061 = vmatprep.subr.mxu0 0.0
    %2062 = vmatpush1.msra.mxu0 0.0
    %2063 = vmatprep.subr.mxu0 0.0
    %2064 = vmatpush1.msra.mxu0 0.0
    %2065 = vmatprep.subr.mxu0 0.0
    %2066 = vmatpush1.msra.mxu0 0.0
    %2067 = vmatprep.subr.mxu0 0.0
    %2068 = vmatpush1.msra.mxu0 0.0
    %2069 = vmatprep.subr.mxu0 0.0
    %2070 = vmatpush1.msra.mxu0 0.0
    %2071 = vmatprep.subr.mxu0 0.0
    %2072 = vmatpush1.msra.mxu0 0.0
    %2073 = vmatprep.subr.mxu0 0.0
    %2074 = vmatpush1.msra.mxu0 0.0
    %2075 = vmatprep.subr.mxu0 0.0
    %2076 = vmatpush1.msra.mxu0 0.0
    %2077 = vmatprep.subr.mxu0 0.0
    %2078 = vmatpush1.msra.mxu0 0.0
    %2079 = vmatprep.subr.mxu0 0.0
    %2080 = vmatpush1.msra.mxu0 0.0
    %2081 = vmatprep.subr.mxu0 0.0
    %2082 = vmatpush1.msra.mxu0 0.0
    %2083 = vmatprep.subr.mxu0 0.0
    %2084 = vmatpush1.msra.mxu0 0.0
    %2085 = vmatprep.subr.mxu0 0.0
    %2086 = vmatpush1.msra.mxu0 0.0
    %2087 = vmatprep.mubr.f32.mxu0 0.0
    %2088 = vmatmul.mubr.f32.gmra.mrb[0].mxu0 %v2021
    %v2089 = vpop.f32.mrb[0].mxu0
    %v2090 = vadd.f32 0.0, %v2089
    %v2091 = vpop.f32.mrb[0].mxu0
    %2092 = vdwg.mxu0
    %v2093 = vpack.c.bf16 %v2090, %v1923
    %v2096 = vunpack.c.l.b16 %v1361
    %v2097 = vunpack.c.l.b16 %v1363
    %v2098 = vpack.c.b16 %v2097, %v2096
    %v2101 = vsel %vm343, %v2093, 0
    %2103 = vmatprep.subr.bf16.mxu0 0
    %2104 = vmatpush1.bf16.msra.mxu0 %v2098
    %2105 = vmatprep.subr.bf16.mxu0 0
    %2106 = vmatpush1.bf16.msra.mxu0 0
    %2107 = vmatprep.subr.bf16.mxu0 0
    %2108 = vmatpush1.bf16.msra.mxu0 0
    %2109 = vmatprep.subr.bf16.mxu0 0
    %2110 = vmatpush1.bf16.msra.mxu0 0
    %2111 = vmatprep.subr.bf16.mxu0 0
    %2112 = vmatpush1.bf16.msra.mxu0 0
    %2113 = vmatprep.subr.bf16.mxu0 0
    %2114 = vmatpush1.bf16.msra.mxu0 0
    %2115 = vmatprep.subr.bf16.mxu0 0
    %2116 = vmatpush1.bf16.msra.mxu0 0
    %2117 = vmatprep.subr.bf16.mxu0 0
    %2118 = vmatpush1.bf16.msra.mxu0 0
    %2119 = vmatprep.subr.bf16.mxu0 0
    %2120 = vmatpush1.bf16.msra.mxu0 0
    %2121 = vmatprep.subr.bf16.mxu0 0
    %2122 = vmatpush1.bf16.msra.mxu0 0
    %2123 = vmatprep.subr.bf16.mxu0 0
    %2124 = vmatpush1.bf16.msra.mxu0 0
    %2125 = vmatprep.subr.bf16.mxu0 0
    %2126 = vmatpush1.bf16.msra.mxu0 0
    %2127 = vmatprep.subr.bf16.mxu0 0
    %2128 = vmatpush1.bf16.msra.mxu0 0
    %2129 = vmatprep.subr.bf16.mxu0 0
    %2130 = vmatpush1.bf16.msra.mxu0 0
    %2131 = vmatprep.subr.bf16.mxu0 0
    %2132 = vmatpush1.bf16.msra.mxu0 0
    %2133 = vmatprep.subr.bf16.mxu0 0
    %2134 = vmatpush1.bf16.msra.mxu0 0
    %2135 = vmatprep.mubr.bf16.mxu0 0
    %2136 = vmatmul.mubr.bf16.gmra.mrb[0].mxu0 %v2101
    %v2137 = vpop.f32.mrb[0].mxu0
    %v2138 = vadd.f32 0.0, %v2137
    %v2139 = vpop.f32.mrb[0].mxu0
    %v2140 = vpop.f32.mrb[0].mxu0
    %v2141 = vadd.f32 0.0, %v2140
    %v2142 = vpop.f32.mrb[0].mxu0
    %2143 = vdwg.mxu0
    %v2146 = vunpack.c.l.b16 %v1357
    %v2147 = vunpack.c.l.b16 %v1359
    %v2148 = vpack.c.b16 %v2147, %v2146
    %v2151 = vsel %vm343, %v1758, 0
    %2153 = vmatprep.subr.bf16.mxu0 0
    %2154 = vmatpush1.bf16.msra.mxu0 %v2148
    %2155 = vmatprep.subr.bf16.mxu0 0
    %2156 = vmatpush1.bf16.msra.mxu0 0
    %2157 = vmatprep.subr.bf16.mxu0 0
    %2158 = vmatpush1.bf16.msra.mxu0 0
    %2159 = vmatprep.subr.bf16.mxu0 0
    %2160 = vmatpush1.bf16.msra.mxu0 0
    %2161 = vmatprep.subr.bf16.mxu0 0
    %2162 = vmatpush1.bf16.msra.mxu0 0
    %2163 = vmatprep.subr.bf16.mxu0 0
    %2164 = vmatpush1.bf16.msra.mxu0 0
    %2165 = vmatprep.subr.bf16.mxu0 0
    %2166 = vmatpush1.bf16.msra.mxu0 0
    %2167 = vmatprep.subr.bf16.mxu0 0
    %2168 = vmatpush1.bf16.msra.mxu0 0
    %2169 = vmatprep.subr.bf16.mxu0 0
    %2170 = vmatpush1.bf16.msra.mxu0 0
    %2171 = vmatprep.subr.bf16.mxu0 0
    %2172 = vmatpush1.bf16.msra.mxu0 0
    %2173 = vmatprep.subr.bf16.mxu0 0
    %2174 = vmatpush1.bf16.msra.mxu0 0
    %2175 = vmatprep.subr.bf16.mxu0 0
    %2176 = vmatpush1.bf16.msra.mxu0 0
    %2177 = vmatprep.subr.bf16.mxu0 0
    %2178 = vmatpush1.bf16.msra.mxu0 0
    %2179 = vmatprep.subr.bf16.mxu0 0
    %2180 = vmatpush1.bf16.msra.mxu0 0
    %2181 = vmatprep.subr.bf16.mxu0 0
    %2182 = vmatpush1.bf16.msra.mxu0 0
    %2183 = vmatprep.subr.bf16.mxu0 0
    %2184 = vmatpush1.bf16.msra.mxu0 0
    %2185 = vmatprep.mubr.bf16.mxu0 0
    %2186 = vmatmul.mubr.bf16.gmra.mrb[0].mxu0 %v2151
    %v2187 = vpop.f32.mrb[0].mxu0
    %v2188 = vadd.f32 %v2138, %v2187
    %v2189 = vpop.f32.mrb[0].mxu0
    %v2190 = vpop.f32.mrb[0].mxu0
    %v2191 = vadd.f32 %v2141, %v2190
    %v2192 = vpop.f32.mrb[0].mxu0
    %2193 = vdwg.mxu0
    %v2194 = vld [vmem:[%s5 + $0xc] sm:$0x1]
    %v2195 = vlaneseq
    %v2196 = vshrl.u32 %v2195, 7
    %v2197 = vsub.s32 0, %v2196
    %v2198 = vrot.slane %v2194, %v2197
    %v2199 = vadd.f32 %v2188, %v2198
    %v2200 = vadd.f32 %v2191, %v2198
    %v2201 = vadd.f32 %v2199, %v1353
    %v2202 = vadd.f32 %v2200, %v1354
    %v2203 = vld [vmem:[%s5 + $0xd] sm:$0x1]
    %v2204 = vld [vmem:[%s5 + $0xe] sm:$0x1]
    %v2205 = vsel %vm226, %v2201, 0.0
    %2206 = vadd.xlane.f32.xlu0 %v2205
    %v2207 = vpop.xlane.xlu0 %2206
    %v2208 = vsel %vm226, %v2202, 0.0
    %2209 = vadd.xlane.f32.xlu0 %v2208
    %v2210 = vpop.xlane.xlu0 %2209
    %v2211 = vmul.f32 %v2207, %v233
    %v2212 = vmul.f32 %v2210, %v233
    %v2213 = vmul.f32 %v2201, %v2201
    %v2214 = vmul.f32 %v2202, %v2202
    %v2215 = vsel %vm226, %v2213, 0.0
    %2216 = vadd.xlane.f32.xlu0 %v2215
    %v2217 = vpop.xlane.xlu0 %2216
    %v2218 = vsel %vm226, %v2214, 0.0
    %2219 = vadd.xlane.f32.xlu0 %v2218
    %v2220 = vpop.xlane.xlu0 %2219
    %v2221 = vmul.f32 %v2217, %v233
    %v2222 = vmul.f32 %v2220, %v233
    %v2223 = vmul.f32 %v2211, %v2211
    %v2224 = vmul.f32 %v2212, %v2212
    %v2225 = vsub.f32 %v2221, %v2223
    %v2226 = vsub.f32 %v2222, %v2224
    %v2227 = vadd.f32 %v2225, 1e-05
    %v2228 = vadd.f32 %v2226, 1e-05
    %v2229 = vrsqrt.pop %v2227
    %v2230 = vrsqrt.pop %v2228
    %v2231 = vsub.f32 %v2201, %v2211
    %v2232 = vsub.f32 %v2202, %v2212
    %v2233 = vmul.f32 %v2231, %v2229
    %v2234 = vmul.f32 %v2232, %v2230
    %v2235 = vlaneseq
    %v2236 = vshrl.u32 %v2235, 7
    %v2237 = vsub.s32 0, %v2236
    %v2238 = vrot.slane %v2203, %v2237
    %v2239 = vmul.f32 %v2233, %v2238
    %v2240 = vmul.f32 %v2234, %v2238
    %v2241 = vlaneseq
    %v2242 = vshrl.u32 %v2241, 7
    %v2243 = vsub.s32 0, %v2242
    %v2244 = vrot.slane %v2204, %v2243
    %v2245 = vadd.f32 %v2239, %v2244
    %v2246 = vadd.f32 %v2240, %v2244
    %v2247 = vpack.c.bf16 %v2246, %v2245
    %v2248 = vld [vmem:[%s5 + $0xf] sm:$0x1]
    %v2249 = vlaneseq
    %v2250 = vshrl.u32 %v2249, 7
    %v2251 = vsub.s32 0, %v2250
    %v2252 = vrot.slane %v2248, %v2251
    %v2253 = vunpack.c.h.b16 %v1356
    %v2254 = vunpack.c.h.b16 %v1358
    %v2255 = vunpack.c.h.b16 %v1360
    %v2256 = vunpack.c.h.b16 %v1362
    %v2257 = vpack.c.b16 %v2254, %v2253
    %v2258 = vpack.c.b16 %v2256, %v2255
    %v2262 = vsel %vm226, %v2247, 0
    %2264 = vmatprep.subr.bf16.mxu0 0
    %2265 = vmatpush1.bf16.msra.mxu0 %v2257
    %2266 = vmatprep.subr.bf16.mxu0 0
    %2267 = vmatpush1.bf16.msra.mxu0 %v2258
    %2268 = vmatprep.subr.bf16.mxu0 0
    %2269 = vmatpush1.bf16.msra.mxu0 0
    %2270 = vmatprep.subr.bf16.mxu0 0
    %2271 = vmatpush1.bf16.msra.mxu0 0
    %2272 = vmatprep.subr.bf16.mxu0 0
    %2273 = vmatpush1.bf16.msra.mxu0 0
    %2274 = vmatprep.subr.bf16.mxu0 0
    %2275 = vmatpush1.bf16.msra.mxu0 0
    %2276 = vmatprep.subr.bf16.mxu0 0
    %2277 = vmatpush1.bf16.msra.mxu0 0
    %2278 = vmatprep.subr.bf16.mxu0 0
    %2279 = vmatpush1.bf16.msra.mxu0 0
    %2280 = vmatprep.subr.bf16.mxu0 0
    %2281 = vmatpush1.bf16.msra.mxu0 0
    %2282 = vmatprep.subr.bf16.mxu0 0
    %2283 = vmatpush1.bf16.msra.mxu0 0
    %2284 = vmatprep.subr.bf16.mxu0 0
    %2285 = vmatpush1.bf16.msra.mxu0 0
    %2286 = vmatprep.subr.bf16.mxu0 0
    %2287 = vmatpush1.bf16.msra.mxu0 0
    %2288 = vmatprep.subr.bf16.mxu0 0
    %2289 = vmatpush1.bf16.msra.mxu0 0
    %2290 = vmatprep.subr.bf16.mxu0 0
    %2291 = vmatpush1.bf16.msra.mxu0 0
    %2292 = vmatprep.subr.bf16.mxu0 0
    %2293 = vmatpush1.bf16.msra.mxu0 0
    %2294 = vmatprep.subr.bf16.mxu0 0
    %2295 = vmatpush1.bf16.msra.mxu0 0
    %2296 = vmatprep.mubr.bf16.mxu0 0
    %2297 = vmatmul.mubr.bf16.gmra.mrb[0].mxu0 %v2262
    %v2298 = vpop.f32.mrb[0].mxu0
    %v2299 = vadd.f32 %v2252, %v2298
    %v2300 = vpop.f32.mrb[0].mxu0
    %v2301 = vpop.f32.mrb[0].mxu0
    %v2302 = vadd.f32 %v2252, %v2301
    %v2303 = vpop.f32.mrb[0].mxu0
    %2304 = vdwg.mxu0
    %v2305 = vmul.f32 %v2299, 0.5
    %v2306 = vmul.f32 %v2302, 0.5
    %v2307 = vmul.f32 %v2299, 0.044715
    %v2308 = vmul.f32 %v2302, 0.044715
    %v2309 = vmul.f32 %v2307, %v2299
    %v2310 = vmul.f32 %v2308, %v2302
    %v2311 = vmul.f32 %v2309, %v2299
    %v2312 = vmul.f32 %v2310, %v2302
    %v2313 = vadd.f32 %v2299, %v2311
    %v2314 = vadd.f32 %v2302, %v2312
    %v2315 = vmul.f32 %v2313, 0.7978846
    %v2316 = vmul.f32 %v2314, 0.7978846
    %v2317 = vtanh.pop %v2315
    %v2318 = vtanh.pop %v2316
    %v2319 = vadd.f32 %v2317, 1.0
    %v2320 = vadd.f32 %v2318, 1.0
    %v2321 = vmul.f32 %v2305, %v2319
    %v2322 = vmul.f32 %v2306, %v2320
    %v2323 = vpack.c.bf16 %v2322, %v2321
    %v2324 = vld [vmem:[%s5 + $0x10] sm:$0x1]
    %v2325 = vlaneseq
    %v2326 = vshrl.u32 %v2325, 7
    %v2327 = vsub.s32 0, %v2326
    %v2328 = vrot.slane %v2324, %v2327
    %v2329 = vunpack.c.h.b16 %v1357
    %v2330 = vunpack.c.h.b16 %v1359
    %v2331 = vunpack.c.h.b16 %v1361
    %v2332 = vunpack.c.h.b16 %v1363
    %v2333 = vpack.c.b16 %v2330, %v2329
    %v2334 = vpack.c.b16 %v2332, %v2331
    %2337 = vmatprep.subr.bf16.mxu0 0
    %2338 = vmatpush1.bf16.xpose.msra.mxu0 %v2333
    %2339 = vmatprep.subr.bf16.mxu0 0
    %2340 = vmatpush1.bf16.xpose.msra.mxu0 %v2334
    %2341 = vmatprep.subr.bf16.mxu0 0
    %2342 = vmatpush1.bf16.xpose.msra.mxu0 0
    %2343 = vmatprep.subr.bf16.mxu0 0
    %2344 = vmatpush1.bf16.xpose.msra.mxu0 0
    %2345 = vmatprep.subr.bf16.mxu0 0
    %2346 = vmatpush1.bf16.xpose.msra.mxu0 0
    %2347 = vmatprep.subr.bf16.mxu0 0
    %2348 = vmatpush1.bf16.xpose.msra.mxu0 0
    %2349 = vmatprep.subr.bf16.mxu0 0
    %2350 = vmatpush1.bf16.xpose.msra.mxu0 0
    %2351 = vmatprep.subr.bf16.mxu0 0
    %2352 = vmatpush1.bf16.xpose.msra.mxu0 0
    %2353 = vmatprep.subr.bf16.mxu0 0
    %2354 = vmatpush1.bf16.xpose.msra.mxu0 0
    %2355 = vmatprep.subr.bf16.mxu0 0
    %2356 = vmatpush1.bf16.xpose.msra.mxu0 0
    %2357 = vmatprep.subr.bf16.mxu0 0
    %2358 = vmatpush1.bf16.xpose.msra.mxu0 0
    %2359 = vmatprep.subr.bf16.mxu0 0
    %2360 = vmatpush1.bf16.xpose.msra.mxu0 0
    %2361 = vmatprep.subr.bf16.mxu0 0
    %2362 = vmatpush1.bf16.xpose.msra.mxu0 0
    %2363 = vmatprep.subr.bf16.mxu0 0
    %2364 = vmatpush1.bf16.xpose.msra.mxu0 0
    %2365 = vmatprep.subr.bf16.mxu0 0
    %2366 = vmatpush1.bf16.xpose.msra.mxu0 0
    %2367 = vmatprep.subr.bf16.mxu0 0
    %2368 = vmatpush1.bf16.xpose.msra.mxu0 0
    %2369 = vmatprep.mubr.bf16.mxu0 0
    %2370 = vmatmul.mubr.bf16.gmra.mrb[0].mxu0 %v2323
    %v2371 = vpop.f32.mrb[0].mxu0
    %v2372 = vadd.f32 %v2328, %v2371
    %v2373 = vpop.f32.mrb[0].mxu0
    %v2374 = vpop.f32.mrb[0].mxu0
    %v2375 = vadd.f32 %v2328, %v2374
    %v2376 = vpop.f32.mrb[0].mxu0
    %2377 = vdwg.mxu0
    %v2378 = vadd.f32 %v2372, %v2245
    %v2379 = vadd.f32 %v2375, %v2246
    %v2380 = vld [vmem:[%s5 + $0x11] sm:$0x1]
    %v2381 = vld [vmem:[%s5 + $0x12] sm:$0x1]
    %v2382 = vsel %vm226, %v2378, 0.0
    %2383 = vadd.xlane.f32.xlu0 %v2382
    %v2384 = vpop.xlane.xlu0 %2383
    %v2385 = vsel %vm226, %v2379, 0.0
    %2386 = vadd.xlane.f32.xlu0 %v2385
    %v2387 = vpop.xlane.xlu0 %2386
    %v2388 = vmul.f32 %v2384, %v233
    %v2389 = vmul.f32 %v2387, %v233
    %v2390 = vmul.f32 %v2378, %v2378
    %v2391 = vmul.f32 %v2379, %v2379
    %v2392 = vsel %vm226, %v2390, 0.0
    %2393 = vadd.xlane.f32.xlu0 %v2392
    %v2394 = vpop.xlane.xlu0 %2393
    %v2395 = vsel %vm226, %v2391, 0.0
    %2396 = vadd.xlane.f32.xlu0 %v2395
    %v2397 = vpop.xlane.xlu0 %2396
    %v2398 = vmul.f32 %v2394, %v233
    %v2399 = vmul.f32 %v2397, %v233
    %v2400 = vmul.f32 %v2388, %v2388
    %v2401 = vmul.f32 %v2389, %v2389
    %v2402 = vsub.f32 %v2398, %v2400
    %v2403 = vsub.f32 %v2399, %v2401
    %v2404 = vadd.f32 %v2402, 1e-05
    %v2405 = vadd.f32 %v2403, 1e-05
    %v2406 = vrsqrt.pop %v2404
    %v2407 = vrsqrt.pop %v2405
    %v2408 = vsub.f32 %v2378, %v2388
    %v2409 = vsub.f32 %v2379, %v2389
    %v2410 = vmul.f32 %v2408, %v2406
    %v2411 = vmul.f32 %v2409, %v2407
    %v2412 = vlaneseq
    %v2413 = vshrl.u32 %v2412, 7
    %v2414 = vsub.s32 0, %v2413
    %v2415 = vrot.slane %v2380, %v2414
    %v2416 = vmul.f32 %v2410, %v2415
    %v2417 = vmul.f32 %v2411, %v2415
    %v2418 = vlaneseq
    %v2419 = vshrl.u32 %v2418, 7
    %v2420 = vsub.s32 0, %v2419
    %v2421 = vrot.slane %v2381, %v2420
    %v2422 = vadd.f32 %v2416, %v2421
    %v2423 = vadd.f32 %v2417, %v2421
    %v2425 = vrot.slane %v2423, 7
    %vm2427 = vcmask 1040384
    %v2428 = vsel %vm2427, %v2422, %v2425
    %v2429 = vpack.c.bf16 %v2428, %v2428
    %v2430 = vld [vmem:[#allocation2] sm:$0xf]
    %v2431 = vld [vmem:[#allocation2 + $0x8] sm:$0xf]
    %v2432 = vld [vmem:[#allocation2 + $0x10] sm:$0xf]
    %v2433 = vld [vmem:[#allocation2 + $0x18] sm:$0xf]
    %v2434 = vld [vmem:[%s5 + $0x13] sm:$0x1]
    %v2435 = vlaneseq
    %v2436 = vshrl.u32 %v2435, 7
    %v2437 = vsub.s32 0, %v2436
    %v2438 = vrot.slane %v2434, %v2437
    %v2443 = vunpack.c.l.b16 %v2430
    %v2444 = vunpack.c.l.b16 %v2431
    %v2445 = vunpack.c.l.b16 %v2432
    %v2446 = vunpack.c.l.b16 %v2433
    %v2447 = vpack.c.b16 %v2444, %v2443
    %v2448 = vpack.c.b16 %v2446, %v2445
    %v2452 = vsel %vm226, %v2429, 0
    %2454 = vmatprep.subr.bf16.mxu0 0
    %2455 = vmatpush1.bf16.msra.mxu0 %v2447
    %2456 = vmatprep.subr.bf16.mxu0 0
    %2457 = vmatpush1.bf16.msra.mxu0 %v2448
    %2458 = vmatprep.subr.bf16.mxu0 0
    %2459 = vmatpush1.bf16.msra.mxu0 0
    %2460 = vmatprep.subr.bf16.mxu0 0
    %2461 = vmatpush1.bf16.msra.mxu0 0
    %2462 = vmatprep.subr.bf16.mxu0 0
    %2463 = vmatpush1.bf16.msra.mxu0 0
    %2464 = vmatprep.subr.bf16.mxu0 0
    %2465 = vmatpush1.bf16.msra.mxu0 0
    %2466 = vmatprep.subr.bf16.mxu0 0
    %2467 = vmatpush1.bf16.msra.mxu0 0
    %2468 = vmatprep.subr.bf16.mxu0 0
    %2469 = vmatpush1.bf16.msra.mxu0 0
    %2470 = vmatprep.subr.bf16.mxu0 0
    %2471 = vmatpush1.bf16.msra.mxu0 0
    %2472 = vmatprep.subr.bf16.mxu0 0
    %2473 = vmatpush1.bf16.msra.mxu0 0
    %2474 = vmatprep.subr.bf16.mxu0 0
    %2475 = vmatpush1.bf16.msra.mxu0 0
    %2476 = vmatprep.subr.bf16.mxu0 0
    %2477 = vmatpush1.bf16.msra.mxu0 0
    %2478 = vmatprep.subr.bf16.mxu0 0
    %2479 = vmatpush1.bf16.msra.mxu0 0
    %2480 = vmatprep.subr.bf16.mxu0 0
    %2481 = vmatpush1.bf16.msra.mxu0 0
    %2482 = vmatprep.subr.bf16.mxu0 0
    %2483 = vmatpush1.bf16.msra.mxu0 0
    %2484 = vmatprep.subr.bf16.mxu0 0
    %2485 = vmatpush1.bf16.msra.mxu0 0
    %2486 = vmatprep.mubr.bf16.mxu0 0
    %2487 = vmatmul.mubr.bf16.gmra.mrb[0].mxu0 %v2452
    %v2488 = vpop.f32.mrb[0].mxu0
    %v2489 = vadd.f32 %v2438, %v2488
    %v2490 = vpop.f32.mrb[0].mxu0
    %v2491 = vpop.f32.mrb[0].mxu0
    %v2492 = vpop.f32.mrb[0].mxu0
    %2493 = vdwg.mxu0
    %v2494 = vtanh.pop %v2489
    %v2495 = vpack.c.bf16 %v2494, %v2494
    %v2496 = vld [vmem:[#allocation2 + $0x4] sm:$0xf]
    %v2497 = vld [vmem:[#allocation2 + $0xc] sm:$0xf]
    %v2498 = vld [vmem:[#allocation2 + $0x14] sm:$0xf]
    %v2499 = vld [vmem:[#allocation2 + $0x1c] sm:$0xf]
    %v2500 = vld [vmem:[#allocation2 + $0x24] sm:$0xf]
    %v2501 = vld [vmem:[#allocation2 + $0x2c] sm:$0xf]
    %v2502 = vld [vmem:[#allocation2 + $0x34] sm:$0xf]
    %v2503 = vld [vmem:[#allocation2 + $0x3c] sm:$0xf]
    %v2504 = vld [vmem:[#allocation2 + $0x44] sm:$0xf]
    %v2505 = vld [vmem:[#allocation2 + $0x4c] sm:$0xf]
    %v2506 = vld [vmem:[#allocation2 + $0x54] sm:$0xf]
    %v2507 = vld [vmem:[#allocation2 + $0x5c] sm:$0xf]
    %v2508 = vld [vmem:[#allocation2 + $0x64] sm:$0xf]
    %v2509 = vld [vmem:[#allocation2 + $0x6c] sm:$0xf]
    %v2510 = vld [vmem:[#allocation2 + $0x74] sm:$0xf]
    %v2511 = vld [vmem:[#allocation2 + $0x7c] sm:$0xf]
    %v2512 = vld [vmem:[%s5 + $0x14] sm:$0x1]
    %v2513 = vlaneseq
    %v2514 = vshrl.u32 %v2513, 7
    %v2515 = vsub.s32 0, %v2514
    %v2516 = vrot.slane %v2512, %v2515
    %v2533 = vunpack.c.l.b16 %v2496
    %v2534 = vunpack.c.l.b16 %v2497
    %v2535 = vunpack.c.l.b16 %v2498
    %v2536 = vunpack.c.l.b16 %v2499
    %v2537 = vunpack.c.l.b16 %v2500
    %v2538 = vunpack.c.l.b16 %v2501
    %v2539 = vunpack.c.l.b16 %v2502
    %v2540 = vunpack.c.l.b16 %v2503
    %v2541 = vunpack.c.l.b16 %v2504
    %v2542 = vunpack.c.l.b16 %v2505
    %v2543 = vunpack.c.l.b16 %v2506
    %v2544 = vunpack.c.l.b16 %v2507
    %v2545 = vunpack.c.l.b16 %v2508
    %v2546 = vunpack.c.l.b16 %v2509
    %v2547 = vunpack.c.l.b16 %v2510
    %v2548 = vunpack.c.l.b16 %v2511
    %v2549 = vpack.c.b16 %v2534, %v2533
    %v2550 = vpack.c.b16 %v2536, %v2535
    %v2551 = vpack.c.b16 %v2538, %v2537
    %v2552 = vpack.c.b16 %v2540, %v2539
    %v2553 = vpack.c.b16 %v2542, %v2541
    %v2554 = vpack.c.b16 %v2544, %v2543
    %v2555 = vpack.c.b16 %v2546, %v2545
    %v2556 = vpack.c.b16 %v2548, %v2547
    %2565 = vmatprep.subr.bf16.mxu0 0
    %2566 = vmatpush1.bf16.msra.mxu0 %v2549
    %2567 = vmatprep.subr.bf16.mxu0 0
    %2568 = vmatpush1.bf16.msra.mxu0 %v2550
    %2569 = vmatprep.subr.bf16.mxu0 0
    %2570 = vmatpush1.bf16.msra.mxu0 %v2551
    %2571 = vmatprep.subr.bf16.mxu0 0
    %2572 = vmatpush1.bf16.msra.mxu0 %v2552
    %2573 = vmatprep.subr.bf16.mxu0 0
    %2574 = vmatpush1.bf16.msra.mxu0 %v2553
    %2575 = vmatprep.subr.bf16.mxu0 0
    %2576 = vmatpush1.bf16.msra.mxu0 %v2554
    %2577 = vmatprep.subr.bf16.mxu0 0
    %2578 = vmatpush1.bf16.msra.mxu0 %v2555
    %2579 = vmatprep.subr.bf16.mxu0 0
    %2580 = vmatpush1.bf16.msra.mxu0 %v2556
    %2581 = vmatprep.subr.bf16.mxu0 0
    %2582 = vmatpush1.bf16.msra.mxu0 0
    %2583 = vmatprep.subr.bf16.mxu0 0
    %2584 = vmatpush1.bf16.msra.mxu0 0
    %2585 = vmatprep.subr.bf16.mxu0 0
    %2586 = vmatpush1.bf16.msra.mxu0 0
    %2587 = vmatprep.subr.bf16.mxu0 0
    %2588 = vmatpush1.bf16.msra.mxu0 0
    %2589 = vmatprep.subr.bf16.mxu0 0
    %2590 = vmatpush1.bf16.msra.mxu0 0
    %2591 = vmatprep.subr.bf16.mxu0 0
    %2592 = vmatpush1.bf16.msra.mxu0 0
    %2593 = vmatprep.subr.bf16.mxu0 0
    %2594 = vmatpush1.bf16.msra.mxu0 0
    %2595 = vmatprep.subr.bf16.mxu0 0
    %2596 = vmatpush1.bf16.msra.mxu0 0
    %2597 = vmatprep.mubr.bf16.mxu0 0
    %2598 = vmatmul.mubr.bf16.gmra.mrb[0].mxu0 %v2495
    %v2599 = vpop.f32.mrb[0].mxu0
    %v2600 = vadd.f32 %v2516, %v2599
    %v2601 = vpop.f32.mrb[0].mxu0
    %v2602 = vpop.f32.mrb[0].mxu0
    %v2603 = vpop.f32.mrb[0].mxu0
    %2604 = vdwg.mxu0
    %2605 = vst [vmem:[#allocation5] sm:$0x3] %v2600
    // Predicated region
    $region30: #{phobert_sentiment_forward.1} parent=1 // pred_check
      _
    $region31: #{phobert_sentiment_forward.1} parent=1 // pred_check_branch
      %2607 = sbr.rel (0) target = $region33
    $region32: #{phobert_sentiment_forward.1} parent=1 // pred_region
      %s2609 = ssub.s32 32, 32
      %2610 = vsyncadd [#allocation4], %s2609
      %s2612 = sshll.u32 [#allocation5], 4
      %s2613 = int_to_ptr.vmem [resolvable:$true] %s2612
      %2615 = dma.vmem_to_hbm [thread:$0]  %s2613, 32, %s6, [#allocation4]
    $region33: #{phobert_sentiment_forward.1} parent=1 // pred_fallthru
      _
    // Predicated region
    $region34: #{phobert_sentiment_forward.1} parent=1 // pred_check
      _
    $region35: #{phobert_sentiment_forward.1} parent=1 // pred_check_branch
      %2617 = sbr.rel (0) target = $region37
    $region36: #{phobert_sentiment_forward.1} parent=1 // pred_region
      %2618 = dma.done [#allocation4], 32
    $region37: #{phobert_sentiment_forward.1} parent=1 // pred_fallthru
      _
    %2619 = vsyncpa [#allocation3], 1
    %2620 = vsyncpa [#allocation4], 1

</llo_original>
